<compile_context>
chip_gen: v7x
topology: tpu7x:2x2x1
jax: 0.10.0
libtpu: 0.0.40
codegen_flags: <defaults>
</compile_context>

<pallas_src>
import functools

import jax
import jax.numpy as jnp
from jax.experimental import pallas as pl
from jax.experimental.pallas import tpu as pltpu


# ----------------------------------------------------------------------------
# Fused kernel: one grid step = Nb batch elements, layout (R, HW) with
# R = Nb * C rows (row = image * C + channel) and HW lane-dense.
# ----------------------------------------------------------------------------
def _make_fused_kernel(k, offs, R, HW):

    def kernel(x_ref, a_h_ref, a_w_ref, a_sq_ref, b_sq_ref, prm_ref,
               sw_ref, sh_ref, bw_ref, bh_ref, out_ref):
        X = x_ref[0]                                           # (R, HW) f32

        def mm(a, b):
            return jnp.dot(a, b, preferred_element_type=jnp.float32)

        def tap_mat(ref, t):                                   # (HW, HW) tap matrix
            return ref[pl.ds(t * HW, HW), :]

        prm = prm_ref[...]                                     # (R, 11)
        col = lambda j: prm[:, j:j + 1]                        # (R, 1)

        def dyn_weights(a_ref, pooled, bias=None):
            # Block-diag (taps*R, R) @ pooled (R, 1): one matvec produces the
            # tanh filter weights for every image in the block at once.  The
            # 128-column broadcast is only MXU shape legalization.
            rhs = jnp.broadcast_to(pooled, (R, 128))
            raw = mm(a_ref[...], rhs)[:, 0:1]                  # (taps*R, 1)
            if bias is not None:
                raw = raw + bias
            return jnp.tanh(raw)

        def mix(acc, identity, gap, inside, lamb_l, lamb_h):
            low = (acc * (inside + 1.0) - inside * gap) * lamb_l
            return low + identity * (lamb_h + 1.0)

        pooled_x = jnp.mean(X, axis=1, keepdims=True)          # (R, 1)

        # W-direction reflect-shifted copies of x (reused by square attention).
        Xw = [X if offs[t] == 0 else mm(X, tap_mat(sw_ref, t)) for t in range(k)]

        # ---------------- H strip (taps along W) ----------------------------
        w_h = dyn_weights(a_h_ref, pooled_x)                   # (k*R, 1)
        acc = Xw[0] * w_h[0:R, :]
        for t in range(1, k):
            acc = acc + Xw[t] * w_h[t * R:(t + 1) * R, :]
        gap_w = mm(X, bw_ref[...])                             # per-row mean over W
        out_h = mix(acc, X, gap_w, col(0), col(1), col(2))

        # ---------------- W strip (taps along H), input = out_h -------------
        pooled_h = jnp.mean(out_h, axis=1, keepdims=True)
        w_w = dyn_weights(a_w_ref, pooled_h)                   # (k*R, 1)
        acc = None
        for t in range(k):
            z = out_h * w_w[t * R:(t + 1) * R, :]
            term = z if offs[t] == 0 else mm(z, tap_mat(sh_ref, t))
            acc = term if acc is None else acc + term
        gap_h = mm(out_h, bh_ref[...])                         # per-column mean over H
        out_w = mix(acc, out_h, gap_h, col(3), col(4), col(5))

        # ---------------- square attention (k x k taps) on x ----------------
        # Per-row scaling commutes with the right matmul, so accumulate the
        # reused W-shifted copies (weighted per tap) first and apply each
        # H-shift only once -> k second-stage matmuls instead of k*k.
        w_sq = dyn_weights(a_sq_ref, pooled_x, bias=b_sq_ref[...])   # (k*k*R, 1)
        acc = None
        for a in range(k):
            z = None
            for b in range(k):
                t = a * k + b
                zb = Xw[b] * w_sq[t * R:(t + 1) * R, :]
                z = zb if z is None else z + zb
            za = z if offs[a] == 0 else mm(z, tap_mat(sh_ref, a))
            acc = za if acc is None else acc + za
        out_sq = mix(acc, X, pooled_x, col(6), col(7), col(8))

        # ---------------- combine: gamma*Wstrip + beta*x + square -----------
        out_ref[0] = (col(9) * out_w + col(10) * X + out_sq).astype(out_ref.dtype)

    return kernel


# ----------------------------------------------------------------------------
# Host-side constant matrices: reflect-shift permutations and row/col means.
# ----------------------------------------------------------------------------
def _reflect_index(m, size):
    m = jnp.abs(m)
    return jnp.where(m > size - 1, 2 * (size - 1) - m, m)


def _make_shift_and_mean_mats(H, W, k, d):
    HW = H * W
    pad = d * (k - 1) // 2
    offs = [t * d - pad for t in range(k)]
    idx = jnp.arange(HW)
    hh, ww = idx // W, idx % W

    def w_shift(o):   # (X @ S)[c, j] = X[c, h(j)*W + reflect(w(j)+o)]
        src = hh * W + _reflect_index(ww + o, W)
        return (idx[:, None] == src[None, :]).astype(jnp.float32)

    def h_shift(o):   # (X @ S)[c, j] = X[c, reflect(h(j)+o)*W + w(j)]
        src = _reflect_index(hh + o, H) * W + ww
        return (idx[:, None] == src[None, :]).astype(jnp.float32)

    S_w = jnp.concatenate([w_shift(o) for o in offs], axis=0)        # (k*HW, HW)
    S_h = jnp.concatenate([h_shift(o) for o in offs], axis=0)        # (k*HW, HW)
    B_w = (hh[:, None] == hh[None, :]).astype(jnp.float32) / W       # mean over W
    B_h = (ww[:, None] == ww[None, :]).astype(jnp.float32) / H       # mean over H
    return S_w, S_h, B_w, B_h, offs


# ----------------------------------------------------------------------------
# Parameter glue: grouped 1x1-conv filter generators -> per-(tap, channel)
# rows, block-diagonalized over the Nb images processed per grid step.
# ----------------------------------------------------------------------------
def _expand_filter(conv_w, scale, C, group, taps):
    cpg = C // group
    g_of_ch = jnp.arange(C) // cpg
    o_idx = g_of_ch[None, :] * taps + jnp.arange(taps)[:, None]      # (taps, C)
    w_eff = conv_w if scale is None else conv_w * scale[:, None]
    return w_eff[o_idx].astype(jnp.float32)                          # (taps, C, C)


def _blockdiag_over_batch(a_tcc, nb):
    taps, C, Cin = a_tcc.shape
    eye = jnp.eye(nb, dtype=a_tcc.dtype)
    big = jnp.einsum("tcj,nm->tncmj", a_tcc, eye)                    # (t, n, c, m, j)
    return big.reshape(taps * nb * C, nb * Cin)


def _expand_bias(shift, C, group, taps, nb):
    cpg = C // group
    g_of_ch = jnp.arange(C) // cpg
    o_idx = g_of_ch[None, :] * taps + jnp.arange(taps)[:, None]      # (taps, C)
    b = shift[o_idx]                                                  # (taps, C)
    b = jnp.broadcast_to(b[:, None, :], (taps, nb, C))
    return b.reshape(taps * nb * C, 1).astype(jnp.float32)


def _pick_batch_block(N, C, HW):
    best = 1
    for nb in range(1, N + 1):
        if N % nb:
            continue
        rows = nb * C
        # keep sublane extent and live f32 temporaries moderate (vreg/VMEM)
        if rows <= 128 and 16 * rows * HW * 4 <= 16 * 1024 * 1024:
            best = nb
    return best


# ----------------------------------------------------------------------------
# MultiShapeKernel forward
# ----------------------------------------------------------------------------
def multi_shape_kernel_forward(x_nchw, p, *, kernel_size=3, dilation=1, group=8,
                               batch_block=None):
    N, C, H, W = x_nchw.shape
    k, d = kernel_size, dilation
    kk = k * k
    HW = H * W
    pad = d * (k - 1) // 2
    assert C % group == 0
    assert pad < min(H, W)                      # single reflection (ReflectionPad2d)

    nb = _pick_batch_block(N, C, HW) if batch_block is None else batch_block
    assert N % nb == 0
    R = nb * C
    G = N // nb

    const_bytes = (2 * k + 2) * HW * HW * 4
    if const_bytes > 24 * 1024 * 1024:
        # TODO(synk): (HW,HW) matmul-tap formulation does not scale to large
        # H*W; use a pltpu.roll-based tap path with H-tiling for that regime.
        raise NotImplementedError("H*W too large for the matmul-tap formulation")

    x = x_nchw.reshape(G, R, HW).astype(jnp.float32)   # free NCHW grouping reshape

    eps = 1e-5
    bn_scale = p["sq_bn_gamma"] / jnp.sqrt(p["sq_bn_var"] + eps)
    bn_shift = p["sq_bn_beta"] - p["sq_bn_mean"] * bn_scale

    a_h = _blockdiag_over_batch(_expand_filter(p["h_conv_w"], None, C, group, k), nb)
    a_w = _blockdiag_over_batch(_expand_filter(p["w_conv_w"], None, C, group, k), nb)
    a_sq = _blockdiag_over_batch(
        _expand_filter(p["sq_conv_w"], bn_scale, C, group, kk), nb)
    b_sq = _expand_bias(bn_shift, C, group, kk, nb)

    prm_c = jnp.stack(
        [p["h_inside"], p["h_lamb_l"], p["h_lamb_h"],
         p["w_inside"], p["w_lamb_l"], p["w_lamb_h"],
         p["sq_inside"], p["sq_lamb_l"], p["sq_lamb_h"],
         p["gamma"], p["beta"]], axis=1).astype(jnp.float32)          # (C, 11)
    prm = jnp.tile(prm_c, (nb, 1))                                    # (R, 11)

    S_w, S_h, B_w, B_h, offs = _make_shift_and_mean_mats(H, W, k, d)

    kern = _make_fused_kernel(k, tuple(offs), R, HW)
    out = pl.pallas_call(
        kern,
        out_shape=jax.ShapeDtypeStruct((G, R, HW), jnp.float32),
        grid=(G,),
        in_specs=[
            pl.BlockSpec((1, R, HW), lambda g: (g, 0, 0)),      # x tile
            pl.BlockSpec((k * R, R), lambda g: (0, 0)),          # H-strip filter gen
            pl.BlockSpec((k * R, R), lambda g: (0, 0)),          # W-strip filter gen
            pl.BlockSpec((kk * R, R), lambda g: (0, 0)),         # square filter gen
            pl.BlockSpec((kk * R, 1), lambda g: (0, 0)),         # square BN bias
            pl.BlockSpec((R, 11), lambda g: (0, 0)),             # per-channel params
            pl.BlockSpec((k * HW, HW), lambda g: (0, 0)),        # W-shift matrices
            pl.BlockSpec((k * HW, HW), lambda g: (0, 0)),        # H-shift matrices
            pl.BlockSpec((HW, HW), lambda g: (0, 0)),            # mean-over-W matrix
            pl.BlockSpec((HW, HW), lambda g: (0, 0)),            # mean-over-H matrix
        ],
        out_specs=pl.BlockSpec((1, R, HW), lambda g: (g, 0, 0)),
        compiler_params=pltpu.CompilerParams(
            dimension_semantics=("parallel",),
            # <= ~48 MiB so the same config fits v7x's 64 MiB VMEM too.
            vmem_limit_bytes=48 * 1024 * 1024),
    )(x, a_h, a_w, a_sq, b_sq, prm, S_w, S_h, B_w, B_h)

    return out.reshape(N, C, H, W)


# ----------------------------------------------------------------------------
# Deterministic parameter init (shapes from the module's __init__)
# ----------------------------------------------------------------------------
def init_params(key, dim, kernel_size=3, dilation=1, group=8):
    kk = kernel_size * kernel_size
    keys = jax.random.split(key, 18)

    def nrm(k_, shape, s):
        return s * jax.random.normal(k_, shape, jnp.float32)

    return {
        "sq_conv_w": nrm(keys[0], (group * kk, dim), 0.3),
        "sq_bn_gamma": 1.0 + nrm(keys[1], (group * kk,), 0.1),
        "sq_bn_beta": nrm(keys[2], (group * kk,), 0.1),
        "sq_bn_mean": nrm(keys[3], (group * kk,), 0.1),
        "sq_bn_var": 1.0 + jnp.abs(nrm(keys[4], (group * kk,), 0.1)),
        "sq_inside": nrm(keys[5], (dim,), 0.1),
        "sq_lamb_l": nrm(keys[6], (dim,), 0.1),
        "sq_lamb_h": nrm(keys[7], (dim,), 0.1),
        "h_conv_w": nrm(keys[8], (group * kernel_size, dim), 0.3),
        "h_inside": nrm(keys[9], (dim,), 0.1),
        "h_lamb_l": nrm(keys[10], (dim,), 0.1),
        "h_lamb_h": nrm(keys[11], (dim,), 0.1),
        "w_conv_w": nrm(keys[12], (group * kernel_size, dim), 0.3),
        "w_inside": nrm(keys[13], (dim,), 0.1),
        "w_lamb_l": nrm(keys[14], (dim,), 0.1),
        "w_lamb_h": nrm(keys[15], (dim,), 0.1),
        "gamma": nrm(keys[16], (dim,), 0.1),
        "beta": 1.0 + nrm(keys[17], (dim,), 0.1),
    }


# ----------------------------------------------------------------------------
# Pure-JAX reference (mirrors the PyTorch math) for the correctness check
# ----------------------------------------------------------------------------
def _ref_strip(x, conv_w, inside, lamb_l, lamb_h, k, d, group, horizontal):
    n, c, h, w = x.shape
    cpg = c // group
    pad = d * (k - 1) // 2
    pooled = jnp.mean(x, axis=(2, 3))
    f = jnp.tanh(pooled @ conv_w.T).reshape(n, group, k)
    wpc = jnp.repeat(f, cpg, axis=1)
    if horizontal:
        xp = jnp.pad(x, ((0, 0), (0, 0), (0, 0), (pad, pad)), mode="reflect")
        out = sum(xp[:, :, :, t * d:t * d + w] * wpc[:, :, t][:, :, None, None]
                  for t in range(k))
        gap = jnp.mean(x, axis=3, keepdims=True)
    else:
        xp = jnp.pad(x, ((0, 0), (0, 0), (pad, pad), (0, 0)), mode="reflect")
        out = sum(xp[:, :, t * d:t * d + h, :] * wpc[:, :, t][:, :, None, None]
                  for t in range(k))
        gap = jnp.mean(x, axis=2, keepdims=True)
    il = inside[None, :, None, None]
    out_low = (out * (il + 1.0) - il * gap) * lamb_l[None, :, None, None]
    out_high = x * (lamb_h[None, :, None, None] + 1.0)
    return out_low + out_high


def _ref_square(x, conv_w, bn_scale, bn_shift, inside, lamb_l, lamb_h, k, d, group):
    n, c, h, w = x.shape
    cpg = c // group
    kk = k * k
    pad = d * (k - 1) // 2
    pooled = jnp.mean(x, axis=(2, 3))
    f = jnp.tanh((pooled @ conv_w.T) * bn_scale[None, :] + bn_shift[None, :])
    f = f.reshape(n, group, kk)
    wpc = jnp.repeat(f, cpg, axis=1)
    xp = jnp.pad(x, ((0, 0), (0, 0), (pad, pad), (pad, pad)), mode="reflect")
    out = jnp.zeros_like(x)
    for a in range(k):
        for b in range(k):
            t = a * k + b
            out = out + xp[:, :, a * d:a * d + h, b * d:b * d + w] * \
                wpc[:, :, t][:, :, None, None]
    gap = jnp.mean(x, axis=(2, 3), keepdims=True)
    il = inside[None, :, None, None]
    out_low = (out * (il + 1.0) - il * gap) * lamb_l[None, :, None, None]
    out_high = x * (lamb_h[None, :, None, None] + 1.0)
    return out_low + out_high


def ref_forward(x, p, k, d, group):
    eps = 1e-5
    bn_scale = p["sq_bn_gamma"] / jnp.sqrt(p["sq_bn_var"] + eps)
    bn_shift = p["sq_bn_beta"] - p["sq_bn_mean"] * bn_scale
    oh = _ref_strip(x, p["h_conv_w"], p["h_inside"], p["h_lamb_l"], p["h_lamb_h"],
                    k, d, group, True)
    ow = _ref_strip(oh, p["w_conv_w"], p["w_inside"], p["w_lamb_l"], p["w_lamb_h"],
                    k, d, group, False)
    x1 = p["gamma"][None, :, None, None] * ow + p["beta"][None, :, None, None] * x
    x2 = _ref_square(x, p["sq_conv_w"], bn_scale, bn_shift, p["sq_inside"],
                     p["sq_lamb_l"], p["sq_lamb_h"], k, d, group)
    return x1 + x2


# ----------------------------------------------------------------------------
if __name__ == "__main__":
    import numpy as np

    dim, group, ksize, dil = 16, 8, 3, 1
    N, H, W = 2, 16, 16

    key = jax.random.PRNGKey(0)
    kx, kp = jax.random.split(key)
    x = jax.random.normal(kx, (N, dim, H, W), jnp.float32)
    params = init_params(kp, dim, ksize, dil, group)

    fwd = jax.jit(functools.partial(multi_shape_kernel_forward,
                                    kernel_size=ksize, dilation=dil, group=group))
    out = jax.block_until_ready(fwd(x, params))

    ref = ref_forward(x, params, ksize, dil, group)
    # Tolerance accommodates MXU rounding modes for f32 matmuls (the tap
    # matrices are exact 0/1 permutations, so any semantic error would show up
    # as O(1) differences, far above this threshold).
    np.testing.assert_allclose(np.asarray(out), np.asarray(ref), rtol=2e-2, atol=2e-2)

    print("KERNEL_OK")
</pallas_src>

<mosaic_0001>
module attributes {stable_mosaic.version = 11 : i64} {
  func.func @kernel(%arg0: i32, %arg1: memref<1x32x256xf32, #tpu.memory_space<vmem>>, %arg2: memref<96x32xf32, #tpu.memory_space<vmem>>, %arg3: memref<96x32xf32, #tpu.memory_space<vmem>>, %arg4: memref<288x32xf32, #tpu.memory_space<vmem>>, %arg5: memref<288x1xf32, #tpu.memory_space<vmem>>, %arg6: memref<32x11xf32, #tpu.memory_space<vmem>>, %arg7: memref<768x256xf32, #tpu.memory_space<vmem>>, %arg8: memref<768x256xf32, #tpu.memory_space<vmem>>, %arg9: memref<256x256xf32, #tpu.memory_space<vmem>>, %arg10: memref<256x256xf32, #tpu.memory_space<vmem>>, %arg11: memref<1x32x256xf32, #tpu.memory_space<vmem>>) attributes {dimension_semantics = [#tpu.dimension_semantics<parallel>], iteration_bounds = array<i64: 1>, scalar_prefetch = 0 : i64, scratch_operands = 0 : i64, tpu.core_type = #tpu.core_type<tc>, window_params = [{transform_indices = @transform_0, window_bounds = array<i64: 1, 32, 256>}, {pipeline_mode = #tpu.pipeline_mode<synchronous>, transform_indices = @transform_1, window_bounds = array<i64: 96, 32>}, {pipeline_mode = #tpu.pipeline_mode<synchronous>, transform_indices = @transform_2, window_bounds = array<i64: 96, 32>}, {pipeline_mode = #tpu.pipeline_mode<synchronous>, transform_indices = @transform_3, window_bounds = array<i64: 288, 32>}, {pipeline_mode = #tpu.pipeline_mode<synchronous>, transform_indices = @transform_4, window_bounds = array<i64: 288, 1>}, {pipeline_mode = #tpu.pipeline_mode<synchronous>, transform_indices = @transform_5, window_bounds = array<i64: 32, 11>}, {pipeline_mode = #tpu.pipeline_mode<synchronous>, transform_indices = @transform_6, window_bounds = array<i64: 768, 256>}, {pipeline_mode = #tpu.pipeline_mode<synchronous>, transform_indices = @transform_7, window_bounds = array<i64: 768, 256>}, {pipeline_mode = #tpu.pipeline_mode<synchronous>, transform_indices = @transform_8, window_bounds = array<i64: 256, 256>}, {pipeline_mode = #tpu.pipeline_mode<synchronous>, transform_indices = @transform_9, window_bounds = array<i64: 256, 256>}, {transform_indices = @transform_10, window_bounds = array<i64: 1, 32, 256>}]} {
    %c0 = arith.constant 0 : index
    %c0_0 = arith.constant 0 : index
    %c0_1 = arith.constant 0 : index
    %0 = vector.load %arg1[%c0, %c0_0, %c0_1] : memref<1x32x256xf32, #tpu.memory_space<vmem>>, vector<1x32x256xf32>
    %1 = vector.shape_cast %0 : vector<1x32x256xf32> to vector<32x256xf32>
    %c0_2 = arith.constant 0 : index
    %c0_3 = arith.constant 0 : index
    %2 = vector.load %arg6[%c0_2, %c0_3] : memref<32x11xf32, #tpu.memory_space<vmem>>, vector<32x11xf32>
    %cst = arith.constant dense<0.000000e+00> : vector<32xf32>
    %3 = vector.multi_reduction <add>, %1, %cst [1] : vector<32x256xf32> to vector<32xf32>
    %4 = vector.shape_cast %3 : vector<32xf32> to vector<32x1xf32>
    %cst_4 = arith.constant 2.560000e+02 : f32
    %5 = vector.broadcast %cst_4 : f32 to vector<32x1xf32>
    %6 = arith.divf %4, %5 : vector<32x1xf32>
    %c0_5 = arith.constant 0 : index
    %c0_6 = arith.constant 0 : index
    %7 = vector.load %arg7[%c0_5, %c0_6] : memref<768x256xf32, #tpu.memory_space<vmem>>, vector<256x256xf32>
    %cst_7 = arith.constant dense<0.000000e+00> : vector<32x256xf32>
    %8 = tpu.matmul %1, %7, %cst_7 {dimension_numbers = #tpu.dot_dimension_numbers<[1], [0], [0], [1], [0, 0, 1, 1], [], []>} : vector<32x256xf32>, vector<256x256xf32>, vector<32x256xf32> -> vector<32x256xf32>
    %c512 = arith.constant 512 : index
    %c0_8 = arith.constant 0 : index
    %9 = vector.load %arg7[%c512, %c0_8] : memref<768x256xf32, #tpu.memory_space<vmem>>, vector<256x256xf32>
    %cst_9 = arith.constant dense<0.000000e+00> : vector<32x256xf32>
    %10 = tpu.matmul %1, %9, %cst_9 {dimension_numbers = #tpu.dot_dimension_numbers<[1], [0], [0], [1], [0, 0, 1, 1], [], []>} : vector<32x256xf32>, vector<256x256xf32>, vector<32x256xf32> -> vector<32x256xf32>
    %11 = vector.shape_cast %6 : vector<32x1xf32> to vector<32x1xf32>
    %12 = vector.broadcast %11 : vector<32x1xf32> to vector<32x128xf32>
    %c0_10 = arith.constant 0 : index
    %c0_11 = arith.constant 0 : index
    %13 = vector.load %arg2[%c0_10, %c0_11] : memref<96x32xf32, #tpu.memory_space<vmem>>, vector<96x32xf32>
    %cst_12 = arith.constant dense<0.000000e+00> : vector<96x128xf32>
    %14 = tpu.matmul %13, %12, %cst_12 {dimension_numbers = #tpu.dot_dimension_numbers<[1], [0], [0], [1], [0, 0, 1, 1], [], []>} : vector<96x32xf32>, vector<32x128xf32>, vector<96x128xf32> -> vector<96x128xf32>
    %15 = vector.extract_strided_slice %14 {offsets = [0, 0], sizes = [96, 1], strides = [1, 1]} : vector<96x128xf32> to vector<96x1xf32>
    %16 = math.tanh %15 : vector<96x1xf32>
    %17 = vector.extract_strided_slice %16 {offsets = [0, 0], sizes = [32, 1], strides = [1, 1]} : vector<96x1xf32> to vector<32x1xf32>
    %18 = vector.broadcast %17 : vector<32x1xf32> to vector<32x256xf32>
    %19 = arith.mulf %8, %18 : vector<32x256xf32>
    %20 = vector.extract_strided_slice %16 {offsets = [32, 0], sizes = [32, 1], strides = [1, 1]} : vector<96x1xf32> to vector<32x1xf32>
    %21 = vector.broadcast %20 : vector<32x1xf32> to vector<32x256xf32>
    %22 = arith.mulf %1, %21 : vector<32x256xf32>
    %23 = arith.addf %19, %22 : vector<32x256xf32>
    %24 = vector.extract_strided_slice %16 {offsets = [64, 0], sizes = [32, 1], strides = [1, 1]} : vector<96x1xf32> to vector<32x1xf32>
    %25 = vector.broadcast %24 : vector<32x1xf32> to vector<32x256xf32>
    %26 = arith.mulf %10, %25 : vector<32x256xf32>
    %27 = arith.addf %23, %26 : vector<32x256xf32>
    %c0_13 = arith.constant 0 : index
    %c0_14 = arith.constant 0 : index
    %28 = vector.load %arg9[%c0_13, %c0_14] : memref<256x256xf32, #tpu.memory_space<vmem>>, vector<256x256xf32>
    %cst_15 = arith.constant dense<0.000000e+00> : vector<32x256xf32>
    %29 = tpu.matmul %1, %28, %cst_15 {dimension_numbers = #tpu.dot_dimension_numbers<[1], [0], [0], [1], [0, 0, 1, 1], [], []>} : vector<32x256xf32>, vector<256x256xf32>, vector<32x256xf32> -> vector<32x256xf32>
    %30 = vector.extract_strided_slice %2 {offsets = [0, 0], sizes = [32, 1], strides = [1, 1]} : vector<32x11xf32> to vector<32x1xf32>
    %31 = vector.extract_strided_slice %2 {offsets = [0, 1], sizes = [32, 1], strides = [1, 1]} : vector<32x11xf32> to vector<32x1xf32>
    %32 = vector.extract_strided_slice %2 {offsets = [0, 2], sizes = [32, 1], strides = [1, 1]} : vector<32x11xf32> to vector<32x1xf32>
    %cst_16 = arith.constant 1.000000e+00 : f32
    %33 = vector.broadcast %cst_16 : f32 to vector<32x1xf32>
    %34 = arith.addf %30, %33 : vector<32x1xf32>
    %35 = vector.broadcast %34 : vector<32x1xf32> to vector<32x256xf32>
    %36 = arith.mulf %27, %35 : vector<32x256xf32>
    %37 = vector.broadcast %30 : vector<32x1xf32> to vector<32x256xf32>
    %38 = arith.mulf %37, %29 : vector<32x256xf32>
    %39 = arith.subf %36, %38 : vector<32x256xf32>
    %40 = vector.broadcast %31 : vector<32x1xf32> to vector<32x256xf32>
    %41 = arith.mulf %39, %40 : vector<32x256xf32>
    %cst_17 = arith.constant 1.000000e+00 : f32
    %42 = vector.broadcast %cst_17 : f32 to vector<32x1xf32>
    %43 = arith.addf %32, %42 : vector<32x1xf32>
    %44 = vector.broadcast %43 : vector<32x1xf32> to vector<32x256xf32>
    %45 = arith.mulf %1, %44 : vector<32x256xf32>
    %46 = arith.addf %41, %45 : vector<32x256xf32>
    %cst_18 = arith.constant dense<0.000000e+00> : vector<32xf32>
    %47 = vector.multi_reduction <add>, %46, %cst_18 [1] : vector<32x256xf32> to vector<32xf32>
    %48 = vector.shape_cast %47 : vector<32xf32> to vector<32x1xf32>
    %cst_19 = arith.constant 2.560000e+02 : f32
    %49 = vector.broadcast %cst_19 : f32 to vector<32x1xf32>
    %50 = arith.divf %48, %49 : vector<32x1xf32>
    %51 = vector.shape_cast %50 : vector<32x1xf32> to vector<32x1xf32>
    %52 = vector.broadcast %51 : vector<32x1xf32> to vector<32x128xf32>
    %c0_20 = arith.constant 0 : index
    %c0_21 = arith.constant 0 : index
    %53 = vector.load %arg3[%c0_20, %c0_21] : memref<96x32xf32, #tpu.memory_space<vmem>>, vector<96x32xf32>
    %cst_22 = arith.constant dense<0.000000e+00> : vector<96x128xf32>
    %54 = tpu.matmul %53, %52, %cst_22 {dimension_numbers = #tpu.dot_dimension_numbers<[1], [0], [0], [1], [0, 0, 1, 1], [], []>} : vector<96x32xf32>, vector<32x128xf32>, vector<96x128xf32> -> vector<96x128xf32>
    %55 = vector.extract_strided_slice %54 {offsets = [0, 0], sizes = [96, 1], strides = [1, 1]} : vector<96x128xf32> to vector<96x1xf32>
    %56 = math.tanh %55 : vector<96x1xf32>
    %57 = vector.extract_strided_slice %56 {offsets = [0, 0], sizes = [32, 1], strides = [1, 1]} : vector<96x1xf32> to vector<32x1xf32>
    %58 = vector.broadcast %57 : vector<32x1xf32> to vector<32x256xf32>
    %59 = arith.mulf %46, %58 : vector<32x256xf32>
    %c0_23 = arith.constant 0 : index
    %c0_24 = arith.constant 0 : index
    %60 = vector.load %arg8[%c0_23, %c0_24] : memref<768x256xf32, #tpu.memory_space<vmem>>, vector<256x256xf32>
    %cst_25 = arith.constant dense<0.000000e+00> : vector<32x256xf32>
    %61 = tpu.matmul %59, %60, %cst_25 {dimension_numbers = #tpu.dot_dimension_numbers<[1], [0], [0], [1], [0, 0, 1, 1], [], []>} : vector<32x256xf32>, vector<256x256xf32>, vector<32x256xf32> -> vector<32x256xf32>
    %62 = vector.extract_strided_slice %56 {offsets = [32, 0], sizes = [32, 1], strides = [1, 1]} : vector<96x1xf32> to vector<32x1xf32>
    %63 = vector.broadcast %62 : vector<32x1xf32> to vector<32x256xf32>
    %64 = arith.mulf %46, %63 : vector<32x256xf32>
    %65 = arith.addf %61, %64 : vector<32x256xf32>
    %66 = vector.extract_strided_slice %56 {offsets = [64, 0], sizes = [32, 1], strides = [1, 1]} : vector<96x1xf32> to vector<32x1xf32>
    %67 = vector.broadcast %66 : vector<32x1xf32> to vector<32x256xf32>
    %68 = arith.mulf %46, %67 : vector<32x256xf32>
    %c512_26 = arith.constant 512 : index
    %c0_27 = arith.constant 0 : index
    %69 = vector.load %arg8[%c512_26, %c0_27] : memref<768x256xf32, #tpu.memory_space<vmem>>, vector<256x256xf32>
    %cst_28 = arith.constant dense<0.000000e+00> : vector<32x256xf32>
    %70 = tpu.matmul %68, %69, %cst_28 {dimension_numbers = #tpu.dot_dimension_numbers<[1], [0], [0], [1], [0, 0, 1, 1], [], []>} : vector<32x256xf32>, vector<256x256xf32>, vector<32x256xf32> -> vector<32x256xf32>
    %71 = arith.addf %65, %70 : vector<32x256xf32>
    %c0_29 = arith.constant 0 : index
    %c0_30 = arith.constant 0 : index
    %72 = vector.load %arg10[%c0_29, %c0_30] : memref<256x256xf32, #tpu.memory_space<vmem>>, vector<256x256xf32>
    %cst_31 = arith.constant dense<0.000000e+00> : vector<32x256xf32>
    %73 = tpu.matmul %46, %72, %cst_31 {dimension_numbers = #tpu.dot_dimension_numbers<[1], [0], [0], [1], [0, 0, 1, 1], [], []>} : vector<32x256xf32>, vector<256x256xf32>, vector<32x256xf32> -> vector<32x256xf32>
    %74 = vector.extract_strided_slice %2 {offsets = [0, 3], sizes = [32, 1], strides = [1, 1]} : vector<32x11xf32> to vector<32x1xf32>
    %75 = vector.extract_strided_slice %2 {offsets = [0, 4], sizes = [32, 1], strides = [1, 1]} : vector<32x11xf32> to vector<32x1xf32>
    %76 = vector.extract_strided_slice %2 {offsets = [0, 5], sizes = [32, 1], strides = [1, 1]} : vector<32x11xf32> to vector<32x1xf32>
    %cst_32 = arith.constant 1.000000e+00 : f32
    %77 = vector.broadcast %cst_32 : f32 to vector<32x1xf32>
    %78 = arith.addf %74, %77 : vector<32x1xf32>
    %79 = vector.broadcast %78 : vector<32x1xf32> to vector<32x256xf32>
    %80 = arith.mulf %71, %79 : vector<32x256xf32>
    %81 = vector.broadcast %74 : vector<32x1xf32> to vector<32x256xf32>
    %82 = arith.mulf %81, %73 : vector<32x256xf32>
    %83 = arith.subf %80, %82 : vector<32x256xf32>
    %84 = vector.broadcast %75 : vector<32x1xf32> to vector<32x256xf32>
    %85 = arith.mulf %83, %84 : vector<32x256xf32>
    %cst_33 = arith.constant 1.000000e+00 : f32
    %86 = vector.broadcast %cst_33 : f32 to vector<32x1xf32>
    %87 = arith.addf %76, %86 : vector<32x1xf32>
    %88 = vector.broadcast %87 : vector<32x1xf32> to vector<32x256xf32>
    %89 = arith.mulf %46, %88 : vector<32x256xf32>
    %90 = arith.addf %85, %89 : vector<32x256xf32>
    %c0_34 = arith.constant 0 : index
    %c0_35 = arith.constant 0 : index
    %91 = vector.load %arg5[%c0_34, %c0_35] : memref<288x1xf32, #tpu.memory_space<vmem>>, vector<288x1xf32>
    %92 = vector.shape_cast %6 : vector<32x1xf32> to vector<32x1xf32>
    %93 = vector.broadcast %92 : vector<32x1xf32> to vector<32x128xf32>
    %c0_36 = arith.constant 0 : index
    %c0_37 = arith.constant 0 : index
    %94 = vector.load %arg4[%c0_36, %c0_37] : memref<288x32xf32, #tpu.memory_space<vmem>>, vector<288x32xf32>
    %cst_38 = arith.constant dense<0.000000e+00> : vector<288x128xf32>
    %95 = tpu.matmul %94, %93, %cst_38 {dimension_numbers = #tpu.dot_dimension_numbers<[1], [0], [0], [1], [0, 0, 1, 1], [], []>} : vector<288x32xf32>, vector<32x128xf32>, vector<288x128xf32> -> vector<288x128xf32>
    %96 = vector.extract_strided_slice %95 {offsets = [0, 0], sizes = [288, 1], strides = [1, 1]} : vector<288x128xf32> to vector<288x1xf32>
    %97 = arith.addf %96, %91 : vector<288x1xf32>
    %98 = math.tanh %97 : vector<288x1xf32>
    %99 = vector.extract_strided_slice %98 {offsets = [0, 0], sizes = [32, 1], strides = [1, 1]} : vector<288x1xf32> to vector<32x1xf32>
    %100 = vector.broadcast %99 : vector<32x1xf32> to vector<32x256xf32>
    %101 = arith.mulf %8, %100 : vector<32x256xf32>
    %102 = vector.extract_strided_slice %98 {offsets = [32, 0], sizes = [32, 1], strides = [1, 1]} : vector<288x1xf32> to vector<32x1xf32>
    %103 = vector.broadcast %102 : vector<32x1xf32> to vector<32x256xf32>
    %104 = arith.mulf %1, %103 : vector<32x256xf32>
    %105 = arith.addf %101, %104 : vector<32x256xf32>
    %106 = vector.extract_strided_slice %98 {offsets = [64, 0], sizes = [32, 1], strides = [1, 1]} : vector<288x1xf32> to vector<32x1xf32>
    %107 = vector.broadcast %106 : vector<32x1xf32> to vector<32x256xf32>
    %108 = arith.mulf %10, %107 : vector<32x256xf32>
    %109 = arith.addf %105, %108 : vector<32x256xf32>
    %c0_39 = arith.constant 0 : index
    %c0_40 = arith.constant 0 : index
    %110 = vector.load %arg8[%c0_39, %c0_40] : memref<768x256xf32, #tpu.memory_space<vmem>>, vector<256x256xf32>
    %cst_41 = arith.constant dense<0.000000e+00> : vector<32x256xf32>
    %111 = tpu.matmul %109, %110, %cst_41 {dimension_numbers = #tpu.dot_dimension_numbers<[1], [0], [0], [1], [0, 0, 1, 1], [], []>} : vector<32x256xf32>, vector<256x256xf32>, vector<32x256xf32> -> vector<32x256xf32>
    %112 = vector.extract_strided_slice %98 {offsets = [96, 0], sizes = [32, 1], strides = [1, 1]} : vector<288x1xf32> to vector<32x1xf32>
    %113 = vector.broadcast %112 : vector<32x1xf32> to vector<32x256xf32>
    %114 = arith.mulf %8, %113 : vector<32x256xf32>
    %115 = vector.extract_strided_slice %98 {offsets = [128, 0], sizes = [32, 1], strides = [1, 1]} : vector<288x1xf32> to vector<32x1xf32>
    %116 = vector.broadcast %115 : vector<32x1xf32> to vector<32x256xf32>
    %117 = arith.mulf %1, %116 : vector<32x256xf32>
    %118 = arith.addf %114, %117 : vector<32x256xf32>
    %119 = vector.extract_strided_slice %98 {offsets = [160, 0], sizes = [32, 1], strides = [1, 1]} : vector<288x1xf32> to vector<32x1xf32>
    %120 = vector.broadcast %119 : vector<32x1xf32> to vector<32x256xf32>
    %121 = arith.mulf %10, %120 : vector<32x256xf32>
    %122 = arith.addf %118, %121 : vector<32x256xf32>
    %123 = arith.addf %111, %122 : vector<32x256xf32>
    %124 = vector.extract_strided_slice %98 {offsets = [192, 0], sizes = [32, 1], strides = [1, 1]} : vector<288x1xf32> to vector<32x1xf32>
    %125 = vector.broadcast %124 : vector<32x1xf32> to vector<32x256xf32>
    %126 = arith.mulf %8, %125 : vector<32x256xf32>
    %127 = vector.extract_strided_slice %98 {offsets = [224, 0], sizes = [32, 1], strides = [1, 1]} : vector<288x1xf32> to vector<32x1xf32>
    %128 = vector.broadcast %127 : vector<32x1xf32> to vector<32x256xf32>
    %129 = arith.mulf %1, %128 : vector<32x256xf32>
    %130 = arith.addf %126, %129 : vector<32x256xf32>
    %131 = vector.extract_strided_slice %98 {offsets = [256, 0], sizes = [32, 1], strides = [1, 1]} : vector<288x1xf32> to vector<32x1xf32>
    %132 = vector.broadcast %131 : vector<32x1xf32> to vector<32x256xf32>
    %133 = arith.mulf %10, %132 : vector<32x256xf32>
    %134 = arith.addf %130, %133 : vector<32x256xf32>
    %c512_42 = arith.constant 512 : index
    %c0_43 = arith.constant 0 : index
    %135 = vector.load %arg8[%c512_42, %c0_43] : memref<768x256xf32, #tpu.memory_space<vmem>>, vector<256x256xf32>
    %cst_44 = arith.constant dense<0.000000e+00> : vector<32x256xf32>
    %136 = tpu.matmul %134, %135, %cst_44 {dimension_numbers = #tpu.dot_dimension_numbers<[1], [0], [0], [1], [0, 0, 1, 1], [], []>} : vector<32x256xf32>, vector<256x256xf32>, vector<32x256xf32> -> vector<32x256xf32>
    %137 = arith.addf %123, %136 : vector<32x256xf32>
    %138 = vector.extract_strided_slice %2 {offsets = [0, 6], sizes = [32, 1], strides = [1, 1]} : vector<32x11xf32> to vector<32x1xf32>
    %139 = vector.extract_strided_slice %2 {offsets = [0, 7], sizes = [32, 1], strides = [1, 1]} : vector<32x11xf32> to vector<32x1xf32>
    %140 = vector.extract_strided_slice %2 {offsets = [0, 8], sizes = [32, 1], strides = [1, 1]} : vector<32x11xf32> to vector<32x1xf32>
    %cst_45 = arith.constant 1.000000e+00 : f32
    %141 = vector.broadcast %cst_45 : f32 to vector<32x1xf32>
    %142 = arith.addf %138, %141 : vector<32x1xf32>
    %143 = vector.broadcast %142 : vector<32x1xf32> to vector<32x256xf32>
    %144 = arith.mulf %137, %143 : vector<32x256xf32>
    %145 = arith.mulf %138, %6 : vector<32x1xf32>
    %146 = vector.broadcast %145 : vector<32x1xf32> to vector<32x256xf32>
    %147 = arith.subf %144, %146 : vector<32x256xf32>
    %148 = vector.broadcast %139 : vector<32x1xf32> to vector<32x256xf32>
    %149 = arith.mulf %147, %148 : vector<32x256xf32>
    %cst_46 = arith.constant 1.000000e+00 : f32
    %150 = vector.broadcast %cst_46 : f32 to vector<32x1xf32>
    %151 = arith.addf %140, %150 : vector<32x1xf32>
    %152 = vector.broadcast %151 : vector<32x1xf32> to vector<32x256xf32>
    %153 = arith.mulf %1, %152 : vector<32x256xf32>
    %154 = arith.addf %149, %153 : vector<32x256xf32>
    %155 = vector.extract_strided_slice %2 {offsets = [0, 9], sizes = [32, 1], strides = [1, 1]} : vector<32x11xf32> to vector<32x1xf32>
    %156 = vector.broadcast %155 : vector<32x1xf32> to vector<32x256xf32>
    %157 = arith.mulf %156, %90 : vector<32x256xf32>
    %158 = vector.extract_strided_slice %2 {offsets = [0, 10], sizes = [32, 1], strides = [1, 1]} : vector<32x11xf32> to vector<32x1xf32>
    %159 = vector.broadcast %158 : vector<32x1xf32> to vector<32x256xf32>
    %160 = arith.mulf %159, %1 : vector<32x256xf32>
    %161 = arith.addf %157, %160 : vector<32x256xf32>
    %162 = arith.addf %161, %154 : vector<32x256xf32>
    %c0_47 = arith.constant 0 : index
    %c0_48 = arith.constant 0 : index
    %c0_49 = arith.constant 0 : index
    %163 = vector.load %arg11[%c0_47, %c0_48, %c0_49] : memref<1x32x256xf32, #tpu.memory_space<vmem>>, vector<1x32x256xf32>
    %164 = vector.shape_cast %163 : vector<1x32x256xf32> to vector<32x256xf32>
    %165 = vector.shape_cast %162 : vector<32x256xf32> to vector<1x32x256xf32>
    tpu.vector_store %arg11[%c0_47, %c0_48, %c0_49], %165 {strides = array<i32>} : memref<1x32x256xf32, #tpu.memory_space<vmem>>, vector<1x32x256xf32>,
    return
  }
  func.func @transform_0(%arg0: i32) -> (i32, i32, i32) {
    %c0_i32 = arith.constant 0 : i32
    %c0_i32_0 = arith.constant 0 : i32
    %c0_i32_1 = arith.constant 0 : i32
    return %arg0, %c0_i32, %c0_i32_0 : i32, i32, i32
  }
  func.func @transform_1(%arg0: i32) -> (i32, i32) {
    %c0_i32 = arith.constant 0 : i32
    %c0_i32_0 = arith.constant 0 : i32
    %c0_i32_1 = arith.constant 0 : i32
    return %c0_i32, %c0_i32_0 : i32, i32
  }
  func.func @transform_2(%arg0: i32) -> (i32, i32) {
    %c0_i32 = arith.constant 0 : i32
    %c0_i32_0 = arith.constant 0 : i32
    %c0_i32_1 = arith.constant 0 : i32
    return %c0_i32, %c0_i32_0 : i32, i32
  }
  func.func @transform_3(%arg0: i32) -> (i32, i32) {
    %c0_i32 = arith.constant 0 : i32
    %c0_i32_0 = arith.constant 0 : i32
    %c0_i32_1 = arith.constant 0 : i32
    return %c0_i32, %c0_i32_0 : i32, i32
  }
  func.func @transform_4(%arg0: i32) -> (i32, i32) {
    %c0_i32 = arith.constant 0 : i32
    %c0_i32_0 = arith.constant 0 : i32
    %c0_i32_1 = arith.constant 0 : i32
    return %c0_i32, %c0_i32_0 : i32, i32
  }
  func.func @transform_5(%arg0: i32) -> (i32, i32) {
    %c0_i32 = arith.constant 0 : i32
    %c0_i32_0 = arith.constant 0 : i32
    %c0_i32_1 = arith.constant 0 : i32
    return %c0_i32, %c0_i32_0 : i32, i32
  }
  func.func @transform_6(%arg0: i32) -> (i32, i32) {
    %c0_i32 = arith.constant 0 : i32
    %c0_i32_0 = arith.constant 0 : i32
    %c0_i32_1 = arith.constant 0 : i32
    return %c0_i32, %c0_i32_0 : i32, i32
  }
  func.func @transform_7(%arg0: i32) -> (i32, i32) {
    %c0_i32 = arith.constant 0 : i32
    %c0_i32_0 = arith.constant 0 : i32
    %c0_i32_1 = arith.constant 0 : i32
    return %c0_i32, %c0_i32_0 : i32, i32
  }
  func.func @transform_8(%arg0: i32) -> (i32, i32) {
    %c0_i32 = arith.constant 0 : i32
    %c0_i32_0 = arith.constant 0 : i32
    %c0_i32_1 = arith.constant 0 : i32
    return %c0_i32, %c0_i32_0 : i32, i32
  }
  func.func @transform_9(%arg0: i32) -> (i32, i32) {
    %c0_i32 = arith.constant 0 : i32
    %c0_i32_0 = arith.constant 0 : i32
    %c0_i32_1 = arith.constant 0 : i32
    return %c0_i32, %c0_i32_0 : i32, i32
  }
  func.func @transform_10(%arg0: i32) -> (i32, i32, i32) {
    %c0_i32 = arith.constant 0 : i32
    %c0_i32_0 = arith.constant 0 : i32
    %c0_i32_1 = arith.constant 0 : i32
    return %arg0, %c0_i32, %c0_i32_0 : i32, i32, i32
  }
}

</mosaic_0001>

<llo_original>
// kernel: multi_shape_kernel_forward.1
$region0: #{multi_shape_kernel_forward.1}
  #allocation0 [shape = 'u32[]', space=smem, size = 0x4, offset = 0x4, fixed_abs, tag = 'smem constant byte address 0x4 - core index']
  #allocation1 [shape = 'u32[144,128]{1,0:T(1,128)}', space=vmem, size = 0x12000, scoped, tag = 'internal scratch']
  %s0 = inlined_call_operand.vmem [shape: f32[1,32,256], index: 0, kind: input, shape index: {}]
  %s1 = inlined_call_operand.vmem [shape: f32[96,32], index: 1, kind: input, shape index: {}]
  %s2 = inlined_call_operand.vmem [shape: f32[96,32], index: 2, kind: input, shape index: {}]
  %s3 = inlined_call_operand.vmem [shape: f32[288,32], index: 3, kind: input, shape index: {}]
  %s4 = inlined_call_operand.vmem [shape: f32[288,1], index: 4, kind: input, shape index: {}]
  %s5 = inlined_call_operand.vmem [shape: f32[32,11], index: 5, kind: input, shape index: {}]
  %s6 = inlined_call_operand.vmem [shape: f32[768,256], index: 6, kind: input, shape index: {}]
  %s7 = inlined_call_operand.vmem [shape: f32[768,256], index: 7, kind: input, shape index: {}]
  %s8 = inlined_call_operand.vmem [shape: f32[256,256], index: 8, kind: input, shape index: {}]
  %s9 = inlined_call_operand.vmem [shape: f32[256,256], index: 9, kind: input, shape index: {}]
  %s10 = inlined_call_operand.vmem [shape: f32[1,32,256], index: 10, kind: output, shape index: {}]
  %s11 = sld [smem:[#allocation0]]
  $region50: #{multi_shape_kernel_forward.1} parent=0
    _
  %s13 = ssub.s32 1, %s11
  %s14 = scalar_select 0, %s13, %s11
  // Predicated region
  $region2: #{multi_shape_kernel_forward.1} parent=0 // pred_check
    _
  $region3: #{multi_shape_kernel_forward.1} parent=0 // pred_check_branch
    %16 = sbr.rel (0) target = $region5
  $region4: #{multi_shape_kernel_forward.1} parent=0 // pred_region
    _
  $region5: #{multi_shape_kernel_forward.1} parent=0 // pred_fallthru
    _
  // Predicated region
  $region6: #{multi_shape_kernel_forward.1} parent=0 // pred_check
    _
  $region7: #{multi_shape_kernel_forward.1} parent=0 // pred_check_branch
    %18 = sbr.rel (0) target = $region9
  $region8: #{multi_shape_kernel_forward.1} parent=0 // pred_region
    _
  $region9: #{multi_shape_kernel_forward.1} parent=0 // pred_fallthru
    _
  // Predicated region
  $region10: #{multi_shape_kernel_forward.1} parent=0 // pred_check
    _
  $region11: #{multi_shape_kernel_forward.1} parent=0 // pred_check_branch
    %20 = sbr.rel (0) target = $region13
  $region12: #{multi_shape_kernel_forward.1} parent=0 // pred_region
    _
  $region13: #{multi_shape_kernel_forward.1} parent=0 // pred_fallthru
    _
  // Predicated region
  $region14: #{multi_shape_kernel_forward.1} parent=0 // pred_check
    _
  $region15: #{multi_shape_kernel_forward.1} parent=0 // pred_check_branch
    %22 = sbr.rel (0) target = $region17
  $region16: #{multi_shape_kernel_forward.1} parent=0 // pred_region
    _
  $region17: #{multi_shape_kernel_forward.1} parent=0 // pred_fallthru
    _
  // Predicated region
  $region18: #{multi_shape_kernel_forward.1} parent=0 // pred_check
    _
  $region19: #{multi_shape_kernel_forward.1} parent=0 // pred_check_branch
    %24 = sbr.rel (0) target = $region21
  $region20: #{multi_shape_kernel_forward.1} parent=0 // pred_region
    _
  $region21: #{multi_shape_kernel_forward.1} parent=0 // pred_fallthru
    _
  // Predicated region
  $region22: #{multi_shape_kernel_forward.1} parent=0 // pred_check
    _
  $region23: #{multi_shape_kernel_forward.1} parent=0 // pred_check_branch
    %26 = sbr.rel (0) target = $region25
  $region24: #{multi_shape_kernel_forward.1} parent=0 // pred_region
    _
  $region25: #{multi_shape_kernel_forward.1} parent=0 // pred_fallthru
    _
  // Predicated region
  $region26: #{multi_shape_kernel_forward.1} parent=0 // pred_check
    _
  $region27: #{multi_shape_kernel_forward.1} parent=0 // pred_check_branch
    %28 = sbr.rel (0) target = $region29
  $region28: #{multi_shape_kernel_forward.1} parent=0 // pred_region
    _
  $region29: #{multi_shape_kernel_forward.1} parent=0 // pred_fallthru
    _
  // Predicated region
  $region30: #{multi_shape_kernel_forward.1} parent=0 // pred_check
    _
  $region31: #{multi_shape_kernel_forward.1} parent=0 // pred_check_branch
    %30 = sbr.rel (0) target = $region33
  $region32: #{multi_shape_kernel_forward.1} parent=0 // pred_region
    _
  $region33: #{multi_shape_kernel_forward.1} parent=0 // pred_fallthru
    _
  // Predicated region
  $region34: #{multi_shape_kernel_forward.1} parent=0 // pred_check
    _
  $region35: #{multi_shape_kernel_forward.1} parent=0 // pred_check_branch
    %32 = sbr.rel (0) target = $region37
  $region36: #{multi_shape_kernel_forward.1} parent=0 // pred_region
    _
  $region37: #{multi_shape_kernel_forward.1} parent=0 // pred_fallthru
    _
  // Predicated region
  $region38: #{multi_shape_kernel_forward.1} parent=0 // pred_check
    _
  $region39: #{multi_shape_kernel_forward.1} parent=0 // pred_check_branch
    %34 = sbr.rel (0) target = $region41
  $region40: #{multi_shape_kernel_forward.1} parent=0 // pred_region
    _
  $region41: #{multi_shape_kernel_forward.1} parent=0 // pred_fallthru
    _
  %v35 = vld [vmem:[%s0] sm:$0xff]
  %v36 = vld [vmem:[%s0 + $0x8] sm:$0xff]
  %v37 = vld [vmem:[%s0 + $0x10] sm:$0xff]
  %v38 = vld [vmem:[%s0 + $0x18] sm:$0xff]
  %v39 = vld [vmem:[%s0 + $0x20] sm:$0xff]
  %v40 = vld [vmem:[%s0 + $0x28] sm:$0xff]
  %v41 = vld [vmem:[%s0 + $0x30] sm:$0xff]
  %v42 = vld [vmem:[%s0 + $0x38] sm:$0xff]
  %v43 = vld [vmem:[%s5] sm:$0xff]
  %v44 = vld [vmem:[%s5 + $0x8] sm:$0xff]
  %v45 = vld [vmem:[%s5 + $0x10] sm:$0xff]
  %v46 = vld [vmem:[%s5 + $0x18] sm:$0xff]
  %v47 = vadd.f32 %v35, %v36
  %48 = vadd.xlane.f32.xlu0 %v47
  %v49 = vpop.xlane.xlu0 %48
  %v50 = vadd.f32 %v37, %v38
  %51 = vadd.xlane.f32.xlu0 %v50
  %v52 = vpop.xlane.xlu0 %51
  %v53 = vadd.f32 %v39, %v40
  %54 = vadd.xlane.f32.xlu0 %v53
  %v55 = vpop.xlane.xlu0 %54
  %v56 = vadd.f32 %v41, %v42
  %57 = vadd.xlane.f32.xlu0 %v56
  %v58 = vpop.xlane.xlu0 %57
  %v59 = vrcp.pop 256.0
  %v60 = vmul.f32 %v49, %v59
  %v61 = vmul.f32 %v52, %v59
  %v62 = vmul.f32 %v55, %v59
  %v63 = vmul.f32 %v58, %v59
  %v64 = vld [vmem:[%s6] sm:$0xff]
  %v65 = vld [vmem:[%s6 + $0x8] sm:$0xff]
  %v66 = vld [vmem:[%s6 + $0x10] sm:$0xff]
  %v67 = vld [vmem:[%s6 + $0x18] sm:$0xff]
  %v68 = vld [vmem:[%s6 + $0x20] sm:$0xff]
  %v69 = vld [vmem:[%s6 + $0x28] sm:$0xff]
  %v70 = vld [vmem:[%s6 + $0x30] sm:$0xff]
  %v71 = vld [vmem:[%s6 + $0x38] sm:$0xff]
  %v72 = vld [vmem:[%s6 + $0x40] sm:$0xff]
  %v73 = vld [vmem:[%s6 + $0x48] sm:$0xff]
  %v74 = vld [vmem:[%s6 + $0x50] sm:$0xff]
  %v75 = vld [vmem:[%s6 + $0x58] sm:$0xff]
  %v76 = vld [vmem:[%s6 + $0x60] sm:$0xff]
  %v77 = vld [vmem:[%s6 + $0x68] sm:$0xff]
  %v78 = vld [vmem:[%s6 + $0x70] sm:$0xff]
  %v79 = vld [vmem:[%s6 + $0x78] sm:$0xff]
  %v80 = vld [vmem:[%s6 + $0x80] sm:$0xff]
  %v81 = vld [vmem:[%s6 + $0x88] sm:$0xff]
  %v82 = vld [vmem:[%s6 + $0x90] sm:$0xff]
  %v83 = vld [vmem:[%s6 + $0x98] sm:$0xff]
  %v84 = vld [vmem:[%s6 + $0xa0] sm:$0xff]
  %v85 = vld [vmem:[%s6 + $0xa8] sm:$0xff]
  %v86 = vld [vmem:[%s6 + $0xb0] sm:$0xff]
  %v87 = vld [vmem:[%s6 + $0xb8] sm:$0xff]
  %v88 = vld [vmem:[%s6 + $0xc0] sm:$0xff]
  %v89 = vld [vmem:[%s6 + $0xc8] sm:$0xff]
  %v90 = vld [vmem:[%s6 + $0xd0] sm:$0xff]
  %v91 = vld [vmem:[%s6 + $0xd8] sm:$0xff]
  %v92 = vld [vmem:[%s6 + $0xe0] sm:$0xff]
  %v93 = vld [vmem:[%s6 + $0xe8] sm:$0xff]
  %v94 = vld [vmem:[%s6 + $0xf0] sm:$0xff]
  %v95 = vld [vmem:[%s6 + $0xf8] sm:$0xff]
  %v96 = vld [vmem:[%s6 + $0x100] sm:$0xff]
  %v97 = vld [vmem:[%s6 + $0x108] sm:$0xff]
  %v98 = vld [vmem:[%s6 + $0x110] sm:$0xff]
  %v99 = vld [vmem:[%s6 + $0x118] sm:$0xff]
  %v100 = vld [vmem:[%s6 + $0x120] sm:$0xff]
  %v101 = vld [vmem:[%s6 + $0x128] sm:$0xff]
  %v102 = vld [vmem:[%s6 + $0x130] sm:$0xff]
  %v103 = vld [vmem:[%s6 + $0x138] sm:$0xff]
  %v104 = vld [vmem:[%s6 + $0x140] sm:$0xff]
  %v105 = vld [vmem:[%s6 + $0x148] sm:$0xff]
  %v106 = vld [vmem:[%s6 + $0x150] sm:$0xff]
  %v107 = vld [vmem:[%s6 + $0x158] sm:$0xff]
  %v108 = vld [vmem:[%s6 + $0x160] sm:$0xff]
  %v109 = vld [vmem:[%s6 + $0x168] sm:$0xff]
  %v110 = vld [vmem:[%s6 + $0x170] sm:$0xff]
  %v111 = vld [vmem:[%s6 + $0x178] sm:$0xff]
  %v112 = vld [vmem:[%s6 + $0x180] sm:$0xff]
  %v113 = vld [vmem:[%s6 + $0x188] sm:$0xff]
  %v114 = vld [vmem:[%s6 + $0x190] sm:$0xff]
  %v115 = vld [vmem:[%s6 + $0x198] sm:$0xff]
  %v116 = vld [vmem:[%s6 + $0x1a0] sm:$0xff]
  %v117 = vld [vmem:[%s6 + $0x1a8] sm:$0xff]
  %v118 = vld [vmem:[%s6 + $0x1b0] sm:$0xff]
  %v119 = vld [vmem:[%s6 + $0x1b8] sm:$0xff]
  %v120 = vld [vmem:[%s6 + $0x1c0] sm:$0xff]
  %v121 = vld [vmem:[%s6 + $0x1c8] sm:$0xff]
  %v122 = vld [vmem:[%s6 + $0x1d0] sm:$0xff]
  %v123 = vld [vmem:[%s6 + $0x1d8] sm:$0xff]
  %v124 = vld [vmem:[%s6 + $0x1e0] sm:$0xff]
  %v125 = vld [vmem:[%s6 + $0x1e8] sm:$0xff]
  %v126 = vld [vmem:[%s6 + $0x1f0] sm:$0xff]
  %v127 = vld [vmem:[%s6 + $0x1f8] sm:$0xff]
  %128 = vmatprep.subr.mxu0 %v65
  %129 = vmatpush1.msra.mxu0 %v64
  %130 = vmatprep.subr.mxu0 %v67
  %131 = vmatpush1.msra.mxu0 %v66
  %132 = vmatprep.subr.mxu0 %v69
  %133 = vmatpush1.msra.mxu0 %v68
  %134 = vmatprep.subr.mxu0 %v71
  %135 = vmatpush1.msra.mxu0 %v70
  %136 = vmatprep.subr.mxu0 %v73
  %137 = vmatpush1.msra.mxu0 %v72
  %138 = vmatprep.subr.mxu0 %v75
  %139 = vmatpush1.msra.mxu0 %v74
  %140 = vmatprep.subr.mxu0 %v77
  %141 = vmatpush1.msra.mxu0 %v76
  %142 = vmatprep.subr.mxu0 %v79
  %143 = vmatpush1.msra.mxu0 %v78
  %144 = vmatprep.subr.mxu0 %v81
  %145 = vmatpush1.msra.mxu0 %v80
  %146 = vmatprep.subr.mxu0 %v83
  %147 = vmatpush1.msra.mxu0 %v82
  %148 = vmatprep.subr.mxu0 %v85
  %149 = vmatpush1.msra.mxu0 %v84
  %150 = vmatprep.subr.mxu0 %v87
  %151 = vmatpush1.msra.mxu0 %v86
  %152 = vmatprep.subr.mxu0 %v89
  %153 = vmatpush1.msra.mxu0 %v88
  %154 = vmatprep.subr.mxu0 %v91
  %155 = vmatpush1.msra.mxu0 %v90
  %156 = vmatprep.subr.mxu0 %v93
  %157 = vmatpush1.msra.mxu0 %v92
  %158 = vmatprep.subr.mxu0 %v95
  %159 = vmatpush1.msra.mxu0 %v94
  %160 = vmatprep.subr.mxu0 %v97
  %161 = vmatpush1.msra.mxu0 %v96
  %162 = vmatprep.subr.mxu0 %v99
  %163 = vmatpush1.msra.mxu0 %v98
  %164 = vmatprep.subr.mxu0 %v101
  %165 = vmatpush1.msra.mxu0 %v100
  %166 = vmatprep.subr.mxu0 %v103
  %167 = vmatpush1.msra.mxu0 %v102
  %168 = vmatprep.subr.mxu0 %v105
  %169 = vmatpush1.msra.mxu0 %v104
  %170 = vmatprep.subr.mxu0 %v107
  %171 = vmatpush1.msra.mxu0 %v106
  %172 = vmatprep.subr.mxu0 %v109
  %173 = vmatpush1.msra.mxu0 %v108
  %174 = vmatprep.subr.mxu0 %v111
  %175 = vmatpush1.msra.mxu0 %v110
  %176 = vmatprep.subr.mxu0 %v113
  %177 = vmatpush1.msra.mxu0 %v112
  %178 = vmatprep.subr.mxu0 %v115
  %179 = vmatpush1.msra.mxu0 %v114
  %180 = vmatprep.subr.mxu0 %v117
  %181 = vmatpush1.msra.mxu0 %v116
  %182 = vmatprep.subr.mxu0 %v119
  %183 = vmatpush1.msra.mxu0 %v118
  %184 = vmatprep.subr.mxu0 %v121
  %185 = vmatpush1.msra.mxu0 %v120
  %186 = vmatprep.subr.mxu0 %v123
  %187 = vmatpush1.msra.mxu0 %v122
  %188 = vmatprep.subr.mxu0 %v125
  %189 = vmatpush1.msra.mxu0 %v124
  %190 = vmatprep.subr.mxu0 %v127
  %191 = vmatpush1.msra.mxu0 %v126
  %192 = vmatprep.mubr.f32.mxu0 %v36
  %193 = vmatmul.mubr.f32.gmra.mrb[0].mxu0 %v35
  %v194 = vpop.f32.mrb[0].mxu0
  %v195 = vadd.f32 0.0, %v194
  %v196 = vpop.f32.mrb[0].mxu0
  %v197 = vadd.f32 0.0, %v196
  %198 = vmatprep.mubr.f32.mxu0 %v38
  %199 = vmatmul.mubr.f32.gmra.mrb[0].mxu0 %v37
  %v200 = vpop.f32.mrb[0].mxu0
  %v201 = vadd.f32 0.0, %v200
  %v202 = vpop.f32.mrb[0].mxu0
  %v203 = vadd.f32 0.0, %v202
  %204 = vmatprep.mubr.f32.mxu0 %v40
  %205 = vmatmul.mubr.f32.gmra.mrb[0].mxu0 %v39
  %v206 = vpop.f32.mrb[0].mxu0
  %v207 = vadd.f32 0.0, %v206
  %v208 = vpop.f32.mrb[0].mxu0
  %v209 = vadd.f32 0.0, %v208
  %210 = vmatprep.mubr.f32.mxu0 %v42
  %211 = vmatmul.mubr.f32.gmra.mrb[0].mxu0 %v41
  %v212 = vpop.f32.mrb[0].mxu0
  %v213 = vadd.f32 0.0, %v212
  %v214 = vpop.f32.mrb[0].mxu0
  %v215 = vadd.f32 0.0, %v214
  %216 = vdwg.mxu0
  %v217 = vld [vmem:[%s6 + $0x400] sm:$0xff]
  %v218 = vld [vmem:[%s6 + $0x408] sm:$0xff]
  %v219 = vld [vmem:[%s6 + $0x410] sm:$0xff]
  %v220 = vld [vmem:[%s6 + $0x418] sm:$0xff]
  %v221 = vld [vmem:[%s6 + $0x420] sm:$0xff]
  %v222 = vld [vmem:[%s6 + $0x428] sm:$0xff]
  %v223 = vld [vmem:[%s6 + $0x430] sm:$0xff]
  %v224 = vld [vmem:[%s6 + $0x438] sm:$0xff]
  %v225 = vld [vmem:[%s6 + $0x440] sm:$0xff]
  %v226 = vld [vmem:[%s6 + $0x448] sm:$0xff]
  %v227 = vld [vmem:[%s6 + $0x450] sm:$0xff]
  %v228 = vld [vmem:[%s6 + $0x458] sm:$0xff]
  %v229 = vld [vmem:[%s6 + $0x460] sm:$0xff]
  %v230 = vld [vmem:[%s6 + $0x468] sm:$0xff]
  %v231 = vld [vmem:[%s6 + $0x470] sm:$0xff]
  %v232 = vld [vmem:[%s6 + $0x478] sm:$0xff]
  %v233 = vld [vmem:[%s6 + $0x480] sm:$0xff]
  %v234 = vld [vmem:[%s6 + $0x488] sm:$0xff]
  %v235 = vld [vmem:[%s6 + $0x490] sm:$0xff]
  %v236 = vld [vmem:[%s6 + $0x498] sm:$0xff]
  %v237 = vld [vmem:[%s6 + $0x4a0] sm:$0xff]
  %v238 = vld [vmem:[%s6 + $0x4a8] sm:$0xff]
  %v239 = vld [vmem:[%s6 + $0x4b0] sm:$0xff]
  %v240 = vld [vmem:[%s6 + $0x4b8] sm:$0xff]
  %v241 = vld [vmem:[%s6 + $0x4c0] sm:$0xff]
  %v242 = vld [vmem:[%s6 + $0x4c8] sm:$0xff]
  %v243 = vld [vmem:[%s6 + $0x4d0] sm:$0xff]
  %v244 = vld [vmem:[%s6 + $0x4d8] sm:$0xff]
  %v245 = vld [vmem:[%s6 + $0x4e0] sm:$0xff]
  %v246 = vld [vmem:[%s6 + $0x4e8] sm:$0xff]
  %v247 = vld [vmem:[%s6 + $0x4f0] sm:$0xff]
  %v248 = vld [vmem:[%s6 + $0x4f8] sm:$0xff]
  %v249 = vld [vmem:[%s6 + $0x500] sm:$0xff]
  %v250 = vld [vmem:[%s6 + $0x508] sm:$0xff]
  %v251 = vld [vmem:[%s6 + $0x510] sm:$0xff]
  %v252 = vld [vmem:[%s6 + $0x518] sm:$0xff]
  %v253 = vld [vmem:[%s6 + $0x520] sm:$0xff]
  %v254 = vld [vmem:[%s6 + $0x528] sm:$0xff]
  %v255 = vld [vmem:[%s6 + $0x530] sm:$0xff]
  %v256 = vld [vmem:[%s6 + $0x538] sm:$0xff]
  %v257 = vld [vmem:[%s6 + $0x540] sm:$0xff]
  %v258 = vld [vmem:[%s6 + $0x548] sm:$0xff]
  %v259 = vld [vmem:[%s6 + $0x550] sm:$0xff]
  %v260 = vld [vmem:[%s6 + $0x558] sm:$0xff]
  %v261 = vld [vmem:[%s6 + $0x560] sm:$0xff]
  %v262 = vld [vmem:[%s6 + $0x568] sm:$0xff]
  %v263 = vld [vmem:[%s6 + $0x570] sm:$0xff]
  %v264 = vld [vmem:[%s6 + $0x578] sm:$0xff]
  %v265 = vld [vmem:[%s6 + $0x580] sm:$0xff]
  %v266 = vld [vmem:[%s6 + $0x588] sm:$0xff]
  %v267 = vld [vmem:[%s6 + $0x590] sm:$0xff]
  %v268 = vld [vmem:[%s6 + $0x598] sm:$0xff]
  %v269 = vld [vmem:[%s6 + $0x5a0] sm:$0xff]
  %v270 = vld [vmem:[%s6 + $0x5a8] sm:$0xff]
  %v271 = vld [vmem:[%s6 + $0x5b0] sm:$0xff]
  %v272 = vld [vmem:[%s6 + $0x5b8] sm:$0xff]
  %v273 = vld [vmem:[%s6 + $0x5c0] sm:$0xff]
  %v274 = vld [vmem:[%s6 + $0x5c8] sm:$0xff]
  %v275 = vld [vmem:[%s6 + $0x5d0] sm:$0xff]
  %v276 = vld [vmem:[%s6 + $0x5d8] sm:$0xff]
  %v277 = vld [vmem:[%s6 + $0x5e0] sm:$0xff]
  %v278 = vld [vmem:[%s6 + $0x5e8] sm:$0xff]
  %v279 = vld [vmem:[%s6 + $0x5f0] sm:$0xff]
  %v280 = vld [vmem:[%s6 + $0x5f8] sm:$0xff]
  %281 = vmatprep.subr.mxu0 %v218
  %282 = vmatpush1.msra.mxu0 %v217
  %283 = vmatprep.subr.mxu0 %v220
  %284 = vmatpush1.msra.mxu0 %v219
  %285 = vmatprep.subr.mxu0 %v222
  %286 = vmatpush1.msra.mxu0 %v221
  %287 = vmatprep.subr.mxu0 %v224
  %288 = vmatpush1.msra.mxu0 %v223
  %289 = vmatprep.subr.mxu0 %v226
  %290 = vmatpush1.msra.mxu0 %v225
  %291 = vmatprep.subr.mxu0 %v228
  %292 = vmatpush1.msra.mxu0 %v227
  %293 = vmatprep.subr.mxu0 %v230
  %294 = vmatpush1.msra.mxu0 %v229
  %295 = vmatprep.subr.mxu0 %v232
  %296 = vmatpush1.msra.mxu0 %v231
  %297 = vmatprep.subr.mxu0 %v234
  %298 = vmatpush1.msra.mxu0 %v233
  %299 = vmatprep.subr.mxu0 %v236
  %300 = vmatpush1.msra.mxu0 %v235
  %301 = vmatprep.subr.mxu0 %v238
  %302 = vmatpush1.msra.mxu0 %v237
  %303 = vmatprep.subr.mxu0 %v240
  %304 = vmatpush1.msra.mxu0 %v239
  %305 = vmatprep.subr.mxu0 %v242
  %306 = vmatpush1.msra.mxu0 %v241
  %307 = vmatprep.subr.mxu0 %v244
  %308 = vmatpush1.msra.mxu0 %v243
  %309 = vmatprep.subr.mxu0 %v246
  %310 = vmatpush1.msra.mxu0 %v245
  %311 = vmatprep.subr.mxu0 %v248
  %312 = vmatpush1.msra.mxu0 %v247
  %313 = vmatprep.subr.mxu0 %v250
  %314 = vmatpush1.msra.mxu0 %v249
  %315 = vmatprep.subr.mxu0 %v252
  %316 = vmatpush1.msra.mxu0 %v251
  %317 = vmatprep.subr.mxu0 %v254
  %318 = vmatpush1.msra.mxu0 %v253
  %319 = vmatprep.subr.mxu0 %v256
  %320 = vmatpush1.msra.mxu0 %v255
  %321 = vmatprep.subr.mxu0 %v258
  %322 = vmatpush1.msra.mxu0 %v257
  %323 = vmatprep.subr.mxu0 %v260
  %324 = vmatpush1.msra.mxu0 %v259
  %325 = vmatprep.subr.mxu0 %v262
  %326 = vmatpush1.msra.mxu0 %v261
  %327 = vmatprep.subr.mxu0 %v264
  %328 = vmatpush1.msra.mxu0 %v263
  %329 = vmatprep.subr.mxu0 %v266
  %330 = vmatpush1.msra.mxu0 %v265
  %331 = vmatprep.subr.mxu0 %v268
  %332 = vmatpush1.msra.mxu0 %v267
  %333 = vmatprep.subr.mxu0 %v270
  %334 = vmatpush1.msra.mxu0 %v269
  %335 = vmatprep.subr.mxu0 %v272
  %336 = vmatpush1.msra.mxu0 %v271
  %337 = vmatprep.subr.mxu0 %v274
  %338 = vmatpush1.msra.mxu0 %v273
  %339 = vmatprep.subr.mxu0 %v276
  %340 = vmatpush1.msra.mxu0 %v275
  %341 = vmatprep.subr.mxu0 %v278
  %342 = vmatpush1.msra.mxu0 %v277
  %343 = vmatprep.subr.mxu0 %v280
  %344 = vmatpush1.msra.mxu0 %v279
  %345 = vmatprep.mubr.f32.mxu0 %v36
  %346 = vmatmul.mubr.f32.gmra.mrb[0].mxu0 %v35
  %v347 = vpop.f32.mrb[0].mxu0
  %v348 = vadd.f32 0.0, %v347
  %v349 = vpop.f32.mrb[0].mxu0
  %v350 = vadd.f32 0.0, %v349
  %351 = vmatprep.mubr.f32.mxu0 %v38
  %352 = vmatmul.mubr.f32.gmra.mrb[0].mxu0 %v37
  %v353 = vpop.f32.mrb[0].mxu0
  %v354 = vadd.f32 0.0, %v353
  %v355 = vpop.f32.mrb[0].mxu0
  %v356 = vadd.f32 0.0, %v355
  %357 = vmatprep.mubr.f32.mxu0 %v40
  %358 = vmatmul.mubr.f32.gmra.mrb[0].mxu0 %v39
  %v359 = vpop.f32.mrb[0].mxu0
  %v360 = vadd.f32 0.0, %v359
  %v361 = vpop.f32.mrb[0].mxu0
  %v362 = vadd.f32 0.0, %v361
  %363 = vmatprep.mubr.f32.mxu0 %v42
  %364 = vmatmul.mubr.f32.gmra.mrb[0].mxu0 %v41
  %v365 = vpop.f32.mrb[0].mxu0
  %v366 = vadd.f32 0.0, %v365
  %v367 = vpop.f32.mrb[0].mxu0
  %v368 = vadd.f32 0.0, %v367
  %369 = vdwg.mxu0
  %v370 = vld [vmem:[%s1] sm:$0xff]
  %v371 = vld [vmem:[%s1 + $0x8] sm:$0xff]
  %v372 = vld [vmem:[%s1 + $0x10] sm:$0xff]
  %v373 = vld [vmem:[%s1 + $0x18] sm:$0xff]
  %v374 = vld [vmem:[%s1 + $0x20] sm:$0xff]
  %v375 = vld [vmem:[%s1 + $0x28] sm:$0xff]
  %v376 = vld [vmem:[%s1 + $0x30] sm:$0xff]
  %v377 = vld [vmem:[%s1 + $0x38] sm:$0xff]
  %v378 = vld [vmem:[%s1 + $0x40] sm:$0xff]
  %v379 = vld [vmem:[%s1 + $0x48] sm:$0xff]
  %v380 = vld [vmem:[%s1 + $0x50] sm:$0xff]
  %v381 = vld [vmem:[%s1 + $0x58] sm:$0xff]
  %vm382 = vcmask 261120
  %v384 = vsel %vm382, %v370, 0
  %v387 = vsel %vm382, %v371, 0
  %v390 = vsel %vm382, %v372, 0
  %v393 = vsel %vm382, %v373, 0
  %v396 = vsel %vm382, %v374, 0
  %v399 = vsel %vm382, %v375, 0
  %v402 = vsel %vm382, %v376, 0
  %v405 = vsel %vm382, %v377, 0
  %v408 = vsel %vm382, %v378, 0
  %v411 = vsel %vm382, %v379, 0
  %v414 = vsel %vm382, %v380, 0
  %v417 = vsel %vm382, %v381, 0
  %419 = vmatprep.subr.mxu0 0.0
  %420 = vmatpush1.msra.mxu0 %v60
  %421 = vmatprep.subr.mxu0 0.0
  %422 = vmatpush1.msra.mxu0 %v61
  %423 = vmatprep.subr.mxu0 0.0
  %424 = vmatpush1.msra.mxu0 %v62
  %425 = vmatprep.subr.mxu0 0.0
  %426 = vmatpush1.msra.mxu0 %v63
  %427 = vmatprep.subr.mxu0 0.0
  %428 = vmatpush1.msra.mxu0 0.0
  %429 = vmatprep.subr.mxu0 0.0
  %430 = vmatpush1.msra.mxu0 0.0
  %431 = vmatprep.subr.mxu0 0.0
  %432 = vmatpush1.msra.mxu0 0.0
  %433 = vmatprep.subr.mxu0 0.0
  %434 = vmatpush1.msra.mxu0 0.0
  %435 = vmatprep.subr.mxu0 0.0
  %436 = vmatpush1.msra.mxu0 0.0
  %437 = vmatprep.subr.mxu0 0.0
  %438 = vmatpush1.msra.mxu0 0.0
  %439 = vmatprep.subr.mxu0 0.0
  %440 = vmatpush1.msra.mxu0 0.0
  %441 = vmatprep.subr.mxu0 0.0
  %442 = vmatpush1.msra.mxu0 0.0
  %443 = vmatprep.subr.mxu0 0.0
  %444 = vmatpush1.msra.mxu0 0.0
  %445 = vmatprep.subr.mxu0 0.0
  %446 = vmatpush1.msra.mxu0 0.0
  %447 = vmatprep.subr.mxu0 0.0
  %448 = vmatpush1.msra.mxu0 0.0
  %449 = vmatprep.subr.mxu0 0.0
  %450 = vmatpush1.msra.mxu0 0.0
  %451 = vmatprep.subr.mxu0 0.0
  %452 = vmatpush1.msra.mxu0 0.0
  %453 = vmatprep.subr.mxu0 0.0
  %454 = vmatpush1.msra.mxu0 0.0
  %455 = vmatprep.subr.mxu0 0.0
  %456 = vmatpush1.msra.mxu0 0.0
  %457 = vmatprep.subr.mxu0 0.0
  %458 = vmatpush1.msra.mxu0 0.0
  %459 = vmatprep.subr.mxu0 0.0
  %460 = vmatpush1.msra.mxu0 0.0
  %461 = vmatprep.subr.mxu0 0.0
  %462 = vmatpush1.msra.mxu0 0.0
  %463 = vmatprep.subr.mxu0 0.0
  %464 = vmatpush1.msra.mxu0 0.0
  %465 = vmatprep.subr.mxu0 0.0
  %466 = vmatpush1.msra.mxu0 0.0
  %467 = vmatprep.subr.mxu0 0.0
  %468 = vmatpush1.msra.mxu0 0.0
  %469 = vmatprep.subr.mxu0 0.0
  %470 = vmatpush1.msra.mxu0 0.0
  %471 = vmatprep.subr.mxu0 0.0
  %472 = vmatpush1.msra.mxu0 0.0
  %473 = vmatprep.subr.mxu0 0.0
  %474 = vmatpush1.msra.mxu0 0.0
  %475 = vmatprep.subr.mxu0 0.0
  %476 = vmatpush1.msra.mxu0 0.0
  %477 = vmatprep.subr.mxu0 0.0
  %478 = vmatpush1.msra.mxu0 0.0
  %479 = vmatprep.subr.mxu0 0.0
  %480 = vmatpush1.msra.mxu0 0.0
  %481 = vmatprep.subr.mxu0 0.0
  %482 = vmatpush1.msra.mxu0 0.0
  %483 = vmatprep.mubr.f32.mxu0 0.0
  %484 = vmatmul.mubr.f32.gmra.mrb[0].mxu0 %v384
  %v485 = vpop.f32.mrb[0].mxu0
  %v486 = vadd.f32 0.0, %v485
  %v487 = vpop.f32.mrb[0].mxu0
  %488 = vmatprep.mubr.f32.mxu0 0.0
  %489 = vmatmul.mubr.f32.gmra.mrb[0].mxu0 %v387
  %v490 = vpop.f32.mrb[0].mxu0
  %v491 = vadd.f32 0.0, %v490
  %v492 = vpop.f32.mrb[0].mxu0
  %493 = vmatprep.mubr.f32.mxu0 0.0
  %494 = vmatmul.mubr.f32.gmra.mrb[0].mxu0 %v390
  %v495 = vpop.f32.mrb[0].mxu0
  %v496 = vadd.f32 0.0, %v495
  %v497 = vpop.f32.mrb[0].mxu0
  %498 = vmatprep.mubr.f32.mxu0 0.0
  %499 = vmatmul.mubr.f32.gmra.mrb[0].mxu0 %v393
  %v500 = vpop.f32.mrb[0].mxu0
  %v501 = vadd.f32 0.0, %v500
  %v502 = vpop.f32.mrb[0].mxu0
  %503 = vmatprep.mubr.f32.mxu0 0.0
  %504 = vmatmul.mubr.f32.gmra.mrb[0].mxu0 %v396
  %v505 = vpop.f32.mrb[0].mxu0
  %v506 = vadd.f32 0.0, %v505
  %v507 = vpop.f32.mrb[0].mxu0
  %508 = vmatprep.mubr.f32.mxu0 0.0
  %509 = vmatmul.mubr.f32.gmra.mrb[0].mxu0 %v399
  %v510 = vpop.f32.mrb[0].mxu0
  %v511 = vadd.f32 0.0, %v510
  %v512 = vpop.f32.mrb[0].mxu0
  %513 = vmatprep.mubr.f32.mxu0 0.0
  %514 = vmatmul.mubr.f32.gmra.mrb[0].mxu0 %v402
  %v515 = vpop.f32.mrb[0].mxu0
  %v516 = vadd.f32 0.0, %v515
  %v517 = vpop.f32.mrb[0].mxu0
  %518 = vmatprep.mubr.f32.mxu0 0.0
  %519 = vmatmul.mubr.f32.gmra.mrb[0].mxu0 %v405
  %v520 = vpop.f32.mrb[0].mxu0
  %v521 = vadd.f32 0.0, %v520
  %v522 = vpop.f32.mrb[0].mxu0
  %523 = vmatprep.mubr.f32.mxu0 0.0
  %524 = vmatmul.mubr.f32.gmra.mrb[0].mxu0 %v408
  %v525 = vpop.f32.mrb[0].mxu0
  %v526 = vadd.f32 0.0, %v525
  %v527 = vpop.f32.mrb[0].mxu0
  %528 = vmatprep.mubr.f32.mxu0 0.0
  %529 = vmatmul.mubr.f32.gmra.mrb[0].mxu0 %v411
  %v530 = vpop.f32.mrb[0].mxu0
  %v531 = vadd.f32 0.0, %v530
  %v532 = vpop.f32.mrb[0].mxu0
  %533 = vmatprep.mubr.f32.mxu0 0.0
  %534 = vmatmul.mubr.f32.gmra.mrb[0].mxu0 %v414
  %v535 = vpop.f32.mrb[0].mxu0
  %v536 = vadd.f32 0.0, %v535
  %v537 = vpop.f32.mrb[0].mxu0
  %538 = vmatprep.mubr.f32.mxu0 0.0
  %539 = vmatmul.mubr.f32.gmra.mrb[0].mxu0 %v417
  %v540 = vpop.f32.mrb[0].mxu0
  %v541 = vadd.f32 0.0, %v540
  %v542 = vpop.f32.mrb[0].mxu0
  %543 = vdwg.mxu0
  %v544 = vtanh.pop %v486
  %v545 = vtanh.pop %v491
  %v546 = vtanh.pop %v496
  %v547 = vtanh.pop %v501
  %v548 = vtanh.pop %v506
  %v549 = vtanh.pop %v511
  %v550 = vtanh.pop %v516
  %v551 = vtanh.pop %v521
  %v552 = vtanh.pop %v526
  %v553 = vtanh.pop %v531
  %v554 = vtanh.pop %v536
  %v555 = vtanh.pop %v541
  %557 = vset.pattern.permute.xlu0 0
  %558 = vperm.xlu0 %557, %v544
  %v559 = vpop.permute.xlu0 %558
  %562 = vset.pattern.permute.xlu0 0
  %563 = vperm.xlu0 %562, %v545
  %v564 = vpop.permute.xlu0 %563
  %567 = vset.pattern.permute.xlu0 0
  %568 = vperm.xlu0 %567, %v546
  %v569 = vpop.permute.xlu0 %568
  %572 = vset.pattern.permute.xlu0 0
  %573 = vperm.xlu0 %572, %v547
  %v574 = vpop.permute.xlu0 %573
  %v576 = vmul.f32 %v195, %v559
  %v577 = vmul.f32 %v197, %v559
  %v578 = vmul.f32 %v201, %v564
  %v579 = vmul.f32 %v203, %v564
  %v580 = vmul.f32 %v207, %v569
  %v581 = vmul.f32 %v209, %v569
  %v582 = vmul.f32 %v213, %v574
  %v583 = vmul.f32 %v215, %v574
  %585 = vset.pattern.permute.xlu0 0
  %586 = vperm.xlu0 %585, %v548
  %v587 = vpop.permute.xlu0 %586
  %590 = vset.pattern.permute.xlu0 0
  %591 = vperm.xlu0 %590, %v549
  %v592 = vpop.permute.xlu0 %591
  %595 = vset.pattern.permute.xlu0 0
  %596 = vperm.xlu0 %595, %v550
  %v597 = vpop.permute.xlu0 %596
  %600 = vset.pattern.permute.xlu0 0
  %601 = vperm.xlu0 %600, %v551
  %v602 = vpop.permute.xlu0 %601
  %v604 = vmul.f32 %v35, %v587
  %v605 = vmul.f32 %v36, %v587
  %v606 = vmul.f32 %v37, %v592
  %v607 = vmul.f32 %v38, %v592
  %v608 = vmul.f32 %v39, %v597
  %v609 = vmul.f32 %v40, %v597
  %v610 = vmul.f32 %v41, %v602
  %v611 = vmul.f32 %v42, %v602
  %v612 = vadd.f32 %v576, %v604
  %v613 = vadd.f32 %v577, %v605
  %v614 = vadd.f32 %v578, %v606
  %v615 = vadd.f32 %v579, %v607
  %v616 = vadd.f32 %v580, %v608
  %v617 = vadd.f32 %v581, %v609
  %v618 = vadd.f32 %v582, %v610
  %v619 = vadd.f32 %v583, %v611
  %621 = vset.pattern.permute.xlu0 0
  %622 = vperm.xlu0 %621, %v552
  %v623 = vpop.permute.xlu0 %622
  %626 = vset.pattern.permute.xlu0 0
  %627 = vperm.xlu0 %626, %v553
  %v628 = vpop.permute.xlu0 %627
  %631 = vset.pattern.permute.xlu0 0
  %632 = vperm.xlu0 %631, %v554
  %v633 = vpop.permute.xlu0 %632
  %636 = vset.pattern.permute.xlu0 0
  %637 = vperm.xlu0 %636, %v555
  %v638 = vpop.permute.xlu0 %637
  %v640 = vmul.f32 %v348, %v623
  %v641 = vmul.f32 %v350, %v623
  %v642 = vmul.f32 %v354, %v628
  %v643 = vmul.f32 %v356, %v628
  %v644 = vmul.f32 %v360, %v633
  %v645 = vmul.f32 %v362, %v633
  %v646 = vmul.f32 %v366, %v638
  %v647 = vmul.f32 %v368, %v638
  %v648 = vadd.f32 %v612, %v640
  %v649 = vadd.f32 %v613, %v641
  %v650 = vadd.f32 %v614, %v642
  %v651 = vadd.f32 %v615, %v643
  %v652 = vadd.f32 %v616, %v644
  %v653 = vadd.f32 %v617, %v645
  %v654 = vadd.f32 %v618, %v646
  %v655 = vadd.f32 %v619, %v647
  %v656 = vld [vmem:[%s8] sm:$0xff]
  %v657 = vld [vmem:[%s8 + $0x8] sm:$0xff]
  %v658 = vld [vmem:[%s8 + $0x10] sm:$0xff]
  %v659 = vld [vmem:[%s8 + $0x18] sm:$0xff]
  %v660 = vld [vmem:[%s8 + $0x20] sm:$0xff]
  %v661 = vld [vmem:[%s8 + $0x28] sm:$0xff]
  %v662 = vld [vmem:[%s8 + $0x30] sm:$0xff]
  %v663 = vld [vmem:[%s8 + $0x38] sm:$0xff]
  %v664 = vld [vmem:[%s8 + $0x40] sm:$0xff]
  %v665 = vld [vmem:[%s8 + $0x48] sm:$0xff]
  %v666 = vld [vmem:[%s8 + $0x50] sm:$0xff]
  %v667 = vld [vmem:[%s8 + $0x58] sm:$0xff]
  %v668 = vld [vmem:[%s8 + $0x60] sm:$0xff]
  %v669 = vld [vmem:[%s8 + $0x68] sm:$0xff]
  %v670 = vld [vmem:[%s8 + $0x70] sm:$0xff]
  %v671 = vld [vmem:[%s8 + $0x78] sm:$0xff]
  %v672 = vld [vmem:[%s8 + $0x80] sm:$0xff]
  %v673 = vld [vmem:[%s8 + $0x88] sm:$0xff]
  %v674 = vld [vmem:[%s8 + $0x90] sm:$0xff]
  %v675 = vld [vmem:[%s8 + $0x98] sm:$0xff]
  %v676 = vld [vmem:[%s8 + $0xa0] sm:$0xff]
  %v677 = vld [vmem:[%s8 + $0xa8] sm:$0xff]
  %v678 = vld [vmem:[%s8 + $0xb0] sm:$0xff]
  %v679 = vld [vmem:[%s8 + $0xb8] sm:$0xff]
  %v680 = vld [vmem:[%s8 + $0xc0] sm:$0xff]
  %v681 = vld [vmem:[%s8 + $0xc8] sm:$0xff]
  %v682 = vld [vmem:[%s8 + $0xd0] sm:$0xff]
  %v683 = vld [vmem:[%s8 + $0xd8] sm:$0xff]
  %v684 = vld [vmem:[%s8 + $0xe0] sm:$0xff]
  %v685 = vld [vmem:[%s8 + $0xe8] sm:$0xff]
  %v686 = vld [vmem:[%s8 + $0xf0] sm:$0xff]
  %v687 = vld [vmem:[%s8 + $0xf8] sm:$0xff]
  %v688 = vld [vmem:[%s8 + $0x100] sm:$0xff]
  %v689 = vld [vmem:[%s8 + $0x108] sm:$0xff]
  %v690 = vld [vmem:[%s8 + $0x110] sm:$0xff]
  %v691 = vld [vmem:[%s8 + $0x118] sm:$0xff]
  %v692 = vld [vmem:[%s8 + $0x120] sm:$0xff]
  %v693 = vld [vmem:[%s8 + $0x128] sm:$0xff]
  %v694 = vld [vmem:[%s8 + $0x130] sm:$0xff]
  %v695 = vld [vmem:[%s8 + $0x138] sm:$0xff]
  %v696 = vld [vmem:[%s8 + $0x140] sm:$0xff]
  %v697 = vld [vmem:[%s8 + $0x148] sm:$0xff]
  %v698 = vld [vmem:[%s8 + $0x150] sm:$0xff]
  %v699 = vld [vmem:[%s8 + $0x158] sm:$0xff]
  %v700 = vld [vmem:[%s8 + $0x160] sm:$0xff]
  %v701 = vld [vmem:[%s8 + $0x168] sm:$0xff]
  %v702 = vld [vmem:[%s8 + $0x170] sm:$0xff]
  %v703 = vld [vmem:[%s8 + $0x178] sm:$0xff]
  %v704 = vld [vmem:[%s8 + $0x180] sm:$0xff]
  %v705 = vld [vmem:[%s8 + $0x188] sm:$0xff]
  %v706 = vld [vmem:[%s8 + $0x190] sm:$0xff]
  %v707 = vld [vmem:[%s8 + $0x198] sm:$0xff]
  %v708 = vld [vmem:[%s8 + $0x1a0] sm:$0xff]
  %v709 = vld [vmem:[%s8 + $0x1a8] sm:$0xff]
  %v710 = vld [vmem:[%s8 + $0x1b0] sm:$0xff]
  %v711 = vld [vmem:[%s8 + $0x1b8] sm:$0xff]
  %v712 = vld [vmem:[%s8 + $0x1c0] sm:$0xff]
  %v713 = vld [vmem:[%s8 + $0x1c8] sm:$0xff]
  %v714 = vld [vmem:[%s8 + $0x1d0] sm:$0xff]
  %v715 = vld [vmem:[%s8 + $0x1d8] sm:$0xff]
  %v716 = vld [vmem:[%s8 + $0x1e0] sm:$0xff]
  %v717 = vld [vmem:[%s8 + $0x1e8] sm:$0xff]
  %v718 = vld [vmem:[%s8 + $0x1f0] sm:$0xff]
  %v719 = vld [vmem:[%s8 + $0x1f8] sm:$0xff]
  %720 = vmatprep.subr.mxu0 %v657
  %721 = vmatpush1.msra.mxu0 %v656
  %722 = vmatprep.subr.mxu0 %v659
  %723 = vmatpush1.msra.mxu0 %v658
  %724 = vmatprep.subr.mxu0 %v661
  %725 = vmatpush1.msra.mxu0 %v660
  %726 = vmatprep.subr.mxu0 %v663
  %727 = vmatpush1.msra.mxu0 %v662
  %728 = vmatprep.subr.mxu0 %v665
  %729 = vmatpush1.msra.mxu0 %v664
  %730 = vmatprep.subr.mxu0 %v667
  %731 = vmatpush1.msra.mxu0 %v666
  %732 = vmatprep.subr.mxu0 %v669
  %733 = vmatpush1.msra.mxu0 %v668
  %734 = vmatprep.subr.mxu0 %v671
  %735 = vmatpush1.msra.mxu0 %v670
  %736 = vmatprep.subr.mxu0 %v673
  %737 = vmatpush1.msra.mxu0 %v672
  %738 = vmatprep.subr.mxu0 %v675
  %739 = vmatpush1.msra.mxu0 %v674
  %740 = vmatprep.subr.mxu0 %v677
  %741 = vmatpush1.msra.mxu0 %v676
  %742 = vmatprep.subr.mxu0 %v679
  %743 = vmatpush1.msra.mxu0 %v678
  %744 = vmatprep.subr.mxu0 %v681
  %745 = vmatpush1.msra.mxu0 %v680
  %746 = vmatprep.subr.mxu0 %v683
  %747 = vmatpush1.msra.mxu0 %v682
  %748 = vmatprep.subr.mxu0 %v685
  %749 = vmatpush1.msra.mxu0 %v684
  %750 = vmatprep.subr.mxu0 %v687
  %751 = vmatpush1.msra.mxu0 %v686
  %752 = vmatprep.subr.mxu0 %v689
  %753 = vmatpush1.msra.mxu0 %v688
  %754 = vmatprep.subr.mxu0 %v691
  %755 = vmatpush1.msra.mxu0 %v690
  %756 = vmatprep.subr.mxu0 %v693
  %757 = vmatpush1.msra.mxu0 %v692
  %758 = vmatprep.subr.mxu0 %v695
  %759 = vmatpush1.msra.mxu0 %v694
  %760 = vmatprep.subr.mxu0 %v697
  %761 = vmatpush1.msra.mxu0 %v696
  %762 = vmatprep.subr.mxu0 %v699
  %763 = vmatpush1.msra.mxu0 %v698
  %764 = vmatprep.subr.mxu0 %v701
  %765 = vmatpush1.msra.mxu0 %v700
  %766 = vmatprep.subr.mxu0 %v703
  %767 = vmatpush1.msra.mxu0 %v702
  %768 = vmatprep.subr.mxu0 %v705
  %769 = vmatpush1.msra.mxu0 %v704
  %770 = vmatprep.subr.mxu0 %v707
  %771 = vmatpush1.msra.mxu0 %v706
  %772 = vmatprep.subr.mxu0 %v709
  %773 = vmatpush1.msra.mxu0 %v708
  %774 = vmatprep.subr.mxu0 %v711
  %775 = vmatpush1.msra.mxu0 %v710
  %776 = vmatprep.subr.mxu0 %v713
  %777 = vmatpush1.msra.mxu0 %v712
  %778 = vmatprep.subr.mxu0 %v715
  %779 = vmatpush1.msra.mxu0 %v714
  %780 = vmatprep.subr.mxu0 %v717
  %781 = vmatpush1.msra.mxu0 %v716
  %782 = vmatprep.subr.mxu0 %v719
  %783 = vmatpush1.msra.mxu0 %v718
  %784 = vmatprep.mubr.f32.mxu0 %v36
  %785 = vmatmul.mubr.f32.gmra.mrb[0].mxu0 %v35
  %v786 = vpop.f32.mrb[0].mxu0
  %v787 = vadd.f32 0.0, %v786
  %v788 = vpop.f32.mrb[0].mxu0
  %v789 = vadd.f32 0.0, %v788
  %790 = vmatprep.mubr.f32.mxu0 %v38
  %791 = vmatmul.mubr.f32.gmra.mrb[0].mxu0 %v37
  %v792 = vpop.f32.mrb[0].mxu0
  %v793 = vadd.f32 0.0, %v792
  %v794 = vpop.f32.mrb[0].mxu0
  %v795 = vadd.f32 0.0, %v794
  %796 = vmatprep.mubr.f32.mxu0 %v40
  %797 = vmatmul.mubr.f32.gmra.mrb[0].mxu0 %v39
  %v798 = vpop.f32.mrb[0].mxu0
  %v799 = vadd.f32 0.0, %v798
  %v800 = vpop.f32.mrb[0].mxu0
  %v801 = vadd.f32 0.0, %v800
  %802 = vmatprep.mubr.f32.mxu0 %v42
  %803 = vmatmul.mubr.f32.gmra.mrb[0].mxu0 %v41
  %v804 = vpop.f32.mrb[0].mxu0
  %v805 = vadd.f32 0.0, %v804
  %v806 = vpop.f32.mrb[0].mxu0
  %v807 = vadd.f32 0.0, %v806
  %808 = vdwg.mxu0
  %v809 = vadd.f32 %v43, 1.0
  %v810 = vadd.f32 %v44, 1.0
  %v811 = vadd.f32 %v45, 1.0
  %v812 = vadd.f32 %v46, 1.0
  %814 = vset.pattern.permute.xlu0 0
  %815 = vperm.xlu0 %814, %v809
  %v816 = vpop.permute.xlu0 %815
  %819 = vset.pattern.permute.xlu0 0
  %820 = vperm.xlu0 %819, %v810
  %v821 = vpop.permute.xlu0 %820
  %824 = vset.pattern.permute.xlu0 0
  %825 = vperm.xlu0 %824, %v811
  %v826 = vpop.permute.xlu0 %825
  %829 = vset.pattern.permute.xlu0 0
  %830 = vperm.xlu0 %829, %v812
  %v831 = vpop.permute.xlu0 %830
  %v833 = vmul.f32 %v648, %v816
  %v834 = vmul.f32 %v649, %v816
  %v835 = vmul.f32 %v650, %v821
  %v836 = vmul.f32 %v651, %v821
  %v837 = vmul.f32 %v652, %v826
  %v838 = vmul.f32 %v653, %v826
  %v839 = vmul.f32 %v654, %v831
  %v840 = vmul.f32 %v655, %v831
  %842 = vset.pattern.permute.xlu0 0
  %843 = vperm.xlu0 %842, %v43
  %v844 = vpop.permute.xlu0 %843
  %847 = vset.pattern.permute.xlu0 0
  %848 = vperm.xlu0 %847, %v44
  %v849 = vpop.permute.xlu0 %848
  %852 = vset.pattern.permute.xlu0 0
  %853 = vperm.xlu0 %852, %v45
  %v854 = vpop.permute.xlu0 %853
  %857 = vset.pattern.permute.xlu0 0
  %858 = vperm.xlu0 %857, %v46
  %v859 = vpop.permute.xlu0 %858
  %v861 = vmul.f32 %v844, %v787
  %v862 = vmul.f32 %v844, %v789
  %v863 = vmul.f32 %v849, %v793
  %v864 = vmul.f32 %v849, %v795
  %v865 = vmul.f32 %v854, %v799
  %v866 = vmul.f32 %v854, %v801
  %v867 = vmul.f32 %v859, %v805
  %v868 = vmul.f32 %v859, %v807
  %v869 = vsub.f32 %v833, %v861
  %v870 = vsub.f32 %v834, %v862
  %v871 = vsub.f32 %v835, %v863
  %v872 = vsub.f32 %v836, %v864
  %v873 = vsub.f32 %v837, %v865
  %v874 = vsub.f32 %v838, %v866
  %v875 = vsub.f32 %v839, %v867
  %v876 = vsub.f32 %v840, %v868
  %877 = vset.pattern.permute.xlu0 1
  %878 = vperm.xlu0 %877, %v43
  %v879 = vpop.permute.xlu0 %878
  %881 = vset.pattern.permute.xlu0 1
  %882 = vperm.xlu0 %881, %v44
  %v883 = vpop.permute.xlu0 %882
  %885 = vset.pattern.permute.xlu0 1
  %886 = vperm.xlu0 %885, %v45
  %v887 = vpop.permute.xlu0 %886
  %889 = vset.pattern.permute.xlu0 1
  %890 = vperm.xlu0 %889, %v46
  %v891 = vpop.permute.xlu0 %890
  %v893 = vmul.f32 %v869, %v879
  %v894 = vmul.f32 %v870, %v879
  %v895 = vmul.f32 %v871, %v883
  %v896 = vmul.f32 %v872, %v883
  %v897 = vmul.f32 %v873, %v887
  %v898 = vmul.f32 %v874, %v887
  %v899 = vmul.f32 %v875, %v891
  %v900 = vmul.f32 %v876, %v891
  %901 = vset.pattern.permute.xlu0 2
  %902 = vperm.xlu0 %901, %v809
  %v903 = vpop.permute.xlu0 %902
  %905 = vset.pattern.permute.xlu0 2
  %906 = vperm.xlu0 %905, %v810
  %v907 = vpop.permute.xlu0 %906
  %909 = vset.pattern.permute.xlu0 2
  %910 = vperm.xlu0 %909, %v811
  %v911 = vpop.permute.xlu0 %910
  %913 = vset.pattern.permute.xlu0 2
  %914 = vperm.xlu0 %913, %v812
  %v915 = vpop.permute.xlu0 %914
  %v917 = vmul.f32 %v35, %v903
  %v918 = vmul.f32 %v36, %v903
  %v919 = vmul.f32 %v37, %v907
  %v920 = vmul.f32 %v38, %v907
  %v921 = vmul.f32 %v39, %v911
  %v922 = vmul.f32 %v40, %v911
  %v923 = vmul.f32 %v41, %v915
  %v924 = vmul.f32 %v42, %v915
  %v925 = vadd.f32 %v893, %v917
  %v926 = vadd.f32 %v894, %v918
  %v927 = vadd.f32 %v895, %v919
  %v928 = vadd.f32 %v896, %v920
  %v929 = vadd.f32 %v897, %v921
  %v930 = vadd.f32 %v898, %v922
  %v931 = vadd.f32 %v899, %v923
  %v932 = vadd.f32 %v900, %v924
  %v933 = vadd.f32 %v925, %v926
  %934 = vadd.xlane.f32.xlu0 %v933
  %v935 = vpop.xlane.xlu0 %934
  %v936 = vadd.f32 %v927, %v928
  %937 = vadd.xlane.f32.xlu0 %v936
  %v938 = vpop.xlane.xlu0 %937
  %v939 = vadd.f32 %v929, %v930
  %940 = vadd.xlane.f32.xlu0 %v939
  %v941 = vpop.xlane.xlu0 %940
  %v942 = vadd.f32 %v931, %v932
  %943 = vadd.xlane.f32.xlu0 %v942
  %v944 = vpop.xlane.xlu0 %943
  %v945 = vmul.f32 %v935, %v59
  %v946 = vmul.f32 %v938, %v59
  %v947 = vmul.f32 %v941, %v59
  %v948 = vmul.f32 %v944, %v59
  %v949 = vld [vmem:[%s2] sm:$0xff]
  %v950 = vld [vmem:[%s2 + $0x8] sm:$0xff]
  %v951 = vld [vmem:[%s2 + $0x10] sm:$0xff]
  %v952 = vld [vmem:[%s2 + $0x18] sm:$0xff]
  %v953 = vld [vmem:[%s2 + $0x20] sm:$0xff]
  %v954 = vld [vmem:[%s2 + $0x28] sm:$0xff]
  %v955 = vld [vmem:[%s2 + $0x30] sm:$0xff]
  %v956 = vld [vmem:[%s2 + $0x38] sm:$0xff]
  %v957 = vld [vmem:[%s2 + $0x40] sm:$0xff]
  %v958 = vld [vmem:[%s2 + $0x48] sm:$0xff]
  %v959 = vld [vmem:[%s2 + $0x50] sm:$0xff]
  %v960 = vld [vmem:[%s2 + $0x58] sm:$0xff]
  %v962 = vsel %vm382, %v949, 0
  %v965 = vsel %vm382, %v950, 0
  %v968 = vsel %vm382, %v951, 0
  %v971 = vsel %vm382, %v952, 0
  %v974 = vsel %vm382, %v953, 0
  %v977 = vsel %vm382, %v954, 0
  %v980 = vsel %vm382, %v955, 0
  %v983 = vsel %vm382, %v956, 0
  %v986 = vsel %vm382, %v957, 0
  %v989 = vsel %vm382, %v958, 0
  %v992 = vsel %vm382, %v959, 0
  %v995 = vsel %vm382, %v960, 0
  %997 = vmatprep.subr.mxu0 0.0
  %998 = vmatpush1.msra.mxu0 %v945
  %999 = vmatprep.subr.mxu0 0.0
  %1000 = vmatpush1.msra.mxu0 %v946
  %1001 = vmatprep.subr.mxu0 0.0
  %1002 = vmatpush1.msra.mxu0 %v947
  %1003 = vmatprep.subr.mxu0 0.0
  %1004 = vmatpush1.msra.mxu0 %v948
  %1005 = vmatprep.subr.mxu0 0.0
  %1006 = vmatpush1.msra.mxu0 0.0
  %1007 = vmatprep.subr.mxu0 0.0
  %1008 = vmatpush1.msra.mxu0 0.0
  %1009 = vmatprep.subr.mxu0 0.0
  %1010 = vmatpush1.msra.mxu0 0.0
  %1011 = vmatprep.subr.mxu0 0.0
  %1012 = vmatpush1.msra.mxu0 0.0
  %1013 = vmatprep.subr.mxu0 0.0
  %1014 = vmatpush1.msra.mxu0 0.0
  %1015 = vmatprep.subr.mxu0 0.0
  %1016 = vmatpush1.msra.mxu0 0.0
  %1017 = vmatprep.subr.mxu0 0.0
  %1018 = vmatpush1.msra.mxu0 0.0
  %1019 = vmatprep.subr.mxu0 0.0
  %1020 = vmatpush1.msra.mxu0 0.0
  %1021 = vmatprep.subr.mxu0 0.0
  %1022 = vmatpush1.msra.mxu0 0.0
  %1023 = vmatprep.subr.mxu0 0.0
  %1024 = vmatpush1.msra.mxu0 0.0
  %1025 = vmatprep.subr.mxu0 0.0
  %1026 = vmatpush1.msra.mxu0 0.0
  %1027 = vmatprep.subr.mxu0 0.0
  %1028 = vmatpush1.msra.mxu0 0.0
  %1029 = vmatprep.subr.mxu0 0.0
  %1030 = vmatpush1.msra.mxu0 0.0
  %1031 = vmatprep.subr.mxu0 0.0
  %1032 = vmatpush1.msra.mxu0 0.0
  %1033 = vmatprep.subr.mxu0 0.0
  %1034 = vmatpush1.msra.mxu0 0.0
  %1035 = vmatprep.subr.mxu0 0.0
  %1036 = vmatpush1.msra.mxu0 0.0
  %1037 = vmatprep.subr.mxu0 0.0
  %1038 = vmatpush1.msra.mxu0 0.0
  %1039 = vmatprep.subr.mxu0 0.0
  %1040 = vmatpush1.msra.mxu0 0.0
  %1041 = vmatprep.subr.mxu0 0.0
  %1042 = vmatpush1.msra.mxu0 0.0
  %1043 = vmatprep.subr.mxu0 0.0
  %1044 = vmatpush1.msra.mxu0 0.0
  %1045 = vmatprep.subr.mxu0 0.0
  %1046 = vmatpush1.msra.mxu0 0.0
  %1047 = vmatprep.subr.mxu0 0.0
  %1048 = vmatpush1.msra.mxu0 0.0
  %1049 = vmatprep.subr.mxu0 0.0
  %1050 = vmatpush1.msra.mxu0 0.0
  %1051 = vmatprep.subr.mxu0 0.0
  %1052 = vmatpush1.msra.mxu0 0.0
  %1053 = vmatprep.subr.mxu0 0.0
  %1054 = vmatpush1.msra.mxu0 0.0
  %1055 = vmatprep.subr.mxu0 0.0
  %1056 = vmatpush1.msra.mxu0 0.0
  %1057 = vmatprep.subr.mxu0 0.0
  %1058 = vmatpush1.msra.mxu0 0.0
  %1059 = vmatprep.subr.mxu0 0.0
  %1060 = vmatpush1.msra.mxu0 0.0
  %1061 = vmatprep.mubr.f32.mxu0 0.0
  %1062 = vmatmul.mubr.f32.gmra.mrb[0].mxu0 %v962
  %v1063 = vpop.f32.mrb[0].mxu0
  %v1064 = vadd.f32 0.0, %v1063
  %v1065 = vpop.f32.mrb[0].mxu0
  %1066 = vmatprep.mubr.f32.mxu0 0.0
  %1067 = vmatmul.mubr.f32.gmra.mrb[0].mxu0 %v965
  %v1068 = vpop.f32.mrb[0].mxu0
  %v1069 = vadd.f32 0.0, %v1068
  %v1070 = vpop.f32.mrb[0].mxu0
  %1071 = vmatprep.mubr.f32.mxu0 0.0
  %1072 = vmatmul.mubr.f32.gmra.mrb[0].mxu0 %v968
  %v1073 = vpop.f32.mrb[0].mxu0
  %v1074 = vadd.f32 0.0, %v1073
  %v1075 = vpop.f32.mrb[0].mxu0
  %1076 = vmatprep.mubr.f32.mxu0 0.0
  %1077 = vmatmul.mubr.f32.gmra.mrb[0].mxu0 %v971
  %v1078 = vpop.f32.mrb[0].mxu0
  %v1079 = vadd.f32 0.0, %v1078
  %v1080 = vpop.f32.mrb[0].mxu0
  %1081 = vmatprep.mubr.f32.mxu0 0.0
  %1082 = vmatmul.mubr.f32.gmra.mrb[0].mxu0 %v974
  %v1083 = vpop.f32.mrb[0].mxu0
  %v1084 = vadd.f32 0.0, %v1083
  %v1085 = vpop.f32.mrb[0].mxu0
  %1086 = vmatprep.mubr.f32.mxu0 0.0
  %1087 = vmatmul.mubr.f32.gmra.mrb[0].mxu0 %v977
  %v1088 = vpop.f32.mrb[0].mxu0
  %v1089 = vadd.f32 0.0, %v1088
  %v1090 = vpop.f32.mrb[0].mxu0
  %1091 = vmatprep.mubr.f32.mxu0 0.0
  %1092 = vmatmul.mubr.f32.gmra.mrb[0].mxu0 %v980
  %v1093 = vpop.f32.mrb[0].mxu0
  %v1094 = vadd.f32 0.0, %v1093
  %v1095 = vpop.f32.mrb[0].mxu0
  %1096 = vmatprep.mubr.f32.mxu0 0.0
  %1097 = vmatmul.mubr.f32.gmra.mrb[0].mxu0 %v983
  %v1098 = vpop.f32.mrb[0].mxu0
  %v1099 = vadd.f32 0.0, %v1098
  %v1100 = vpop.f32.mrb[0].mxu0
  %1101 = vmatprep.mubr.f32.mxu0 0.0
  %1102 = vmatmul.mubr.f32.gmra.mrb[0].mxu0 %v986
  %v1103 = vpop.f32.mrb[0].mxu0
  %v1104 = vadd.f32 0.0, %v1103
  %v1105 = vpop.f32.mrb[0].mxu0
  %1106 = vmatprep.mubr.f32.mxu0 0.0
  %1107 = vmatmul.mubr.f32.gmra.mrb[0].mxu0 %v989
  %v1108 = vpop.f32.mrb[0].mxu0
  %v1109 = vadd.f32 0.0, %v1108
  %v1110 = vpop.f32.mrb[0].mxu0
  %1111 = vmatprep.mubr.f32.mxu0 0.0
  %1112 = vmatmul.mubr.f32.gmra.mrb[0].mxu0 %v992
  %v1113 = vpop.f32.mrb[0].mxu0
  %v1114 = vadd.f32 0.0, %v1113
  %v1115 = vpop.f32.mrb[0].mxu0
  %1116 = vmatprep.mubr.f32.mxu0 0.0
  %1117 = vmatmul.mubr.f32.gmra.mrb[0].mxu0 %v995
  %v1118 = vpop.f32.mrb[0].mxu0
  %v1119 = vadd.f32 0.0, %v1118
  %v1120 = vpop.f32.mrb[0].mxu0
  %1121 = vdwg.mxu0
  %v1122 = vtanh.pop %v1064
  %v1123 = vtanh.pop %v1069
  %v1124 = vtanh.pop %v1074
  %v1125 = vtanh.pop %v1079
  %v1126 = vtanh.pop %v1084
  %v1127 = vtanh.pop %v1089
  %v1128 = vtanh.pop %v1094
  %v1129 = vtanh.pop %v1099
  %v1130 = vtanh.pop %v1104
  %v1131 = vtanh.pop %v1109
  %v1132 = vtanh.pop %v1114
  %v1133 = vtanh.pop %v1119
  %1135 = vset.pattern.permute.xlu0 0
  %1136 = vperm.xlu0 %1135, %v1122
  %v1137 = vpop.permute.xlu0 %1136
  %1140 = vset.pattern.permute.xlu0 0
  %1141 = vperm.xlu0 %1140, %v1123
  %v1142 = vpop.permute.xlu0 %1141
  %1145 = vset.pattern.permute.xlu0 0
  %1146 = vperm.xlu0 %1145, %v1124
  %v1147 = vpop.permute.xlu0 %1146
  %1150 = vset.pattern.permute.xlu0 0
  %1151 = vperm.xlu0 %1150, %v1125
  %v1152 = vpop.permute.xlu0 %1151
  %v1154 = vmul.f32 %v925, %v1137
  %v1155 = vmul.f32 %v926, %v1137
  %v1156 = vmul.f32 %v927, %v1142
  %v1157 = vmul.f32 %v928, %v1142
  %v1158 = vmul.f32 %v929, %v1147
  %v1159 = vmul.f32 %v930, %v1147
  %v1160 = vmul.f32 %v931, %v1152
  %v1161 = vmul.f32 %v932, %v1152
  %v1162 = vld [vmem:[%s7] sm:$0xff]
  %v1163 = vld [vmem:[%s7 + $0x8] sm:$0xff]
  %v1164 = vld [vmem:[%s7 + $0x10] sm:$0xff]
  %v1165 = vld [vmem:[%s7 + $0x18] sm:$0xff]
  %v1166 = vld [vmem:[%s7 + $0x20] sm:$0xff]
  %v1167 = vld [vmem:[%s7 + $0x28] sm:$0xff]
  %v1168 = vld [vmem:[%s7 + $0x30] sm:$0xff]
  %v1169 = vld [vmem:[%s7 + $0x38] sm:$0xff]
  %v1170 = vld [vmem:[%s7 + $0x40] sm:$0xff]
  %v1171 = vld [vmem:[%s7 + $0x48] sm:$0xff]
  %v1172 = vld [vmem:[%s7 + $0x50] sm:$0xff]
  %v1173 = vld [vmem:[%s7 + $0x58] sm:$0xff]
  %v1174 = vld [vmem:[%s7 + $0x60] sm:$0xff]
  %v1175 = vld [vmem:[%s7 + $0x68] sm:$0xff]
  %v1176 = vld [vmem:[%s7 + $0x70] sm:$0xff]
  %v1177 = vld [vmem:[%s7 + $0x78] sm:$0xff]
  %v1178 = vld [vmem:[%s7 + $0x80] sm:$0xff]
  %v1179 = vld [vmem:[%s7 + $0x88] sm:$0xff]
  %v1180 = vld [vmem:[%s7 + $0x90] sm:$0xff]
  %v1181 = vld [vmem:[%s7 + $0x98] sm:$0xff]
  %v1182 = vld [vmem:[%s7 + $0xa0] sm:$0xff]
  %v1183 = vld [vmem:[%s7 + $0xa8] sm:$0xff]
  %v1184 = vld [vmem:[%s7 + $0xb0] sm:$0xff]
  %v1185 = vld [vmem:[%s7 + $0xb8] sm:$0xff]
  %v1186 = vld [vmem:[%s7 + $0xc0] sm:$0xff]
  %v1187 = vld [vmem:[%s7 + $0xc8] sm:$0xff]
  %v1188 = vld [vmem:[%s7 + $0xd0] sm:$0xff]
  %v1189 = vld [vmem:[%s7 + $0xd8] sm:$0xff]
  %v1190 = vld [vmem:[%s7 + $0xe0] sm:$0xff]
  %v1191 = vld [vmem:[%s7 + $0xe8] sm:$0xff]
  %v1192 = vld [vmem:[%s7 + $0xf0] sm:$0xff]
  %v1193 = vld [vmem:[%s7 + $0xf8] sm:$0xff]
  %v1194 = vld [vmem:[%s7 + $0x100] sm:$0xff]
  %v1195 = vld [vmem:[%s7 + $0x108] sm:$0xff]
  %v1196 = vld [vmem:[%s7 + $0x110] sm:$0xff]
  %v1197 = vld [vmem:[%s7 + $0x118] sm:$0xff]
  %v1198 = vld [vmem:[%s7 + $0x120] sm:$0xff]
  %v1199 = vld [vmem:[%s7 + $0x128] sm:$0xff]
  %v1200 = vld [vmem:[%s7 + $0x130] sm:$0xff]
  %v1201 = vld [vmem:[%s7 + $0x138] sm:$0xff]
  %v1202 = vld [vmem:[%s7 + $0x140] sm:$0xff]
  %v1203 = vld [vmem:[%s7 + $0x148] sm:$0xff]
  %v1204 = vld [vmem:[%s7 + $0x150] sm:$0xff]
  %v1205 = vld [vmem:[%s7 + $0x158] sm:$0xff]
  %v1206 = vld [vmem:[%s7 + $0x160] sm:$0xff]
  %v1207 = vld [vmem:[%s7 + $0x168] sm:$0xff]
  %v1208 = vld [vmem:[%s7 + $0x170] sm:$0xff]
  %v1209 = vld [vmem:[%s7 + $0x178] sm:$0xff]
  %v1210 = vld [vmem:[%s7 + $0x180] sm:$0xff]
  %v1211 = vld [vmem:[%s7 + $0x188] sm:$0xff]
  %v1212 = vld [vmem:[%s7 + $0x190] sm:$0xff]
  %v1213 = vld [vmem:[%s7 + $0x198] sm:$0xff]
  %v1214 = vld [vmem:[%s7 + $0x1a0] sm:$0xff]
  %v1215 = vld [vmem:[%s7 + $0x1a8] sm:$0xff]
  %v1216 = vld [vmem:[%s7 + $0x1b0] sm:$0xff]
  %v1217 = vld [vmem:[%s7 + $0x1b8] sm:$0xff]
  %v1218 = vld [vmem:[%s7 + $0x1c0] sm:$0xff]
  %v1219 = vld [vmem:[%s7 + $0x1c8] sm:$0xff]
  %v1220 = vld [vmem:[%s7 + $0x1d0] sm:$0xff]
  %v1221 = vld [vmem:[%s7 + $0x1d8] sm:$0xff]
  %v1222 = vld [vmem:[%s7 + $0x1e0] sm:$0xff]
  %v1223 = vld [vmem:[%s7 + $0x1e8] sm:$0xff]
  %v1224 = vld [vmem:[%s7 + $0x1f0] sm:$0xff]
  %v1225 = vld [vmem:[%s7 + $0x1f8] sm:$0xff]
  %1227 = vset.pattern.permute.xlu0 0
  %1228 = vperm.xlu0 %1227, %v1126
  %v1229 = vpop.permute.xlu0 %1228
  %1232 = vset.pattern.permute.xlu0 0
  %1233 = vperm.xlu0 %1232, %v1127
  %v1234 = vpop.permute.xlu0 %1233
  %1237 = vset.pattern.permute.xlu0 0
  %1238 = vperm.xlu0 %1237, %v1128
  %v1239 = vpop.permute.xlu0 %1238
  %1242 = vset.pattern.permute.xlu0 0
  %1243 = vperm.xlu0 %1242, %v1129
  %v1244 = vpop.permute.xlu0 %1243
  %v1246 = vmul.f32 %v925, %v1229
  %v1247 = vmul.f32 %v926, %v1229
  %v1248 = vmul.f32 %v927, %v1234
  %v1249 = vmul.f32 %v928, %v1234
  %v1250 = vmul.f32 %v929, %v1239
  %v1251 = vmul.f32 %v930, %v1239
  %v1252 = vmul.f32 %v931, %v1244
  %v1253 = vmul.f32 %v932, %v1244
  %1254 = vmatprep.subr.mxu0 %v1163
  %1255 = vmatpush1.msra.mxu0 %v1162
  %1256 = vmatprep.subr.mxu0 %v1165
  %1257 = vmatpush1.msra.mxu0 %v1164
  %1258 = vmatprep.subr.mxu0 %v1167
  %1259 = vmatpush1.msra.mxu0 %v1166
  %1260 = vmatprep.subr.mxu0 %v1169
  %1261 = vmatpush1.msra.mxu0 %v1168
  %1262 = vmatprep.subr.mxu0 %v1171
  %1263 = vmatpush1.msra.mxu0 %v1170
  %1264 = vmatprep.subr.mxu0 %v1173
  %1265 = vmatpush1.msra.mxu0 %v1172
  %1266 = vmatprep.subr.mxu0 %v1175
  %1267 = vmatpush1.msra.mxu0 %v1174
  %1268 = vmatprep.subr.mxu0 %v1177
  %1269 = vmatpush1.msra.mxu0 %v1176
  %1270 = vmatprep.subr.mxu0 %v1179
  %1271 = vmatpush1.msra.mxu0 %v1178
  %1272 = vmatprep.subr.mxu0 %v1181
  %1273 = vmatpush1.msra.mxu0 %v1180
  %1274 = vmatprep.subr.mxu0 %v1183
  %1275 = vmatpush1.msra.mxu0 %v1182
  %1276 = vmatprep.subr.mxu0 %v1185
  %1277 = vmatpush1.msra.mxu0 %v1184
  %1278 = vmatprep.subr.mxu0 %v1187
  %1279 = vmatpush1.msra.mxu0 %v1186
  %1280 = vmatprep.subr.mxu0 %v1189
  %1281 = vmatpush1.msra.mxu0 %v1188
  %1282 = vmatprep.subr.mxu0 %v1191
  %1283 = vmatpush1.msra.mxu0 %v1190
  %1284 = vmatprep.subr.mxu0 %v1193
  %1285 = vmatpush1.msra.mxu0 %v1192
  %1286 = vmatprep.subr.mxu0 %v1195
  %1287 = vmatpush1.msra.mxu0 %v1194
  %1288 = vmatprep.subr.mxu0 %v1197
  %1289 = vmatpush1.msra.mxu0 %v1196
  %1290 = vmatprep.subr.mxu0 %v1199
  %1291 = vmatpush1.msra.mxu0 %v1198
  %1292 = vmatprep.subr.mxu0 %v1201
  %1293 = vmatpush1.msra.mxu0 %v1200
  %1294 = vmatprep.subr.mxu0 %v1203
  %1295 = vmatpush1.msra.mxu0 %v1202
  %1296 = vmatprep.subr.mxu0 %v1205
  %1297 = vmatpush1.msra.mxu0 %v1204
  %1298 = vmatprep.subr.mxu0 %v1207
  %1299 = vmatpush1.msra.mxu0 %v1206
  %1300 = vmatprep.subr.mxu0 %v1209
  %1301 = vmatpush1.msra.mxu0 %v1208
  %1302 = vmatprep.subr.mxu0 %v1211
  %1303 = vmatpush1.msra.mxu0 %v1210
  %1304 = vmatprep.subr.mxu0 %v1213
  %1305 = vmatpush1.msra.mxu0 %v1212
  %1306 = vmatprep.subr.mxu0 %v1215
  %1307 = vmatpush1.msra.mxu0 %v1214
  %1308 = vmatprep.subr.mxu0 %v1217
  %1309 = vmatpush1.msra.mxu0 %v1216
  %1310 = vmatprep.subr.mxu0 %v1219
  %1311 = vmatpush1.msra.mxu0 %v1218
  %1312 = vmatprep.subr.mxu0 %v1221
  %1313 = vmatpush1.msra.mxu0 %v1220
  %1314 = vmatprep.subr.mxu0 %v1223
  %1315 = vmatpush1.msra.mxu0 %v1222
  %1316 = vmatprep.subr.mxu0 %v1225
  %1317 = vmatpush1.msra.mxu0 %v1224
  %1318 = vmatprep.mubr.f32.mxu0 %v1155
  %1319 = vmatmul.mubr.f32.gmra.mrb[0].mxu0 %v1154
  %v1320 = vpop.f32.mrb[0].mxu0
  %v1321 = vadd.f32 %v1246, %v1320
  %v1322 = vpop.f32.mrb[0].mxu0
  %v1323 = vadd.f32 %v1247, %v1322
  %1324 = vmatprep.mubr.f32.mxu0 %v1157
  %1325 = vmatmul.mubr.f32.gmra.mrb[0].mxu0 %v1156
  %v1326 = vpop.f32.mrb[0].mxu0
  %v1327 = vadd.f32 %v1248, %v1326
  %v1328 = vpop.f32.mrb[0].mxu0
  %v1329 = vadd.f32 %v1249, %v1328
  %1330 = vmatprep.mubr.f32.mxu0 %v1159
  %1331 = vmatmul.mubr.f32.gmra.mrb[0].mxu0 %v1158
  %v1332 = vpop.f32.mrb[0].mxu0
  %v1333 = vadd.f32 %v1250, %v1332
  %v1334 = vpop.f32.mrb[0].mxu0
  %v1335 = vadd.f32 %v1251, %v1334
  %1336 = vmatprep.mubr.f32.mxu0 %v1161
  %1337 = vmatmul.mubr.f32.gmra.mrb[0].mxu0 %v1160
  %v1338 = vpop.f32.mrb[0].mxu0
  %v1339 = vadd.f32 %v1252, %v1338
  %v1340 = vpop.f32.mrb[0].mxu0
  %v1341 = vadd.f32 %v1253, %v1340
  %1342 = vdwg.mxu0
  %1344 = vset.pattern.permute.xlu0 0
  %1345 = vperm.xlu0 %1344, %v1130
  %v1346 = vpop.permute.xlu0 %1345
  %1349 = vset.pattern.permute.xlu0 0
  %1350 = vperm.xlu0 %1349, %v1131
  %v1351 = vpop.permute.xlu0 %1350
  %1354 = vset.pattern.permute.xlu0 0
  %1355 = vperm.xlu0 %1354, %v1132
  %v1356 = vpop.permute.xlu0 %1355
  %1359 = vset.pattern.permute.xlu0 0
  %1360 = vperm.xlu0 %1359, %v1133
  %v1361 = vpop.permute.xlu0 %1360
  %v1363 = vmul.f32 %v925, %v1346
  %v1364 = vmul.f32 %v926, %v1346
  %v1365 = vmul.f32 %v927, %v1351
  %v1366 = vmul.f32 %v928, %v1351
  %v1367 = vmul.f32 %v929, %v1356
  %v1368 = vmul.f32 %v930, %v1356
  %v1369 = vmul.f32 %v931, %v1361
  %v1370 = vmul.f32 %v932, %v1361
  %v1371 = vld [vmem:[%s7 + $0x400] sm:$0xff]
  %v1372 = vld [vmem:[%s7 + $0x408] sm:$0xff]
  %v1373 = vld [vmem:[%s7 + $0x410] sm:$0xff]
  %v1374 = vld [vmem:[%s7 + $0x418] sm:$0xff]
  %v1375 = vld [vmem:[%s7 + $0x420] sm:$0xff]
  %v1376 = vld [vmem:[%s7 + $0x428] sm:$0xff]
  %v1377 = vld [vmem:[%s7 + $0x430] sm:$0xff]
  %v1378 = vld [vmem:[%s7 + $0x438] sm:$0xff]
  %v1379 = vld [vmem:[%s7 + $0x440] sm:$0xff]
  %v1380 = vld [vmem:[%s7 + $0x448] sm:$0xff]
  %v1381 = vld [vmem:[%s7 + $0x450] sm:$0xff]
  %v1382 = vld [vmem:[%s7 + $0x458] sm:$0xff]
  %v1383 = vld [vmem:[%s7 + $0x460] sm:$0xff]
  %v1384 = vld [vmem:[%s7 + $0x468] sm:$0xff]
  %v1385 = vld [vmem:[%s7 + $0x470] sm:$0xff]
  %v1386 = vld [vmem:[%s7 + $0x478] sm:$0xff]
  %v1387 = vld [vmem:[%s7 + $0x480] sm:$0xff]
  %v1388 = vld [vmem:[%s7 + $0x488] sm:$0xff]
  %v1389 = vld [vmem:[%s7 + $0x490] sm:$0xff]
  %v1390 = vld [vmem:[%s7 + $0x498] sm:$0xff]
  %v1391 = vld [vmem:[%s7 + $0x4a0] sm:$0xff]
  %v1392 = vld [vmem:[%s7 + $0x4a8] sm:$0xff]
  %v1393 = vld [vmem:[%s7 + $0x4b0] sm:$0xff]
  %v1394 = vld [vmem:[%s7 + $0x4b8] sm:$0xff]
  %v1395 = vld [vmem:[%s7 + $0x4c0] sm:$0xff]
  %v1396 = vld [vmem:[%s7 + $0x4c8] sm:$0xff]
  %v1397 = vld [vmem:[%s7 + $0x4d0] sm:$0xff]
  %v1398 = vld [vmem:[%s7 + $0x4d8] sm:$0xff]
  %v1399 = vld [vmem:[%s7 + $0x4e0] sm:$0xff]
  %v1400 = vld [vmem:[%s7 + $0x4e8] sm:$0xff]
  %v1401 = vld [vmem:[%s7 + $0x4f0] sm:$0xff]
  %v1402 = vld [vmem:[%s7 + $0x4f8] sm:$0xff]
  %v1403 = vld [vmem:[%s7 + $0x500] sm:$0xff]
  %v1404 = vld [vmem:[%s7 + $0x508] sm:$0xff]
  %v1405 = vld [vmem:[%s7 + $0x510] sm:$0xff]
  %v1406 = vld [vmem:[%s7 + $0x518] sm:$0xff]
  %v1407 = vld [vmem:[%s7 + $0x520] sm:$0xff]
  %v1408 = vld [vmem:[%s7 + $0x528] sm:$0xff]
  %v1409 = vld [vmem:[%s7 + $0x530] sm:$0xff]
  %v1410 = vld [vmem:[%s7 + $0x538] sm:$0xff]
  %v1411 = vld [vmem:[%s7 + $0x540] sm:$0xff]
  %v1412 = vld [vmem:[%s7 + $0x548] sm:$0xff]
  %v1413 = vld [vmem:[%s7 + $0x550] sm:$0xff]
  %v1414 = vld [vmem:[%s7 + $0x558] sm:$0xff]
  %v1415 = vld [vmem:[%s7 + $0x560] sm:$0xff]
  %v1416 = vld [vmem:[%s7 + $0x568] sm:$0xff]
  %v1417 = vld [vmem:[%s7 + $0x570] sm:$0xff]
  %v1418 = vld [vmem:[%s7 + $0x578] sm:$0xff]
  %v1419 = vld [vmem:[%s7 + $0x580] sm:$0xff]
  %v1420 = vld [vmem:[%s7 + $0x588] sm:$0xff]
  %v1421 = vld [vmem:[%s7 + $0x590] sm:$0xff]
  %v1422 = vld [vmem:[%s7 + $0x598] sm:$0xff]
  %v1423 = vld [vmem:[%s7 + $0x5a0] sm:$0xff]
  %v1424 = vld [vmem:[%s7 + $0x5a8] sm:$0xff]
  %v1425 = vld [vmem:[%s7 + $0x5b0] sm:$0xff]
  %v1426 = vld [vmem:[%s7 + $0x5b8] sm:$0xff]
  %v1427 = vld [vmem:[%s7 + $0x5c0] sm:$0xff]
  %v1428 = vld [vmem:[%s7 + $0x5c8] sm:$0xff]
  %v1429 = vld [vmem:[%s7 + $0x5d0] sm:$0xff]
  %v1430 = vld [vmem:[%s7 + $0x5d8] sm:$0xff]
  %v1431 = vld [vmem:[%s7 + $0x5e0] sm:$0xff]
  %v1432 = vld [vmem:[%s7 + $0x5e8] sm:$0xff]
  %v1433 = vld [vmem:[%s7 + $0x5f0] sm:$0xff]
  %v1434 = vld [vmem:[%s7 + $0x5f8] sm:$0xff]
  %1435 = vmatprep.subr.mxu0 %v1372
  %1436 = vmatpush1.msra.mxu0 %v1371
  %1437 = vmatprep.subr.mxu0 %v1374
  %1438 = vmatpush1.msra.mxu0 %v1373
  %1439 = vmatprep.subr.mxu0 %v1376
  %1440 = vmatpush1.msra.mxu0 %v1375
  %1441 = vmatprep.subr.mxu0 %v1378
  %1442 = vmatpush1.msra.mxu0 %v1377
  %1443 = vmatprep.subr.mxu0 %v1380
  %1444 = vmatpush1.msra.mxu0 %v1379
  %1445 = vmatprep.subr.mxu0 %v1382
  %1446 = vmatpush1.msra.mxu0 %v1381
  %1447 = vmatprep.subr.mxu0 %v1384
  %1448 = vmatpush1.msra.mxu0 %v1383
  %1449 = vmatprep.subr.mxu0 %v1386
  %1450 = vmatpush1.msra.mxu0 %v1385
  %1451 = vmatprep.subr.mxu0 %v1388
  %1452 = vmatpush1.msra.mxu0 %v1387
  %1453 = vmatprep.subr.mxu0 %v1390
  %1454 = vmatpush1.msra.mxu0 %v1389
  %1455 = vmatprep.subr.mxu0 %v1392
  %1456 = vmatpush1.msra.mxu0 %v1391
  %1457 = vmatprep.subr.mxu0 %v1394
  %1458 = vmatpush1.msra.mxu0 %v1393
  %1459 = vmatprep.subr.mxu0 %v1396
  %1460 = vmatpush1.msra.mxu0 %v1395
  %1461 = vmatprep.subr.mxu0 %v1398
  %1462 = vmatpush1.msra.mxu0 %v1397
  %1463 = vmatprep.subr.mxu0 %v1400
  %1464 = vmatpush1.msra.mxu0 %v1399
  %1465 = vmatprep.subr.mxu0 %v1402
  %1466 = vmatpush1.msra.mxu0 %v1401
  %1467 = vmatprep.subr.mxu0 %v1404
  %1468 = vmatpush1.msra.mxu0 %v1403
  %1469 = vmatprep.subr.mxu0 %v1406
  %1470 = vmatpush1.msra.mxu0 %v1405
  %1471 = vmatprep.subr.mxu0 %v1408
  %1472 = vmatpush1.msra.mxu0 %v1407
  %1473 = vmatprep.subr.mxu0 %v1410
  %1474 = vmatpush1.msra.mxu0 %v1409
  %1475 = vmatprep.subr.mxu0 %v1412
  %1476 = vmatpush1.msra.mxu0 %v1411
  %1477 = vmatprep.subr.mxu0 %v1414
  %1478 = vmatpush1.msra.mxu0 %v1413
  %1479 = vmatprep.subr.mxu0 %v1416
  %1480 = vmatpush1.msra.mxu0 %v1415
  %1481 = vmatprep.subr.mxu0 %v1418
  %1482 = vmatpush1.msra.mxu0 %v1417
  %1483 = vmatprep.subr.mxu0 %v1420
  %1484 = vmatpush1.msra.mxu0 %v1419
  %1485 = vmatprep.subr.mxu0 %v1422
  %1486 = vmatpush1.msra.mxu0 %v1421
  %1487 = vmatprep.subr.mxu0 %v1424
  %1488 = vmatpush1.msra.mxu0 %v1423
  %1489 = vmatprep.subr.mxu0 %v1426
  %1490 = vmatpush1.msra.mxu0 %v1425
  %1491 = vmatprep.subr.mxu0 %v1428
  %1492 = vmatpush1.msra.mxu0 %v1427
  %1493 = vmatprep.subr.mxu0 %v1430
  %1494 = vmatpush1.msra.mxu0 %v1429
  %1495 = vmatprep.subr.mxu0 %v1432
  %1496 = vmatpush1.msra.mxu0 %v1431
  %1497 = vmatprep.subr.mxu0 %v1434
  %1498 = vmatpush1.msra.mxu0 %v1433
  %1499 = vmatprep.mubr.f32.mxu0 %v1364
  %1500 = vmatmul.mubr.f32.gmra.mrb[0].mxu0 %v1363
  %v1501 = vpop.f32.mrb[0].mxu0
  %v1502 = vadd.f32 0.0, %v1501
  %v1503 = vpop.f32.mrb[0].mxu0
  %v1504 = vadd.f32 0.0, %v1503
  %1505 = vmatprep.mubr.f32.mxu0 %v1366
  %1506 = vmatmul.mubr.f32.gmra.mrb[0].mxu0 %v1365
  %v1507 = vpop.f32.mrb[0].mxu0
  %v1508 = vadd.f32 0.0, %v1507
  %v1509 = vpop.f32.mrb[0].mxu0
  %v1510 = vadd.f32 0.0, %v1509
  %1511 = vmatprep.mubr.f32.mxu0 %v1368
  %1512 = vmatmul.mubr.f32.gmra.mrb[0].mxu0 %v1367
  %v1513 = vpop.f32.mrb[0].mxu0
  %v1514 = vadd.f32 0.0, %v1513
  %v1515 = vpop.f32.mrb[0].mxu0
  %v1516 = vadd.f32 0.0, %v1515
  %1517 = vmatprep.mubr.f32.mxu0 %v1370
  %1518 = vmatmul.mubr.f32.gmra.mrb[0].mxu0 %v1369
  %v1519 = vpop.f32.mrb[0].mxu0
  %v1520 = vadd.f32 0.0, %v1519
  %v1521 = vpop.f32.mrb[0].mxu0
  %v1522 = vadd.f32 0.0, %v1521
  %1523 = vdwg.mxu0
  %v1524 = vadd.f32 %v1321, %v1502
  %v1525 = vadd.f32 %v1323, %v1504
  %v1526 = vadd.f32 %v1327, %v1508
  %v1527 = vadd.f32 %v1329, %v1510
  %v1528 = vadd.f32 %v1333, %v1514
  %v1529 = vadd.f32 %v1335, %v1516
  %v1530 = vadd.f32 %v1339, %v1520
  %v1531 = vadd.f32 %v1341, %v1522
  %v1532 = vld [vmem:[%s9] sm:$0xff]
  %v1533 = vld [vmem:[%s9 + $0x8] sm:$0xff]
  %v1534 = vld [vmem:[%s9 + $0x10] sm:$0xff]
  %v1535 = vld [vmem:[%s9 + $0x18] sm:$0xff]
  %v1536 = vld [vmem:[%s9 + $0x20] sm:$0xff]
  %v1537 = vld [vmem:[%s9 + $0x28] sm:$0xff]
  %v1538 = vld [vmem:[%s9 + $0x30] sm:$0xff]
  %v1539 = vld [vmem:[%s9 + $0x38] sm:$0xff]
  %v1540 = vld [vmem:[%s9 + $0x40] sm:$0xff]
  %v1541 = vld [vmem:[%s9 + $0x48] sm:$0xff]
  %v1542 = vld [vmem:[%s9 + $0x50] sm:$0xff]
  %v1543 = vld [vmem:[%s9 + $0x58] sm:$0xff]
  %v1544 = vld [vmem:[%s9 + $0x60] sm:$0xff]
  %v1545 = vld [vmem:[%s9 + $0x68] sm:$0xff]
  %v1546 = vld [vmem:[%s9 + $0x70] sm:$0xff]
  %v1547 = vld [vmem:[%s9 + $0x78] sm:$0xff]
  %v1548 = vld [vmem:[%s9 + $0x80] sm:$0xff]
  %v1549 = vld [vmem:[%s9 + $0x88] sm:$0xff]
  %v1550 = vld [vmem:[%s9 + $0x90] sm:$0xff]
  %v1551 = vld [vmem:[%s9 + $0x98] sm:$0xff]
  %v1552 = vld [vmem:[%s9 + $0xa0] sm:$0xff]
  %v1553 = vld [vmem:[%s9 + $0xa8] sm:$0xff]
  %v1554 = vld [vmem:[%s9 + $0xb0] sm:$0xff]
  %v1555 = vld [vmem:[%s9 + $0xb8] sm:$0xff]
  %v1556 = vld [vmem:[%s9 + $0xc0] sm:$0xff]
  %v1557 = vld [vmem:[%s9 + $0xc8] sm:$0xff]
  %v1558 = vld [vmem:[%s9 + $0xd0] sm:$0xff]
  %v1559 = vld [vmem:[%s9 + $0xd8] sm:$0xff]
  %v1560 = vld [vmem:[%s9 + $0xe0] sm:$0xff]
  %v1561 = vld [vmem:[%s9 + $0xe8] sm:$0xff]
  %v1562 = vld [vmem:[%s9 + $0xf0] sm:$0xff]
  %v1563 = vld [vmem:[%s9 + $0xf8] sm:$0xff]
  %v1564 = vld [vmem:[%s9 + $0x100] sm:$0xff]
  %v1565 = vld [vmem:[%s9 + $0x108] sm:$0xff]
  %v1566 = vld [vmem:[%s9 + $0x110] sm:$0xff]
  %v1567 = vld [vmem:[%s9 + $0x118] sm:$0xff]
  %v1568 = vld [vmem:[%s9 + $0x120] sm:$0xff]
  %v1569 = vld [vmem:[%s9 + $0x128] sm:$0xff]
  %v1570 = vld [vmem:[%s9 + $0x130] sm:$0xff]
  %v1571 = vld [vmem:[%s9 + $0x138] sm:$0xff]
  %v1572 = vld [vmem:[%s9 + $0x140] sm:$0xff]
  %v1573 = vld [vmem:[%s9 + $0x148] sm:$0xff]
  %v1574 = vld [vmem:[%s9 + $0x150] sm:$0xff]
  %v1575 = vld [vmem:[%s9 + $0x158] sm:$0xff]
  %v1576 = vld [vmem:[%s9 + $0x160] sm:$0xff]
  %v1577 = vld [vmem:[%s9 + $0x168] sm:$0xff]
  %v1578 = vld [vmem:[%s9 + $0x170] sm:$0xff]
  %v1579 = vld [vmem:[%s9 + $0x178] sm:$0xff]
  %v1580 = vld [vmem:[%s9 + $0x180] sm:$0xff]
  %v1581 = vld [vmem:[%s9 + $0x188] sm:$0xff]
  %v1582 = vld [vmem:[%s9 + $0x190] sm:$0xff]
  %v1583 = vld [vmem:[%s9 + $0x198] sm:$0xff]
  %v1584 = vld [vmem:[%s9 + $0x1a0] sm:$0xff]
  %v1585 = vld [vmem:[%s9 + $0x1a8] sm:$0xff]
  %v1586 = vld [vmem:[%s9 + $0x1b0] sm:$0xff]
  %v1587 = vld [vmem:[%s9 + $0x1b8] sm:$0xff]
  %v1588 = vld [vmem:[%s9 + $0x1c0] sm:$0xff]
  %v1589 = vld [vmem:[%s9 + $0x1c8] sm:$0xff]
  %v1590 = vld [vmem:[%s9 + $0x1d0] sm:$0xff]
  %v1591 = vld [vmem:[%s9 + $0x1d8] sm:$0xff]
  %v1592 = vld [vmem:[%s9 + $0x1e0] sm:$0xff]
  %v1593 = vld [vmem:[%s9 + $0x1e8] sm:$0xff]
  %v1594 = vld [vmem:[%s9 + $0x1f0] sm:$0xff]
  %v1595 = vld [vmem:[%s9 + $0x1f8] sm:$0xff]
  %1596 = vmatprep.subr.mxu0 %v1533
  %1597 = vmatpush1.msra.mxu0 %v1532
  %1598 = vmatprep.subr.mxu0 %v1535
  %1599 = vmatpush1.msra.mxu0 %v1534
  %1600 = vmatprep.subr.mxu0 %v1537
  %1601 = vmatpush1.msra.mxu0 %v1536
  %1602 = vmatprep.subr.mxu0 %v1539
  %1603 = vmatpush1.msra.mxu0 %v1538
  %1604 = vmatprep.subr.mxu0 %v1541
  %1605 = vmatpush1.msra.mxu0 %v1540
  %1606 = vmatprep.subr.mxu0 %v1543
  %1607 = vmatpush1.msra.mxu0 %v1542
  %1608 = vmatprep.subr.mxu0 %v1545
  %1609 = vmatpush1.msra.mxu0 %v1544
  %1610 = vmatprep.subr.mxu0 %v1547
  %1611 = vmatpush1.msra.mxu0 %v1546
  %1612 = vmatprep.subr.mxu0 %v1549
  %1613 = vmatpush1.msra.mxu0 %v1548
  %1614 = vmatprep.subr.mxu0 %v1551
  %1615 = vmatpush1.msra.mxu0 %v1550
  %1616 = vmatprep.subr.mxu0 %v1553
  %1617 = vmatpush1.msra.mxu0 %v1552
  %1618 = vmatprep.subr.mxu0 %v1555
  %1619 = vmatpush1.msra.mxu0 %v1554
  %1620 = vmatprep.subr.mxu0 %v1557
  %1621 = vmatpush1.msra.mxu0 %v1556
  %1622 = vmatprep.subr.mxu0 %v1559
  %1623 = vmatpush1.msra.mxu0 %v1558
  %1624 = vmatprep.subr.mxu0 %v1561
  %1625 = vmatpush1.msra.mxu0 %v1560
  %1626 = vmatprep.subr.mxu0 %v1563
  %1627 = vmatpush1.msra.mxu0 %v1562
  %1628 = vmatprep.subr.mxu0 %v1565
  %1629 = vmatpush1.msra.mxu0 %v1564
  %1630 = vmatprep.subr.mxu0 %v1567
  %1631 = vmatpush1.msra.mxu0 %v1566
  %1632 = vmatprep.subr.mxu0 %v1569
  %1633 = vmatpush1.msra.mxu0 %v1568
  %1634 = vmatprep.subr.mxu0 %v1571
  %1635 = vmatpush1.msra.mxu0 %v1570
  %1636 = vmatprep.subr.mxu0 %v1573
  %1637 = vmatpush1.msra.mxu0 %v1572
  %1638 = vmatprep.subr.mxu0 %v1575
  %1639 = vmatpush1.msra.mxu0 %v1574
  %1640 = vmatprep.subr.mxu0 %v1577
  %1641 = vmatpush1.msra.mxu0 %v1576
  %1642 = vmatprep.subr.mxu0 %v1579
  %1643 = vmatpush1.msra.mxu0 %v1578
  %1644 = vmatprep.subr.mxu0 %v1581
  %1645 = vmatpush1.msra.mxu0 %v1580
  %1646 = vmatprep.subr.mxu0 %v1583
  %1647 = vmatpush1.msra.mxu0 %v1582
  %1648 = vmatprep.subr.mxu0 %v1585
  %1649 = vmatpush1.msra.mxu0 %v1584
  %1650 = vmatprep.subr.mxu0 %v1587
  %1651 = vmatpush1.msra.mxu0 %v1586
  %1652 = vmatprep.subr.mxu0 %v1589
  %1653 = vmatpush1.msra.mxu0 %v1588
  %1654 = vmatprep.subr.mxu0 %v1591
  %1655 = vmatpush1.msra.mxu0 %v1590
  %1656 = vmatprep.subr.mxu0 %v1593
  %1657 = vmatpush1.msra.mxu0 %v1592
  %1658 = vmatprep.subr.mxu0 %v1595
  %1659 = vmatpush1.msra.mxu0 %v1594
  %1660 = vmatprep.mubr.f32.mxu0 %v926
  %1661 = vmatmul.mubr.f32.gmra.mrb[0].mxu0 %v925
  %v1662 = vpop.f32.mrb[0].mxu0
  %v1663 = vadd.f32 0.0, %v1662
  %v1664 = vpop.f32.mrb[0].mxu0
  %v1665 = vadd.f32 0.0, %v1664
  %1666 = vmatprep.mubr.f32.mxu0 %v928
  %1667 = vmatmul.mubr.f32.gmra.mrb[0].mxu0 %v927
  %v1668 = vpop.f32.mrb[0].mxu0
  %v1669 = vadd.f32 0.0, %v1668
  %v1670 = vpop.f32.mrb[0].mxu0
  %v1671 = vadd.f32 0.0, %v1670
  %1672 = vmatprep.mubr.f32.mxu0 %v930
  %1673 = vmatmul.mubr.f32.gmra.mrb[0].mxu0 %v929
  %v1674 = vpop.f32.mrb[0].mxu0
  %v1675 = vadd.f32 0.0, %v1674
  %v1676 = vpop.f32.mrb[0].mxu0
  %v1677 = vadd.f32 0.0, %v1676
  %1678 = vmatprep.mubr.f32.mxu0 %v932
  %1679 = vmatmul.mubr.f32.gmra.mrb[0].mxu0 %v931
  %v1680 = vpop.f32.mrb[0].mxu0
  %v1681 = vadd.f32 0.0, %v1680
  %v1682 = vpop.f32.mrb[0].mxu0
  %v1683 = vadd.f32 0.0, %v1682
  %1684 = vdwg.mxu0
  %1685 = vset.pattern.permute.xlu0 3
  %1686 = vperm.xlu0 %1685, %v809
  %v1687 = vpop.permute.xlu0 %1686
  %1689 = vset.pattern.permute.xlu0 3
  %1690 = vperm.xlu0 %1689, %v810
  %v1691 = vpop.permute.xlu0 %1690
  %1693 = vset.pattern.permute.xlu0 3
  %1694 = vperm.xlu0 %1693, %v811
  %v1695 = vpop.permute.xlu0 %1694
  %1697 = vset.pattern.permute.xlu0 3
  %1698 = vperm.xlu0 %1697, %v812
  %v1699 = vpop.permute.xlu0 %1698
  %v1701 = vmul.f32 %v1524, %v1687
  %v1702 = vmul.f32 %v1525, %v1687
  %v1703 = vmul.f32 %v1526, %v1691
  %v1704 = vmul.f32 %v1527, %v1691
  %v1705 = vmul.f32 %v1528, %v1695
  %v1706 = vmul.f32 %v1529, %v1695
  %v1707 = vmul.f32 %v1530, %v1699
  %v1708 = vmul.f32 %v1531, %v1699
  %1709 = vset.pattern.permute.xlu0 3
  %1710 = vperm.xlu0 %1709, %v43
  %v1711 = vpop.permute.xlu0 %1710
  %1713 = vset.pattern.permute.xlu0 3
  %1714 = vperm.xlu0 %1713, %v44
  %v1715 = vpop.permute.xlu0 %1714
  %1717 = vset.pattern.permute.xlu0 3
  %1718 = vperm.xlu0 %1717, %v45
  %v1719 = vpop.permute.xlu0 %1718
  %1721 = vset.pattern.permute.xlu0 3
  %1722 = vperm.xlu0 %1721, %v46
  %v1723 = vpop.permute.xlu0 %1722
  %v1725 = vmul.f32 %v1711, %v1663
  %v1726 = vmul.f32 %v1711, %v1665
  %v1727 = vmul.f32 %v1715, %v1669
  %v1728 = vmul.f32 %v1715, %v1671
  %v1729 = vmul.f32 %v1719, %v1675
  %v1730 = vmul.f32 %v1719, %v1677
  %v1731 = vmul.f32 %v1723, %v1681
  %v1732 = vmul.f32 %v1723, %v1683
  %v1733 = vsub.f32 %v1701, %v1725
  %v1734 = vsub.f32 %v1702, %v1726
  %v1735 = vsub.f32 %v1703, %v1727
  %v1736 = vsub.f32 %v1704, %v1728
  %v1737 = vsub.f32 %v1705, %v1729
  %v1738 = vsub.f32 %v1706, %v1730
  %v1739 = vsub.f32 %v1707, %v1731
  %v1740 = vsub.f32 %v1708, %v1732
  %1741 = vset.pattern.permute.xlu0 4
  %1742 = vperm.xlu0 %1741, %v43
  %v1743 = vpop.permute.xlu0 %1742
  %1745 = vset.pattern.permute.xlu0 4
  %1746 = vperm.xlu0 %1745, %v44
  %v1747 = vpop.permute.xlu0 %1746
  %1749 = vset.pattern.permute.xlu0 4
  %1750 = vperm.xlu0 %1749, %v45
  %v1751 = vpop.permute.xlu0 %1750
  %1753 = vset.pattern.permute.xlu0 4
  %1754 = vperm.xlu0 %1753, %v46
  %v1755 = vpop.permute.xlu0 %1754
  %v1757 = vmul.f32 %v1733, %v1743
  %v1758 = vmul.f32 %v1734, %v1743
  %v1759 = vmul.f32 %v1735, %v1747
  %v1760 = vmul.f32 %v1736, %v1747
  %v1761 = vmul.f32 %v1737, %v1751
  %v1762 = vmul.f32 %v1738, %v1751
  %v1763 = vmul.f32 %v1739, %v1755
  %v1764 = vmul.f32 %v1740, %v1755
  %1765 = vset.pattern.permute.xlu0 5
  %1766 = vperm.xlu0 %1765, %v809
  %v1767 = vpop.permute.xlu0 %1766
  %1769 = vset.pattern.permute.xlu0 5
  %1770 = vperm.xlu0 %1769, %v810
  %v1771 = vpop.permute.xlu0 %1770
  %1773 = vset.pattern.permute.xlu0 5
  %1774 = vperm.xlu0 %1773, %v811
  %v1775 = vpop.permute.xlu0 %1774
  %1777 = vset.pattern.permute.xlu0 5
  %1778 = vperm.xlu0 %1777, %v812
  %v1779 = vpop.permute.xlu0 %1778
  %v1781 = vmul.f32 %v925, %v1767
  %v1782 = vmul.f32 %v926, %v1767
  %v1783 = vmul.f32 %v927, %v1771
  %v1784 = vmul.f32 %v928, %v1771
  %v1785 = vmul.f32 %v929, %v1775
  %v1786 = vmul.f32 %v930, %v1775
  %v1787 = vmul.f32 %v931, %v1779
  %v1788 = vmul.f32 %v932, %v1779
  %v1789 = vadd.f32 %v1757, %v1781
  %v1790 = vadd.f32 %v1758, %v1782
  %v1791 = vadd.f32 %v1759, %v1783
  %v1792 = vadd.f32 %v1760, %v1784
  %v1793 = vadd.f32 %v1761, %v1785
  %v1794 = vadd.f32 %v1762, %v1786
  %v1795 = vadd.f32 %v1763, %v1787
  %v1796 = vadd.f32 %v1764, %v1788
  %v1797 = vld [vmem:[%s4] sm:$0xff]
  %v1798 = vld [vmem:[%s4 + $0x8] sm:$0xff]
  %v1799 = vld [vmem:[%s4 + $0x10] sm:$0xff]
  %v1800 = vld [vmem:[%s4 + $0x18] sm:$0xff]
  %v1801 = vld [vmem:[%s4 + $0x20] sm:$0xff]
  %v1802 = vld [vmem:[%s4 + $0x28] sm:$0xff]
  %v1803 = vld [vmem:[%s4 + $0x30] sm:$0xff]
  %v1804 = vld [vmem:[%s4 + $0x38] sm:$0xff]
  %v1805 = vld [vmem:[%s4 + $0x40] sm:$0xff]
  %v1806 = vld [vmem:[%s4 + $0x48] sm:$0xff]
  %v1807 = vld [vmem:[%s4 + $0x50] sm:$0xff]
  %v1808 = vld [vmem:[%s4 + $0x58] sm:$0xff]
  %v1809 = vld [vmem:[%s4 + $0x60] sm:$0xff]
  %v1810 = vld [vmem:[%s4 + $0x68] sm:$0xff]
  %v1811 = vld [vmem:[%s4 + $0x70] sm:$0xff]
  %v1812 = vld [vmem:[%s4 + $0x78] sm:$0xff]
  %v1813 = vld [vmem:[%s4 + $0x80] sm:$0xff]
  %v1814 = vld [vmem:[%s4 + $0x88] sm:$0xff]
  %v1815 = vld [vmem:[%s4 + $0x90] sm:$0xff]
  %v1816 = vld [vmem:[%s4 + $0x98] sm:$0xff]
  %v1817 = vld [vmem:[%s4 + $0xa0] sm:$0xff]
  %v1818 = vld [vmem:[%s4 + $0xa8] sm:$0xff]
  %v1819 = vld [vmem:[%s4 + $0xb0] sm:$0xff]
  %v1820 = vld [vmem:[%s4 + $0xb8] sm:$0xff]
  %v1821 = vld [vmem:[%s4 + $0xc0] sm:$0xff]
  %v1822 = vld [vmem:[%s4 + $0xc8] sm:$0xff]
  %v1823 = vld [vmem:[%s4 + $0xd0] sm:$0xff]
  %v1824 = vld [vmem:[%s4 + $0xd8] sm:$0xff]
  %v1825 = vld [vmem:[%s4 + $0xe0] sm:$0xff]
  %v1826 = vld [vmem:[%s4 + $0xe8] sm:$0xff]
  %v1827 = vld [vmem:[%s4 + $0xf0] sm:$0xff]
  %v1828 = vld [vmem:[%s4 + $0xf8] sm:$0xff]
  %v1829 = vld [vmem:[%s4 + $0x100] sm:$0xff]
  %v1830 = vld [vmem:[%s4 + $0x108] sm:$0xff]
  %v1831 = vld [vmem:[%s4 + $0x110] sm:$0xff]
  %v1832 = vld [vmem:[%s4 + $0x118] sm:$0xff]
  %v1833 = vld [vmem:[%s3] sm:$0xff]
  %v1834 = vld [vmem:[%s3 + $0x8] sm:$0xff]
  %v1835 = vld [vmem:[%s3 + $0x10] sm:$0xff]
  %v1836 = vld [vmem:[%s3 + $0x18] sm:$0xff]
  %v1837 = vld [vmem:[%s3 + $0x20] sm:$0xff]
  %v1838 = vld [vmem:[%s3 + $0x28] sm:$0xff]
  %v1839 = vld [vmem:[%s3 + $0x30] sm:$0xff]
  %v1840 = vld [vmem:[%s3 + $0x38] sm:$0xff]
  %v1841 = vld [vmem:[%s3 + $0x40] sm:$0xff]
  %v1842 = vld [vmem:[%s3 + $0x48] sm:$0xff]
  %v1843 = vld [vmem:[%s3 + $0x50] sm:$0xff]
  %v1844 = vld [vmem:[%s3 + $0x58] sm:$0xff]
  %v1845 = vld [vmem:[%s3 + $0x60] sm:$0xff]
  %v1846 = vld [vmem:[%s3 + $0x68] sm:$0xff]
  %v1847 = vld [vmem:[%s3 + $0x70] sm:$0xff]
  %v1848 = vld [vmem:[%s3 + $0x78] sm:$0xff]
  %v1849 = vld [vmem:[%s3 + $0x80] sm:$0xff]
  %v1850 = vld [vmem:[%s3 + $0x88] sm:$0xff]
  %v1851 = vld [vmem:[%s3 + $0x90] sm:$0xff]
  %v1852 = vld [vmem:[%s3 + $0x98] sm:$0xff]
  %v1853 = vld [vmem:[%s3 + $0xa0] sm:$0xff]
  %v1854 = vld [vmem:[%s3 + $0xa8] sm:$0xff]
  %v1855 = vld [vmem:[%s3 + $0xb0] sm:$0xff]
  %v1856 = vld [vmem:[%s3 + $0xb8] sm:$0xff]
  %v1857 = vld [vmem:[%s3 + $0xc0] sm:$0xff]
  %v1858 = vld [vmem:[%s3 + $0xc8] sm:$0xff]
  %v1859 = vld [vmem:[%s3 + $0xd0] sm:$0xff]
  %v1860 = vld [vmem:[%s3 + $0xd8] sm:$0xff]
  %v1861 = vld [vmem:[%s3 + $0xe0] sm:$0xff]
  %v1862 = vld [vmem:[%s3 + $0xe8] sm:$0xff]
  %v1863 = vld [vmem:[%s3 + $0xf0] sm:$0xff]
  %v1864 = vld [vmem:[%s3 + $0xf8] sm:$0xff]
  %v1865 = vld [vmem:[%s3 + $0x100] sm:$0xff]
  %v1866 = vld [vmem:[%s3 + $0x108] sm:$0xff]
  %v1867 = vld [vmem:[%s3 + $0x110] sm:$0xff]
  %v1868 = vld [vmem:[%s3 + $0x118] sm:$0xff]
  %v1870 = vsel %vm382, %v1833, 0
  %v1873 = vsel %vm382, %v1834, 0
  %v1876 = vsel %vm382, %v1835, 0
  %v1879 = vsel %vm382, %v1836, 0
  %v1882 = vsel %vm382, %v1837, 0
  %v1885 = vsel %vm382, %v1838, 0
  %v1888 = vsel %vm382, %v1839, 0
  %v1891 = vsel %vm382, %v1840, 0
  %v1894 = vsel %vm382, %v1841, 0
  %v1897 = vsel %vm382, %v1842, 0
  %v1900 = vsel %vm382, %v1843, 0
  %v1903 = vsel %vm382, %v1844, 0
  %v1906 = vsel %vm382, %v1845, 0
  %v1909 = vsel %vm382, %v1846, 0
  %v1912 = vsel %vm382, %v1847, 0
  %v1915 = vsel %vm382, %v1848, 0
  %v1918 = vsel %vm382, %v1849, 0
  %v1921 = vsel %vm382, %v1850, 0
  %v1924 = vsel %vm382, %v1851, 0
  %v1927 = vsel %vm382, %v1852, 0
  %v1930 = vsel %vm382, %v1853, 0
  %v1933 = vsel %vm382, %v1854, 0
  %v1936 = vsel %vm382, %v1855, 0
  %v1939 = vsel %vm382, %v1856, 0
  %v1942 = vsel %vm382, %v1857, 0
  %v1945 = vsel %vm382, %v1858, 0
  %v1948 = vsel %vm382, %v1859, 0
  %v1951 = vsel %vm382, %v1860, 0
  %v1954 = vsel %vm382, %v1861, 0
  %v1957 = vsel %vm382, %v1862, 0
  %v1960 = vsel %vm382, %v1863, 0
  %v1963 = vsel %vm382, %v1864, 0
  %v1966 = vsel %vm382, %v1865, 0
  %v1969 = vsel %vm382, %v1866, 0
  %v1972 = vsel %vm382, %v1867, 0
  %v1975 = vsel %vm382, %v1868, 0
  %1977 = vmatprep.subr.mxu0 0.0
  %1978 = vmatpush1.msra.mxu0 %v60
  %1979 = vmatprep.subr.mxu0 0.0
  %1980 = vmatpush1.msra.mxu0 %v61
  %1981 = vmatprep.subr.mxu0 0.0
  %1982 = vmatpush1.msra.mxu0 %v62
  %1983 = vmatprep.subr.mxu0 0.0
  %1984 = vmatpush1.msra.mxu0 %v63
  %1985 = vmatprep.subr.mxu0 0.0
  %1986 = vmatpush1.msra.mxu0 0.0
  %1987 = vmatprep.subr.mxu0 0.0
  %1988 = vmatpush1.msra.mxu0 0.0
  %1989 = vmatprep.subr.mxu0 0.0
  %1990 = vmatpush1.msra.mxu0 0.0
  %1991 = vmatprep.subr.mxu0 0.0
  %1992 = vmatpush1.msra.mxu0 0.0
  %1993 = vmatprep.subr.mxu0 0.0
  %1994 = vmatpush1.msra.mxu0 0.0
  %1995 = vmatprep.subr.mxu0 0.0
  %1996 = vmatpush1.msra.mxu0 0.0
  %1997 = vmatprep.subr.mxu0 0.0
  %1998 = vmatpush1.msra.mxu0 0.0
  %1999 = vmatprep.subr.mxu0 0.0
  %2000 = vmatpush1.msra.mxu0 0.0
  %2001 = vmatprep.subr.mxu0 0.0
  %2002 = vmatpush1.msra.mxu0 0.0
  %2003 = vmatprep.subr.mxu0 0.0
  %2004 = vmatpush1.msra.mxu0 0.0
  %2005 = vmatprep.subr.mxu0 0.0
  %2006 = vmatpush1.msra.mxu0 0.0
  %2007 = vmatprep.subr.mxu0 0.0
  %2008 = vmatpush1.msra.mxu0 0.0
  %2009 = vmatprep.subr.mxu0 0.0
  %2010 = vmatpush1.msra.mxu0 0.0
  %2011 = vmatprep.subr.mxu0 0.0
  %2012 = vmatpush1.msra.mxu0 0.0
  %2013 = vmatprep.subr.mxu0 0.0
  %2014 = vmatpush1.msra.mxu0 0.0
  %2015 = vmatprep.subr.mxu0 0.0
  %2016 = vmatpush1.msra.mxu0 0.0
  %2017 = vmatprep.subr.mxu0 0.0
  %2018 = vmatpush1.msra.mxu0 0.0
  %2019 = vmatprep.subr.mxu0 0.0
  %2020 = vmatpush1.msra.mxu0 0.0
  %2021 = vmatprep.subr.mxu0 0.0
  %2022 = vmatpush1.msra.mxu0 0.0
  %2023 = vmatprep.subr.mxu0 0.0
  %2024 = vmatpush1.msra.mxu0 0.0
  %2025 = vmatprep.subr.mxu0 0.0
  %2026 = vmatpush1.msra.mxu0 0.0
  %2027 = vmatprep.subr.mxu0 0.0
  %2028 = vmatpush1.msra.mxu0 0.0
  %2029 = vmatprep.subr.mxu0 0.0
  %2030 = vmatpush1.msra.mxu0 0.0
  %2031 = vmatprep.subr.mxu0 0.0
  %2032 = vmatpush1.msra.mxu0 0.0
  %2033 = vmatprep.subr.mxu0 0.0
  %2034 = vmatpush1.msra.mxu0 0.0
  %2035 = vmatprep.subr.mxu0 0.0
  %2036 = vmatpush1.msra.mxu0 0.0
  %2037 = vmatprep.subr.mxu0 0.0
  %2038 = vmatpush1.msra.mxu0 0.0
  %2039 = vmatprep.subr.mxu0 0.0
  %2040 = vmatpush1.msra.mxu0 0.0
  %2041 = vmatprep.mubr.f32.mxu0 0.0
  %2042 = vmatmul.mubr.f32.gmra.mrb[0].mxu0 %v1870
  %v2043 = vpop.f32.mrb[0].mxu0
  %v2044 = vadd.f32 0.0, %v2043
  %v2045 = vpop.f32.mrb[0].mxu0
  %2046 = vmatprep.mubr.f32.mxu0 0.0
  %2047 = vmatmul.mubr.f32.gmra.mrb[0].mxu0 %v1873
  %v2048 = vpop.f32.mrb[0].mxu0
  %v2049 = vadd.f32 0.0, %v2048
  %v2050 = vpop.f32.mrb[0].mxu0
  %2051 = vmatprep.mubr.f32.mxu0 0.0
  %2052 = vmatmul.mubr.f32.gmra.mrb[0].mxu0 %v1876
  %v2053 = vpop.f32.mrb[0].mxu0
  %v2054 = vadd.f32 0.0, %v2053
  %v2055 = vpop.f32.mrb[0].mxu0
  %2056 = vmatprep.mubr.f32.mxu0 0.0
  %2057 = vmatmul.mubr.f32.gmra.mrb[0].mxu0 %v1879
  %v2058 = vpop.f32.mrb[0].mxu0
  %v2059 = vadd.f32 0.0, %v2058
  %v2060 = vpop.f32.mrb[0].mxu0
  %2061 = vmatprep.mubr.f32.mxu0 0.0
  %2062 = vmatmul.mubr.f32.gmra.mrb[0].mxu0 %v1882
  %v2063 = vpop.f32.mrb[0].mxu0
  %v2064 = vadd.f32 0.0, %v2063
  %v2065 = vpop.f32.mrb[0].mxu0
  %2066 = vmatprep.mubr.f32.mxu0 0.0
  %2067 = vmatmul.mubr.f32.gmra.mrb[0].mxu0 %v1885
  %v2068 = vpop.f32.mrb[0].mxu0
  %v2069 = vadd.f32 0.0, %v2068
  %v2070 = vpop.f32.mrb[0].mxu0
  %2071 = vmatprep.mubr.f32.mxu0 0.0
  %2072 = vmatmul.mubr.f32.gmra.mrb[0].mxu0 %v1888
  %v2073 = vpop.f32.mrb[0].mxu0
  %v2074 = vadd.f32 0.0, %v2073
  %v2075 = vpop.f32.mrb[0].mxu0
  %2076 = vmatprep.mubr.f32.mxu0 0.0
  %2077 = vmatmul.mubr.f32.gmra.mrb[0].mxu0 %v1891
  %v2078 = vpop.f32.mrb[0].mxu0
  %v2079 = vadd.f32 0.0, %v2078
  %v2080 = vpop.f32.mrb[0].mxu0
  %2081 = vmatprep.mubr.f32.mxu0 0.0
  %2082 = vmatmul.mubr.f32.gmra.mrb[0].mxu0 %v1894
  %v2083 = vpop.f32.mrb[0].mxu0
  %v2084 = vadd.f32 0.0, %v2083
  %v2085 = vpop.f32.mrb[0].mxu0
  %2086 = vmatprep.mubr.f32.mxu0 0.0
  %2087 = vmatmul.mubr.f32.gmra.mrb[0].mxu0 %v1897
  %v2088 = vpop.f32.mrb[0].mxu0
  %v2089 = vadd.f32 0.0, %v2088
  %v2090 = vpop.f32.mrb[0].mxu0
  %2091 = vmatprep.mubr.f32.mxu0 0.0
  %2092 = vmatmul.mubr.f32.gmra.mrb[0].mxu0 %v1900
  %v2093 = vpop.f32.mrb[0].mxu0
  %v2094 = vadd.f32 0.0, %v2093
  %v2095 = vpop.f32.mrb[0].mxu0
  %2096 = vmatprep.mubr.f32.mxu0 0.0
  %2097 = vmatmul.mubr.f32.gmra.mrb[0].mxu0 %v1903
  %v2098 = vpop.f32.mrb[0].mxu0
  %v2099 = vadd.f32 0.0, %v2098
  %v2100 = vpop.f32.mrb[0].mxu0
  %2101 = vmatprep.mubr.f32.mxu0 0.0
  %2102 = vmatmul.mubr.f32.gmra.mrb[0].mxu0 %v1906
  %v2103 = vpop.f32.mrb[0].mxu0
  %v2104 = vadd.f32 0.0, %v2103
  %v2105 = vpop.f32.mrb[0].mxu0
  %2106 = vmatprep.mubr.f32.mxu0 0.0
  %2107 = vmatmul.mubr.f32.gmra.mrb[0].mxu0 %v1909
  %v2108 = vpop.f32.mrb[0].mxu0
  %v2109 = vadd.f32 0.0, %v2108
  %v2110 = vpop.f32.mrb[0].mxu0
  %2111 = vmatprep.mubr.f32.mxu0 0.0
  %2112 = vmatmul.mubr.f32.gmra.mrb[0].mxu0 %v1912
  %v2113 = vpop.f32.mrb[0].mxu0
  %v2114 = vadd.f32 0.0, %v2113
  %v2115 = vpop.f32.mrb[0].mxu0
  %2116 = vmatprep.mubr.f32.mxu0 0.0
  %2117 = vmatmul.mubr.f32.gmra.mrb[0].mxu0 %v1915
  %v2118 = vpop.f32.mrb[0].mxu0
  %v2119 = vadd.f32 0.0, %v2118
  %v2120 = vpop.f32.mrb[0].mxu0
  %2121 = vmatprep.mubr.f32.mxu0 0.0
  %2122 = vmatmul.mubr.f32.gmra.mrb[0].mxu0 %v1918
  %v2123 = vpop.f32.mrb[0].mxu0
  %v2124 = vadd.f32 0.0, %v2123
  %v2125 = vpop.f32.mrb[0].mxu0
  %2126 = vmatprep.mubr.f32.mxu0 0.0
  %2127 = vmatmul.mubr.f32.gmra.mrb[0].mxu0 %v1921
  %v2128 = vpop.f32.mrb[0].mxu0
  %v2129 = vadd.f32 0.0, %v2128
  %v2130 = vpop.f32.mrb[0].mxu0
  %2131 = vmatprep.mubr.f32.mxu0 0.0
  %2132 = vmatmul.mubr.f32.gmra.mrb[0].mxu0 %v1924
  %v2133 = vpop.f32.mrb[0].mxu0
  %v2134 = vadd.f32 0.0, %v2133
  %v2135 = vpop.f32.mrb[0].mxu0
  %2136 = vmatprep.mubr.f32.mxu0 0.0
  %2137 = vmatmul.mubr.f32.gmra.mrb[0].mxu0 %v1927
  %v2138 = vpop.f32.mrb[0].mxu0
  %v2139 = vadd.f32 0.0, %v2138
  %v2140 = vpop.f32.mrb[0].mxu0
  %2141 = vmatprep.mubr.f32.mxu0 0.0
  %2142 = vmatmul.mubr.f32.gmra.mrb[0].mxu0 %v1930
  %v2143 = vpop.f32.mrb[0].mxu0
  %v2144 = vadd.f32 0.0, %v2143
  %v2145 = vpop.f32.mrb[0].mxu0
  %2146 = vmatprep.mubr.f32.mxu0 0.0
  %2147 = vmatmul.mubr.f32.gmra.mrb[0].mxu0 %v1933
  %v2148 = vpop.f32.mrb[0].mxu0
  %v2149 = vadd.f32 0.0, %v2148
  %v2150 = vpop.f32.mrb[0].mxu0
  %2151 = vmatprep.mubr.f32.mxu0 0.0
  %2152 = vmatmul.mubr.f32.gmra.mrb[0].mxu0 %v1936
  %v2153 = vpop.f32.mrb[0].mxu0
  %v2154 = vadd.f32 0.0, %v2153
  %v2155 = vpop.f32.mrb[0].mxu0
  %2156 = vmatprep.mubr.f32.mxu0 0.0
  %2157 = vmatmul.mubr.f32.gmra.mrb[0].mxu0 %v1939
  %v2158 = vpop.f32.mrb[0].mxu0
  %v2159 = vadd.f32 0.0, %v2158
  %v2160 = vpop.f32.mrb[0].mxu0
  %2161 = vmatprep.mubr.f32.mxu0 0.0
  %2162 = vmatmul.mubr.f32.gmra.mrb[0].mxu0 %v1942
  %v2163 = vpop.f32.mrb[0].mxu0
  %v2164 = vadd.f32 0.0, %v2163
  %v2165 = vpop.f32.mrb[0].mxu0
  %2166 = vmatprep.mubr.f32.mxu0 0.0
  %2167 = vmatmul.mubr.f32.gmra.mrb[0].mxu0 %v1945
  %v2168 = vpop.f32.mrb[0].mxu0
  %v2169 = vadd.f32 0.0, %v2168
  %v2170 = vpop.f32.mrb[0].mxu0
  %2171 = vmatprep.mubr.f32.mxu0 0.0
  %2172 = vmatmul.mubr.f32.gmra.mrb[0].mxu0 %v1948
  %v2173 = vpop.f32.mrb[0].mxu0
  %v2174 = vadd.f32 0.0, %v2173
  %v2175 = vpop.f32.mrb[0].mxu0
  %2176 = vmatprep.mubr.f32.mxu0 0.0
  %2177 = vmatmul.mubr.f32.gmra.mrb[0].mxu0 %v1951
  %v2178 = vpop.f32.mrb[0].mxu0
  %v2179 = vadd.f32 0.0, %v2178
  %v2180 = vpop.f32.mrb[0].mxu0
  %2181 = vmatprep.mubr.f32.mxu0 0.0
  %2182 = vmatmul.mubr.f32.gmra.mrb[0].mxu0 %v1954
  %v2183 = vpop.f32.mrb[0].mxu0
  %v2184 = vadd.f32 0.0, %v2183
  %v2185 = vpop.f32.mrb[0].mxu0
  %2186 = vmatprep.mubr.f32.mxu0 0.0
  %2187 = vmatmul.mubr.f32.gmra.mrb[0].mxu0 %v1957
  %v2188 = vpop.f32.mrb[0].mxu0
  %v2189 = vadd.f32 0.0, %v2188
  %v2190 = vpop.f32.mrb[0].mxu0
  %2191 = vmatprep.mubr.f32.mxu0 0.0
  %2192 = vmatmul.mubr.f32.gmra.mrb[0].mxu0 %v1960
  %v2193 = vpop.f32.mrb[0].mxu0
  %v2194 = vadd.f32 0.0, %v2193
  %v2195 = vpop.f32.mrb[0].mxu0
  %2196 = vmatprep.mubr.f32.mxu0 0.0
  %2197 = vmatmul.mubr.f32.gmra.mrb[0].mxu0 %v1963
  %v2198 = vpop.f32.mrb[0].mxu0
  %v2199 = vadd.f32 0.0, %v2198
  %v2200 = vpop.f32.mrb[0].mxu0
  %2201 = vmatprep.mubr.f32.mxu0 0.0
  %2202 = vmatmul.mubr.f32.gmra.mrb[0].mxu0 %v1966
  %v2203 = vpop.f32.mrb[0].mxu0
  %v2204 = vadd.f32 0.0, %v2203
  %v2205 = vpop.f32.mrb[0].mxu0
  %2206 = vmatprep.mubr.f32.mxu0 0.0
  %2207 = vmatmul.mubr.f32.gmra.mrb[0].mxu0 %v1969
  %v2208 = vpop.f32.mrb[0].mxu0
  %v2209 = vadd.f32 0.0, %v2208
  %v2210 = vpop.f32.mrb[0].mxu0
  %2211 = vmatprep.mubr.f32.mxu0 0.0
  %2212 = vmatmul.mubr.f32.gmra.mrb[0].mxu0 %v1972
  %v2213 = vpop.f32.mrb[0].mxu0
  %v2214 = vadd.f32 0.0, %v2213
  %v2215 = vpop.f32.mrb[0].mxu0
  %2216 = vmatprep.mubr.f32.mxu0 0.0
  %2217 = vmatmul.mubr.f32.gmra.mrb[0].mxu0 %v1975
  %v2218 = vpop.f32.mrb[0].mxu0
  %v2219 = vadd.f32 0.0, %v2218
  %v2220 = vpop.f32.mrb[0].mxu0
  %2221 = vdwg.mxu0
  %v2222 = vadd.f32 %v2044, %v1797
  %v2223 = vadd.f32 %v2049, %v1798
  %v2224 = vadd.f32 %v2054, %v1799
  %v2225 = vadd.f32 %v2059, %v1800
  %v2226 = vadd.f32 %v2064, %v1801
  %v2227 = vadd.f32 %v2069, %v1802
  %v2228 = vadd.f32 %v2074, %v1803
  %v2229 = vadd.f32 %v2079, %v1804
  %v2230 = vadd.f32 %v2084, %v1805
  %v2231 = vadd.f32 %v2089, %v1806
  %v2232 = vadd.f32 %v2094, %v1807
  %v2233 = vadd.f32 %v2099, %v1808
  %v2234 = vadd.f32 %v2104, %v1809
  %v2235 = vadd.f32 %v2109, %v1810
  %v2236 = vadd.f32 %v2114, %v1811
  %v2237 = vadd.f32 %v2119, %v1812
  %v2238 = vadd.f32 %v2124, %v1813
  %v2239 = vadd.f32 %v2129, %v1814
  %v2240 = vadd.f32 %v2134, %v1815
  %v2241 = vadd.f32 %v2139, %v1816
  %v2242 = vadd.f32 %v2144, %v1817
  %v2243 = vadd.f32 %v2149, %v1818
  %v2244 = vadd.f32 %v2154, %v1819
  %v2245 = vadd.f32 %v2159, %v1820
  %v2246 = vadd.f32 %v2164, %v1821
  %v2247 = vadd.f32 %v2169, %v1822
  %v2248 = vadd.f32 %v2174, %v1823
  %v2249 = vadd.f32 %v2179, %v1824
  %v2250 = vadd.f32 %v2184, %v1825
  %v2251 = vadd.f32 %v2189, %v1826
  %v2252 = vadd.f32 %v2194, %v1827
  %v2253 = vadd.f32 %v2199, %v1828
  %v2254 = vadd.f32 %v2204, %v1829
  %v2255 = vadd.f32 %v2209, %v1830
  %v2256 = vadd.f32 %v2214, %v1831
  %v2257 = vadd.f32 %v2219, %v1832
  %v2258 = vtanh.pop %v2222
  %v2259 = vtanh.pop %v2223
  %v2260 = vtanh.pop %v2224
  %v2261 = vtanh.pop %v2225
  %v2262 = vtanh.pop %v2226
  %v2263 = vtanh.pop %v2227
  %v2264 = vtanh.pop %v2228
  %v2265 = vtanh.pop %v2229
  %v2266 = vtanh.pop %v2230
  %v2267 = vtanh.pop %v2231
  %v2268 = vtanh.pop %v2232
  %v2269 = vtanh.pop %v2233
  %v2270 = vtanh.pop %v2234
  %v2271 = vtanh.pop %v2235
  %v2272 = vtanh.pop %v2236
  %v2273 = vtanh.pop %v2237
  %v2274 = vtanh.pop %v2238
  %v2275 = vtanh.pop %v2239
  %v2276 = vtanh.pop %v2240
  %v2277 = vtanh.pop %v2241
  %v2278 = vtanh.pop %v2242
  %v2279 = vtanh.pop %v2243
  %v2280 = vtanh.pop %v2244
  %v2281 = vtanh.pop %v2245
  %v2282 = vtanh.pop %v2246
  %v2283 = vtanh.pop %v2247
  %v2284 = vtanh.pop %v2248
  %v2285 = vtanh.pop %v2249
  %v2286 = vtanh.pop %v2250
  %v2287 = vtanh.pop %v2251
  %v2288 = vtanh.pop %v2252
  %v2289 = vtanh.pop %v2253
  %v2290 = vtanh.pop %v2254
  %v2291 = vtanh.pop %v2255
  %v2292 = vtanh.pop %v2256
  %v2293 = vtanh.pop %v2257
  %2295 = vset.pattern.permute.xlu0 0
  %2296 = vperm.xlu0 %2295, %v2258
  %v2297 = vpop.permute.xlu0 %2296
  %2300 = vset.pattern.permute.xlu0 0
  %2301 = vperm.xlu0 %2300, %v2259
  %v2302 = vpop.permute.xlu0 %2301
  %2305 = vset.pattern.permute.xlu0 0
  %2306 = vperm.xlu0 %2305, %v2260
  %v2307 = vpop.permute.xlu0 %2306
  %2310 = vset.pattern.permute.xlu0 0
  %2311 = vperm.xlu0 %2310, %v2261
  %v2312 = vpop.permute.xlu0 %2311
  %v2314 = vmul.f32 %v195, %v2297
  %v2315 = vmul.f32 %v197, %v2297
  %v2316 = vmul.f32 %v201, %v2302
  %v2317 = vmul.f32 %v203, %v2302
  %v2318 = vmul.f32 %v207, %v2307
  %v2319 = vmul.f32 %v209, %v2307
  %v2320 = vmul.f32 %v213, %v2312
  %v2321 = vmul.f32 %v215, %v2312
  %2323 = vset.pattern.permute.xlu0 0
  %2324 = vperm.xlu0 %2323, %v2262
  %v2325 = vpop.permute.xlu0 %2324
  %2328 = vset.pattern.permute.xlu0 0
  %2329 = vperm.xlu0 %2328, %v2263
  %v2330 = vpop.permute.xlu0 %2329
  %2333 = vset.pattern.permute.xlu0 0
  %2334 = vperm.xlu0 %2333, %v2264
  %v2335 = vpop.permute.xlu0 %2334
  %2338 = vset.pattern.permute.xlu0 0
  %2339 = vperm.xlu0 %2338, %v2265
  %v2340 = vpop.permute.xlu0 %2339
  %v2342 = vmul.f32 %v35, %v2325
  %v2343 = vmul.f32 %v36, %v2325
  %v2344 = vmul.f32 %v37, %v2330
  %v2345 = vmul.f32 %v38, %v2330
  %v2346 = vmul.f32 %v39, %v2335
  %v2347 = vmul.f32 %v40, %v2335
  %v2348 = vmul.f32 %v41, %v2340
  %v2349 = vmul.f32 %v42, %v2340
  %v2350 = vadd.f32 %v2314, %v2342
  %v2351 = vadd.f32 %v2315, %v2343
  %v2352 = vadd.f32 %v2316, %v2344
  %v2353 = vadd.f32 %v2317, %v2345
  %v2354 = vadd.f32 %v2318, %v2346
  %v2355 = vadd.f32 %v2319, %v2347
  %v2356 = vadd.f32 %v2320, %v2348
  %v2357 = vadd.f32 %v2321, %v2349
  %2359 = vset.pattern.permute.xlu0 0
  %2360 = vperm.xlu0 %2359, %v2266
  %v2361 = vpop.permute.xlu0 %2360
  %2364 = vset.pattern.permute.xlu0 0
  %2365 = vperm.xlu0 %2364, %v2267
  %v2366 = vpop.permute.xlu0 %2365
  %2369 = vset.pattern.permute.xlu0 0
  %2370 = vperm.xlu0 %2369, %v2268
  %v2371 = vpop.permute.xlu0 %2370
  %2374 = vset.pattern.permute.xlu0 0
  %2375 = vperm.xlu0 %2374, %v2269
  %v2376 = vpop.permute.xlu0 %2375
  %v2378 = vmul.f32 %v348, %v2361
  %v2379 = vmul.f32 %v350, %v2361
  %v2380 = vmul.f32 %v354, %v2366
  %v2381 = vmul.f32 %v356, %v2366
  %v2382 = vmul.f32 %v360, %v2371
  %v2383 = vmul.f32 %v362, %v2371
  %v2384 = vmul.f32 %v366, %v2376
  %v2385 = vmul.f32 %v368, %v2376
  %v2386 = vadd.f32 %v2350, %v2378
  %v2387 = vadd.f32 %v2351, %v2379
  %v2388 = vadd.f32 %v2352, %v2380
  %v2389 = vadd.f32 %v2353, %v2381
  %v2390 = vadd.f32 %v2354, %v2382
  %v2391 = vadd.f32 %v2355, %v2383
  %v2392 = vadd.f32 %v2356, %v2384
  %v2393 = vadd.f32 %v2357, %v2385
  %2395 = vset.pattern.permute.xlu0 0
  %2396 = vperm.xlu0 %2395, %v2270
  %v2397 = vpop.permute.xlu0 %2396
  %2400 = vset.pattern.permute.xlu0 0
  %2401 = vperm.xlu0 %2400, %v2271
  %v2402 = vpop.permute.xlu0 %2401
  %2405 = vset.pattern.permute.xlu0 0
  %2406 = vperm.xlu0 %2405, %v2272
  %v2407 = vpop.permute.xlu0 %2406
  %2410 = vset.pattern.permute.xlu0 0
  %2411 = vperm.xlu0 %2410, %v2273
  %v2412 = vpop.permute.xlu0 %2411
  %v2414 = vmul.f32 %v195, %v2397
  %v2415 = vmul.f32 %v197, %v2397
  %v2416 = vmul.f32 %v201, %v2402
  %v2417 = vmul.f32 %v203, %v2402
  %v2418 = vmul.f32 %v207, %v2407
  %v2419 = vmul.f32 %v209, %v2407
  %v2420 = vmul.f32 %v213, %v2412
  %v2421 = vmul.f32 %v215, %v2412
  %2423 = vset.pattern.permute.xlu0 0
  %2424 = vperm.xlu0 %2423, %v2274
  %v2425 = vpop.permute.xlu0 %2424
  %2428 = vset.pattern.permute.xlu0 0
  %2429 = vperm.xlu0 %2428, %v2275
  %v2430 = vpop.permute.xlu0 %2429
  %2433 = vset.pattern.permute.xlu0 0
  %2434 = vperm.xlu0 %2433, %v2276
  %v2435 = vpop.permute.xlu0 %2434
  %2438 = vset.pattern.permute.xlu0 0
  %2439 = vperm.xlu0 %2438, %v2277
  %v2440 = vpop.permute.xlu0 %2439
  %v2442 = vmul.f32 %v35, %v2425
  %v2443 = vmul.f32 %v36, %v2425
  %v2444 = vmul.f32 %v37, %v2430
  %v2445 = vmul.f32 %v38, %v2430
  %v2446 = vmul.f32 %v39, %v2435
  %v2447 = vmul.f32 %v40, %v2435
  %v2448 = vmul.f32 %v41, %v2440
  %v2449 = vmul.f32 %v42, %v2440
  %v2450 = vadd.f32 %v2414, %v2442
  %v2451 = vadd.f32 %v2415, %v2443
  %v2452 = vadd.f32 %v2416, %v2444
  %v2453 = vadd.f32 %v2417, %v2445
  %v2454 = vadd.f32 %v2418, %v2446
  %v2455 = vadd.f32 %v2419, %v2447
  %v2456 = vadd.f32 %v2420, %v2448
  %v2457 = vadd.f32 %v2421, %v2449
  %2459 = vset.pattern.permute.xlu0 0
  %2460 = vperm.xlu0 %2459, %v2278
  %v2461 = vpop.permute.xlu0 %2460
  %2464 = vset.pattern.permute.xlu0 0
  %2465 = vperm.xlu0 %2464, %v2279
  %v2466 = vpop.permute.xlu0 %2465
  %2469 = vset.pattern.permute.xlu0 0
  %2470 = vperm.xlu0 %2469, %v2280
  %v2471 = vpop.permute.xlu0 %2470
  %2474 = vset.pattern.permute.xlu0 0
  %2475 = vperm.xlu0 %2474, %v2281
  %v2476 = vpop.permute.xlu0 %2475
  %v2478 = vmul.f32 %v348, %v2461
  %v2479 = vmul.f32 %v350, %v2461
  %v2480 = vmul.f32 %v354, %v2466
  %v2481 = vmul.f32 %v356, %v2466
  %v2482 = vmul.f32 %v360, %v2471
  %v2483 = vmul.f32 %v362, %v2471
  %v2484 = vmul.f32 %v366, %v2476
  %v2485 = vmul.f32 %v368, %v2476
  %v2486 = vadd.f32 %v2450, %v2478
  %v2487 = vadd.f32 %v2451, %v2479
  %v2488 = vadd.f32 %v2452, %v2480
  %v2489 = vadd.f32 %v2453, %v2481
  %v2490 = vadd.f32 %v2454, %v2482
  %v2491 = vadd.f32 %v2455, %v2483
  %v2492 = vadd.f32 %v2456, %v2484
  %v2493 = vadd.f32 %v2457, %v2485
  %2494 = vmatprep.subr.mxu0 %v1163
  %2495 = vmatpush1.msra.mxu0 %v1162
  %2496 = vmatprep.subr.mxu0 %v1165
  %2497 = vmatpush1.msra.mxu0 %v1164
  %2498 = vmatprep.subr.mxu0 %v1167
  %2499 = vmatpush1.msra.mxu0 %v1166
  %2500 = vmatprep.subr.mxu0 %v1169
  %2501 = vmatpush1.msra.mxu0 %v1168
  %2502 = vmatprep.subr.mxu0 %v1171
  %2503 = vmatpush1.msra.mxu0 %v1170
  %2504 = vmatprep.subr.mxu0 %v1173
  %2505 = vmatpush1.msra.mxu0 %v1172
  %2506 = vmatprep.subr.mxu0 %v1175
  %2507 = vmatpush1.msra.mxu0 %v1174
  %2508 = vmatprep.subr.mxu0 %v1177
  %2509 = vmatpush1.msra.mxu0 %v1176
  %2510 = vmatprep.subr.mxu0 %v1179
  %2511 = vmatpush1.msra.mxu0 %v1178
  %2512 = vmatprep.subr.mxu0 %v1181
  %2513 = vmatpush1.msra.mxu0 %v1180
  %2514 = vmatprep.subr.mxu0 %v1183
  %2515 = vmatpush1.msra.mxu0 %v1182
  %2516 = vmatprep.subr.mxu0 %v1185
  %2517 = vmatpush1.msra.mxu0 %v1184
  %2518 = vmatprep.subr.mxu0 %v1187
  %2519 = vmatpush1.msra.mxu0 %v1186
  %2520 = vmatprep.subr.mxu0 %v1189
  %2521 = vmatpush1.msra.mxu0 %v1188
  %2522 = vmatprep.subr.mxu0 %v1191
  %2523 = vmatpush1.msra.mxu0 %v1190
  %2524 = vmatprep.subr.mxu0 %v1193
  %2525 = vmatpush1.msra.mxu0 %v1192
  %2526 = vmatprep.subr.mxu0 %v1195
  %2527 = vmatpush1.msra.mxu0 %v1194
  %2528 = vmatprep.subr.mxu0 %v1197
  %2529 = vmatpush1.msra.mxu0 %v1196
  %2530 = vmatprep.subr.mxu0 %v1199
  %2531 = vmatpush1.msra.mxu0 %v1198
  %2532 = vmatprep.subr.mxu0 %v1201
  %2533 = vmatpush1.msra.mxu0 %v1200
  %2534 = vmatprep.subr.mxu0 %v1203
  %2535 = vmatpush1.msra.mxu0 %v1202
  %2536 = vmatprep.subr.mxu0 %v1205
  %2537 = vmatpush1.msra.mxu0 %v1204
  %2538 = vmatprep.subr.mxu0 %v1207
  %2539 = vmatpush1.msra.mxu0 %v1206
  %2540 = vmatprep.subr.mxu0 %v1209
  %2541 = vmatpush1.msra.mxu0 %v1208
  %2542 = vmatprep.subr.mxu0 %v1211
  %2543 = vmatpush1.msra.mxu0 %v1210
  %2544 = vmatprep.subr.mxu0 %v1213
  %2545 = vmatpush1.msra.mxu0 %v1212
  %2546 = vmatprep.subr.mxu0 %v1215
  %2547 = vmatpush1.msra.mxu0 %v1214
  %2548 = vmatprep.subr.mxu0 %v1217
  %2549 = vmatpush1.msra.mxu0 %v1216
  %2550 = vmatprep.subr.mxu0 %v1219
  %2551 = vmatpush1.msra.mxu0 %v1218
  %2552 = vmatprep.subr.mxu0 %v1221
  %2553 = vmatpush1.msra.mxu0 %v1220
  %2554 = vmatprep.subr.mxu0 %v1223
  %2555 = vmatpush1.msra.mxu0 %v1222
  %2556 = vmatprep.subr.mxu0 %v1225
  %2557 = vmatpush1.msra.mxu0 %v1224
  %2558 = vmatprep.mubr.f32.mxu0 %v2387
  %2559 = vmatmul.mubr.f32.gmra.mrb[0].mxu0 %v2386
  %v2560 = vpop.f32.mrb[0].mxu0
  %v2561 = vadd.f32 %v2486, %v2560
  %v2562 = vpop.f32.mrb[0].mxu0
  %v2563 = vadd.f32 %v2487, %v2562
  %2564 = vmatprep.mubr.f32.mxu0 %v2389
  %2565 = vmatmul.mubr.f32.gmra.mrb[0].mxu0 %v2388
  %v2566 = vpop.f32.mrb[0].mxu0
  %v2567 = vadd.f32 %v2488, %v2566
  %v2568 = vpop.f32.mrb[0].mxu0
  %v2569 = vadd.f32 %v2489, %v2568
  %2570 = vmatprep.mubr.f32.mxu0 %v2391
  %2571 = vmatmul.mubr.f32.gmra.mrb[0].mxu0 %v2390
  %v2572 = vpop.f32.mrb[0].mxu0
  %v2573 = vadd.f32 %v2490, %v2572
  %v2574 = vpop.f32.mrb[0].mxu0
  %v2575 = vadd.f32 %v2491, %v2574
  %2576 = vmatprep.mubr.f32.mxu0 %v2393
  %2577 = vmatmul.mubr.f32.gmra.mrb[0].mxu0 %v2392
  %v2578 = vpop.f32.mrb[0].mxu0
  %v2579 = vadd.f32 %v2492, %v2578
  %v2580 = vpop.f32.mrb[0].mxu0
  %v2581 = vadd.f32 %v2493, %v2580
  %2582 = vdwg.mxu0
  %2584 = vset.pattern.permute.xlu0 0
  %2585 = vperm.xlu0 %2584, %v2282
  %v2586 = vpop.permute.xlu0 %2585
  %2589 = vset.pattern.permute.xlu0 0
  %2590 = vperm.xlu0 %2589, %v2283
  %v2591 = vpop.permute.xlu0 %2590
  %2594 = vset.pattern.permute.xlu0 0
  %2595 = vperm.xlu0 %2594, %v2284
  %v2596 = vpop.permute.xlu0 %2595
  %2599 = vset.pattern.permute.xlu0 0
  %2600 = vperm.xlu0 %2599, %v2285
  %v2601 = vpop.permute.xlu0 %2600
  %v2603 = vmul.f32 %v195, %v2586
  %v2604 = vmul.f32 %v197, %v2586
  %v2605 = vmul.f32 %v201, %v2591
  %v2606 = vmul.f32 %v203, %v2591
  %v2607 = vmul.f32 %v207, %v2596
  %v2608 = vmul.f32 %v209, %v2596
  %v2609 = vmul.f32 %v213, %v2601
  %v2610 = vmul.f32 %v215, %v2601
  %2612 = vset.pattern.permute.xlu0 0
  %2613 = vperm.xlu0 %2612, %v2286
  %v2614 = vpop.permute.xlu0 %2613
  %2617 = vset.pattern.permute.xlu0 0
  %2618 = vperm.xlu0 %2617, %v2287
  %v2619 = vpop.permute.xlu0 %2618
  %2622 = vset.pattern.permute.xlu0 0
  %2623 = vperm.xlu0 %2622, %v2288
  %v2624 = vpop.permute.xlu0 %2623
  %2627 = vset.pattern.permute.xlu0 0
  %2628 = vperm.xlu0 %2627, %v2289
  %v2629 = vpop.permute.xlu0 %2628
  %v2631 = vmul.f32 %v35, %v2614
  %v2632 = vmul.f32 %v36, %v2614
  %v2633 = vmul.f32 %v37, %v2619
  %v2634 = vmul.f32 %v38, %v2619
  %v2635 = vmul.f32 %v39, %v2624
  %v2636 = vmul.f32 %v40, %v2624
  %v2637 = vmul.f32 %v41, %v2629
  %v2638 = vmul.f32 %v42, %v2629
  %v2639 = vadd.f32 %v2603, %v2631
  %v2640 = vadd.f32 %v2604, %v2632
  %v2641 = vadd.f32 %v2605, %v2633
  %v2642 = vadd.f32 %v2606, %v2634
  %v2643 = vadd.f32 %v2607, %v2635
  %v2644 = vadd.f32 %v2608, %v2636
  %v2645 = vadd.f32 %v2609, %v2637
  %v2646 = vadd.f32 %v2610, %v2638
  %2648 = vset.pattern.permute.xlu0 0
  %2649 = vperm.xlu0 %2648, %v2290
  %v2650 = vpop.permute.xlu0 %2649
  %2653 = vset.pattern.permute.xlu0 0
  %2654 = vperm.xlu0 %2653, %v2291
  %v2655 = vpop.permute.xlu0 %2654
  %2658 = vset.pattern.permute.xlu0 0
  %2659 = vperm.xlu0 %2658, %v2292
  %v2660 = vpop.permute.xlu0 %2659
  %2663 = vset.pattern.permute.xlu0 0
  %2664 = vperm.xlu0 %2663, %v2293
  %v2665 = vpop.permute.xlu0 %2664
  %v2667 = vmul.f32 %v348, %v2650
  %v2668 = vmul.f32 %v350, %v2650
  %v2669 = vmul.f32 %v354, %v2655
  %v2670 = vmul.f32 %v356, %v2655
  %v2671 = vmul.f32 %v360, %v2660
  %v2672 = vmul.f32 %v362, %v2660
  %v2673 = vmul.f32 %v366, %v2665
  %v2674 = vmul.f32 %v368, %v2665
  %v2675 = vadd.f32 %v2639, %v2667
  %v2676 = vadd.f32 %v2640, %v2668
  %v2677 = vadd.f32 %v2641, %v2669
  %v2678 = vadd.f32 %v2642, %v2670
  %v2679 = vadd.f32 %v2643, %v2671
  %v2680 = vadd.f32 %v2644, %v2672
  %v2681 = vadd.f32 %v2645, %v2673
  %v2682 = vadd.f32 %v2646, %v2674
  %2683 = vmatprep.subr.mxu0 %v1372
  %2684 = vmatpush1.msra.mxu0 %v1371
  %2685 = vmatprep.subr.mxu0 %v1374
  %2686 = vmatpush1.msra.mxu0 %v1373
  %2687 = vmatprep.subr.mxu0 %v1376
  %2688 = vmatpush1.msra.mxu0 %v1375
  %2689 = vmatprep.subr.mxu0 %v1378
  %2690 = vmatpush1.msra.mxu0 %v1377
  %2691 = vmatprep.subr.mxu0 %v1380
  %2692 = vmatpush1.msra.mxu0 %v1379
  %2693 = vmatprep.subr.mxu0 %v1382
  %2694 = vmatpush1.msra.mxu0 %v1381
  %2695 = vmatprep.subr.mxu0 %v1384
  %2696 = vmatpush1.msra.mxu0 %v1383
  %2697 = vmatprep.subr.mxu0 %v1386
  %2698 = vmatpush1.msra.mxu0 %v1385
  %2699 = vmatprep.subr.mxu0 %v1388
  %2700 = vmatpush1.msra.mxu0 %v1387
  %2701 = vmatprep.subr.mxu0 %v1390
  %2702 = vmatpush1.msra.mxu0 %v1389
  %2703 = vmatprep.subr.mxu0 %v1392
  %2704 = vmatpush1.msra.mxu0 %v1391
  %2705 = vmatprep.subr.mxu0 %v1394
  %2706 = vmatpush1.msra.mxu0 %v1393
  %2707 = vmatprep.subr.mxu0 %v1396
  %2708 = vmatpush1.msra.mxu0 %v1395
  %2709 = vmatprep.subr.mxu0 %v1398
  %2710 = vmatpush1.msra.mxu0 %v1397
  %2711 = vmatprep.subr.mxu0 %v1400
  %2712 = vmatpush1.msra.mxu0 %v1399
  %2713 = vmatprep.subr.mxu0 %v1402
  %2714 = vmatpush1.msra.mxu0 %v1401
  %2715 = vmatprep.subr.mxu0 %v1404
  %2716 = vmatpush1.msra.mxu0 %v1403
  %2717 = vmatprep.subr.mxu0 %v1406
  %2718 = vmatpush1.msra.mxu0 %v1405
  %2719 = vmatprep.subr.mxu0 %v1408
  %2720 = vmatpush1.msra.mxu0 %v1407
  %2721 = vmatprep.subr.mxu0 %v1410
  %2722 = vmatpush1.msra.mxu0 %v1409
  %2723 = vmatprep.subr.mxu0 %v1412
  %2724 = vmatpush1.msra.mxu0 %v1411
  %2725 = vmatprep.subr.mxu0 %v1414
  %2726 = vmatpush1.msra.mxu0 %v1413
  %2727 = vmatprep.subr.mxu0 %v1416
  %2728 = vmatpush1.msra.mxu0 %v1415
  %2729 = vmatprep.subr.mxu0 %v1418
  %2730 = vmatpush1.msra.mxu0 %v1417
  %2731 = vmatprep.subr.mxu0 %v1420
  %2732 = vmatpush1.msra.mxu0 %v1419
  %2733 = vmatprep.subr.mxu0 %v1422
  %2734 = vmatpush1.msra.mxu0 %v1421
  %2735 = vmatprep.subr.mxu0 %v1424
  %2736 = vmatpush1.msra.mxu0 %v1423
  %2737 = vmatprep.subr.mxu0 %v1426
  %2738 = vmatpush1.msra.mxu0 %v1425
  %2739 = vmatprep.subr.mxu0 %v1428
  %2740 = vmatpush1.msra.mxu0 %v1427
  %2741 = vmatprep.subr.mxu0 %v1430
  %2742 = vmatpush1.msra.mxu0 %v1429
  %2743 = vmatprep.subr.mxu0 %v1432
  %2744 = vmatpush1.msra.mxu0 %v1431
  %2745 = vmatprep.subr.mxu0 %v1434
  %2746 = vmatpush1.msra.mxu0 %v1433
  %2747 = vmatprep.mubr.f32.mxu0 %v2676
  %2748 = vmatmul.mubr.f32.gmra.mrb[0].mxu0 %v2675
  %v2749 = vpop.f32.mrb[0].mxu0
  %v2750 = vadd.f32 0.0, %v2749
  %v2751 = vpop.f32.mrb[0].mxu0
  %v2752 = vadd.f32 0.0, %v2751
  %2753 = vmatprep.mubr.f32.mxu0 %v2678
  %2754 = vmatmul.mubr.f32.gmra.mrb[0].mxu0 %v2677
  %v2755 = vpop.f32.mrb[0].mxu0
  %v2756 = vadd.f32 0.0, %v2755
  %v2757 = vpop.f32.mrb[0].mxu0
  %v2758 = vadd.f32 0.0, %v2757
  %2759 = vmatprep.mubr.f32.mxu0 %v2680
  %2760 = vmatmul.mubr.f32.gmra.mrb[0].mxu0 %v2679
  %v2761 = vpop.f32.mrb[0].mxu0
  %v2762 = vadd.f32 0.0, %v2761
  %v2763 = vpop.f32.mrb[0].mxu0
  %v2764 = vadd.f32 0.0, %v2763
  %2765 = vmatprep.mubr.f32.mxu0 %v2682
  %2766 = vmatmul.mubr.f32.gmra.mrb[0].mxu0 %v2681
  %v2767 = vpop.f32.mrb[0].mxu0
  %v2768 = vadd.f32 0.0, %v2767
  %v2769 = vpop.f32.mrb[0].mxu0
  %v2770 = vadd.f32 0.0, %v2769
  %2771 = vdwg.mxu0
  %v2772 = vadd.f32 %v2561, %v2750
  %v2773 = vadd.f32 %v2563, %v2752
  %v2774 = vadd.f32 %v2567, %v2756
  %v2775 = vadd.f32 %v2569, %v2758
  %v2776 = vadd.f32 %v2573, %v2762
  %v2777 = vadd.f32 %v2575, %v2764
  %v2778 = vadd.f32 %v2579, %v2768
  %v2779 = vadd.f32 %v2581, %v2770
  %2780 = vset.pattern.permute.xlu0 6
  %2781 = vperm.xlu0 %2780, %v809
  %v2782 = vpop.permute.xlu0 %2781
  %2784 = vset.pattern.permute.xlu0 6
  %2785 = vperm.xlu0 %2784, %v810
  %v2786 = vpop.permute.xlu0 %2785
  %2788 = vset.pattern.permute.xlu0 6
  %2789 = vperm.xlu0 %2788, %v811
  %v2790 = vpop.permute.xlu0 %2789
  %2792 = vset.pattern.permute.xlu0 6
  %2793 = vperm.xlu0 %2792, %v812
  %v2794 = vpop.permute.xlu0 %2793
  %v2796 = vmul.f32 %v2772, %v2782
  %v2797 = vmul.f32 %v2773, %v2782
  %v2798 = vmul.f32 %v2774, %v2786
  %v2799 = vmul.f32 %v2775, %v2786
  %v2800 = vmul.f32 %v2776, %v2790
  %v2801 = vmul.f32 %v2777, %v2790
  %v2802 = vmul.f32 %v2778, %v2794
  %v2803 = vmul.f32 %v2779, %v2794
  %v2804 = vmul.f32 %v43, %v60
  %v2805 = vmul.f32 %v44, %v61
  %v2806 = vmul.f32 %v45, %v62
  %v2807 = vmul.f32 %v46, %v63
  %2809 = vset.pattern.permute.xlu0 6
  %2810 = vperm.xlu0 %2809, %v2804
  %v2811 = vpop.permute.xlu0 %2810
  %2814 = vset.pattern.permute.xlu0 6
  %2815 = vperm.xlu0 %2814, %v2805
  %v2816 = vpop.permute.xlu0 %2815
  %2819 = vset.pattern.permute.xlu0 6
  %2820 = vperm.xlu0 %2819, %v2806
  %v2821 = vpop.permute.xlu0 %2820
  %2824 = vset.pattern.permute.xlu0 6
  %2825 = vperm.xlu0 %2824, %v2807
  %v2826 = vpop.permute.xlu0 %2825
  %v2828 = vsub.f32 %v2796, %v2811
  %v2829 = vsub.f32 %v2797, %v2811
  %v2830 = vsub.f32 %v2798, %v2816
  %v2831 = vsub.f32 %v2799, %v2816
  %v2832 = vsub.f32 %v2800, %v2821
  %v2833 = vsub.f32 %v2801, %v2821
  %v2834 = vsub.f32 %v2802, %v2826
  %v2835 = vsub.f32 %v2803, %v2826
  %2836 = vset.pattern.permute.xlu0 7
  %2837 = vperm.xlu0 %2836, %v43
  %v2838 = vpop.permute.xlu0 %2837
  %2840 = vset.pattern.permute.xlu0 7
  %2841 = vperm.xlu0 %2840, %v44
  %v2842 = vpop.permute.xlu0 %2841
  %2844 = vset.pattern.permute.xlu0 7
  %2845 = vperm.xlu0 %2844, %v45
  %v2846 = vpop.permute.xlu0 %2845
  %2848 = vset.pattern.permute.xlu0 7
  %2849 = vperm.xlu0 %2848, %v46
  %v2850 = vpop.permute.xlu0 %2849
  %v2852 = vmul.f32 %v2828, %v2838
  %v2853 = vmul.f32 %v2829, %v2838
  %v2854 = vmul.f32 %v2830, %v2842
  %v2855 = vmul.f32 %v2831, %v2842
  %v2856 = vmul.f32 %v2832, %v2846
  %v2857 = vmul.f32 %v2833, %v2846
  %v2858 = vmul.f32 %v2834, %v2850
  %v2859 = vmul.f32 %v2835, %v2850
  %2860 = vset.pattern.permute.xlu0 8
  %2861 = vperm.xlu0 %2860, %v809
  %v2862 = vpop.permute.xlu0 %2861
  %2864 = vset.pattern.permute.xlu0 8
  %2865 = vperm.xlu0 %2864, %v810
  %v2866 = vpop.permute.xlu0 %2865
  %2868 = vset.pattern.permute.xlu0 8
  %2869 = vperm.xlu0 %2868, %v811
  %v2870 = vpop.permute.xlu0 %2869
  %2872 = vset.pattern.permute.xlu0 8
  %2873 = vperm.xlu0 %2872, %v812
  %v2874 = vpop.permute.xlu0 %2873
  %v2876 = vmul.f32 %v35, %v2862
  %v2877 = vmul.f32 %v36, %v2862
  %v2878 = vmul.f32 %v37, %v2866
  %v2879 = vmul.f32 %v38, %v2866
  %v2880 = vmul.f32 %v39, %v2870
  %v2881 = vmul.f32 %v40, %v2870
  %v2882 = vmul.f32 %v41, %v2874
  %v2883 = vmul.f32 %v42, %v2874
  %v2884 = vadd.f32 %v2852, %v2876
  %v2885 = vadd.f32 %v2853, %v2877
  %v2886 = vadd.f32 %v2854, %v2878
  %v2887 = vadd.f32 %v2855, %v2879
  %v2888 = vadd.f32 %v2856, %v2880
  %v2889 = vadd.f32 %v2857, %v2881
  %v2890 = vadd.f32 %v2858, %v2882
  %v2891 = vadd.f32 %v2859, %v2883
  %2892 = vset.pattern.permute.xlu0 9
  %2893 = vperm.xlu0 %2892, %v43
  %v2894 = vpop.permute.xlu0 %2893
  %2896 = vset.pattern.permute.xlu0 9
  %2897 = vperm.xlu0 %2896, %v44
  %v2898 = vpop.permute.xlu0 %2897
  %2900 = vset.pattern.permute.xlu0 9
  %2901 = vperm.xlu0 %2900, %v45
  %v2902 = vpop.permute.xlu0 %2901
  %2904 = vset.pattern.permute.xlu0 9
  %2905 = vperm.xlu0 %2904, %v46
  %v2906 = vpop.permute.xlu0 %2905
  %v2908 = vmul.f32 %v2894, %v1789
  %v2909 = vmul.f32 %v2894, %v1790
  %v2910 = vmul.f32 %v2898, %v1791
  %v2911 = vmul.f32 %v2898, %v1792
  %v2912 = vmul.f32 %v2902, %v1793
  %v2913 = vmul.f32 %v2902, %v1794
  %v2914 = vmul.f32 %v2906, %v1795
  %v2915 = vmul.f32 %v2906, %v1796
  %2916 = vset.pattern.permute.xlu0 10
  %2917 = vperm.xlu0 %2916, %v43
  %v2918 = vpop.permute.xlu0 %2917
  %2920 = vset.pattern.permute.xlu0 10
  %2921 = vperm.xlu0 %2920, %v44
  %v2922 = vpop.permute.xlu0 %2921
  %2924 = vset.pattern.permute.xlu0 10
  %2925 = vperm.xlu0 %2924, %v45
  %v2926 = vpop.permute.xlu0 %2925
  %2928 = vset.pattern.permute.xlu0 10
  %2929 = vperm.xlu0 %2928, %v46
  %v2930 = vpop.permute.xlu0 %2929
  %v2932 = vmul.f32 %v2918, %v35
  %v2933 = vmul.f32 %v2918, %v36
  %v2934 = vmul.f32 %v2922, %v37
  %v2935 = vmul.f32 %v2922, %v38
  %v2936 = vmul.f32 %v2926, %v39
  %v2937 = vmul.f32 %v2926, %v40
  %v2938 = vmul.f32 %v2930, %v41
  %v2939 = vmul.f32 %v2930, %v42
  %v2940 = vadd.f32 %v2908, %v2932
  %v2941 = vadd.f32 %v2909, %v2933
  %v2942 = vadd.f32 %v2910, %v2934
  %v2943 = vadd.f32 %v2911, %v2935
  %v2944 = vadd.f32 %v2912, %v2936
  %v2945 = vadd.f32 %v2913, %v2937
  %v2946 = vadd.f32 %v2914, %v2938
  %v2947 = vadd.f32 %v2915, %v2939
  %v2948 = vadd.f32 %v2940, %v2884
  %v2949 = vadd.f32 %v2941, %v2885
  %v2950 = vadd.f32 %v2942, %v2886
  %v2951 = vadd.f32 %v2943, %v2887
  %v2952 = vadd.f32 %v2944, %v2888
  %v2953 = vadd.f32 %v2945, %v2889
  %v2954 = vadd.f32 %v2946, %v2890
  %v2955 = vadd.f32 %v2947, %v2891
  %2956 = vst [vmem:[%s10] sm:$0xff] %v2948
  %2957 = vst [vmem:[%s10 + $0x8] sm:$0xff] %v2949
  %2958 = vst [vmem:[%s10 + $0x10] sm:$0xff] %v2950
  %2959 = vst [vmem:[%s10 + $0x18] sm:$0xff] %v2951
  %2960 = vst [vmem:[%s10 + $0x20] sm:$0xff] %v2952
  %2961 = vst [vmem:[%s10 + $0x28] sm:$0xff] %v2953
  %2962 = vst [vmem:[%s10 + $0x30] sm:$0xff] %v2954
  %2963 = vst [vmem:[%s10 + $0x38] sm:$0xff] %v2955
  // Predicated region
  $region42: #{multi_shape_kernel_forward.1} parent=0 // pred_check
    _
  $region43: #{multi_shape_kernel_forward.1} parent=0 // pred_check_branch
    %2965 = sbr.rel (0) target = $region45
  $region44: #{multi_shape_kernel_forward.1} parent=0 // pred_region
    _
  $region45: #{multi_shape_kernel_forward.1} parent=0 // pred_fallthru
    _
  // Predicated region
  $region46: #{multi_shape_kernel_forward.1} parent=0 // pred_check
    _
  $region47: #{multi_shape_kernel_forward.1} parent=0 // pred_check_branch
    %2967 = sbr.rel (0) target = $region49
  $region48: #{multi_shape_kernel_forward.1} parent=0 // pred_region
    _
  $region49: #{multi_shape_kernel_forward.1} parent=0 // pred_fallthru
    _

</llo_original>
